<compile_context>
chip_gen: v6e
topology: v6e:2x2x1
jax: 0.10.0
libtpu: 0.0.40
codegen_flags: <defaults>
</compile_context>

<pallas_src>
import functools
import math

import jax
import jax.numpy as jnp
from jax.experimental import pallas as pl
from jax.experimental.pallas import tpu as pltpu


# --------------------------- in-kernel helpers ----------------------------- #

def _norm_silu_fill_pad(x_ref, scale_ref, shift_ref, pad_ref, th, h, w, ns):
    """Fill pad_ref (TH+2, W+2, C) with the zero-padded, GroupNorm+SiLU'd strip.

    x_ref:            (1, H, W, C) whole batch element (VMEM resident).
    scale_ref/shift:  (1, 1, C)  per-channel affine folding GN stats + gamma/beta.
    pad_ref:          f32 scratch; rows/cols outside the image stay zero.
    """
    s = pl.program_id(1)
    scale = scale_ref[0]                       # (1, C) = gamma * rsqrt(var+eps)
    shift = shift_ref[0]                       # (1, C) = beta - mean * scale

    def norm_silu(v):                          # v: (R, W, C)
        y = v.astype(jnp.float32) * scale + shift
        return y * jax.nn.sigmoid(y)           # SiLU, f32

    pad_ref[...] = jnp.zeros_like(pad_ref)     # zero halo (top/bottom/left/right)

    if ns == 1:                                # single strip: both edges padded
        pad_ref[1:th + 1, 1:w + 1, :] = norm_silu(x_ref[0])
    else:
        @pl.when(s == 0)                       # top edge: halo row 0 stays zero
        def _top():
            pad_ref[1:th + 2, 1:w + 1, :] = norm_silu(x_ref[0, 0:th + 1, :, :])

        @pl.when(s == ns - 1)                  # bottom edge: last halo row zero
        def _bottom():
            pad_ref[0:th + 1, 1:w + 1, :] = norm_silu(
                x_ref[0, h - th - 1:h, :, :])

        if ns > 2:                             # interior strips: full halo
            @pl.when(jnp.logical_and(s > 0, s < ns - 1))
            def _middle():
                pad_ref[:, 1:w + 1, :] = norm_silu(
                    x_ref[0, pl.ds(s * th - 1, th + 2), :, :])


def _conv3x3_strip(pad_ref, w_ref, th, w):
    """3x3 conv on one padded strip: 9 accumulated bf16 MXU matmuls, f32 acc."""
    cin = pad_ref.shape[-1]
    cout = w_ref.shape[-1]
    acc = jnp.zeros((th * w, cout), jnp.float32)
    for dy in range(3):
        for dx in range(3):
            patch = (pad_ref[dy:dy + th, dx:dx + w, :]
                     .reshape(th * w, cin).astype(jnp.bfloat16))
            acc += jnp.dot(patch, w_ref[dy, dx],
                           preferred_element_type=jnp.float32)
    return acc


# --------------------------------- kernels --------------------------------- #

def gn_stats_kernel(x_ref, sum_ref, ssq_ref):
    """Accumulate per-channel sum / sum-of-squares over H-strips (f32)."""
    @pl.when(pl.program_id(1) == 0)
    def _init():
        sum_ref[...] = jnp.zeros_like(sum_ref)
        ssq_ref[...] = jnp.zeros_like(ssq_ref)
    x = x_ref[0].astype(jnp.float32)                     # (RT, C)
    sum_ref[0] += jnp.sum(x, axis=0, keepdims=True)
    ssq_ref[0] += jnp.sum(x * x, axis=0, keepdims=True)


def gn_silu_conv_temb_kernel(x_ref, scale_ref, shift_ref, w_ref, b_ref, t_ref,
                             o_ref, pad_ref, *, th, h, w, ns):
    """block1: Conv3x3(SiLU(GN(x))) + bias + temb (channel-broadcast add)."""
    _norm_silu_fill_pad(x_ref, scale_ref, shift_ref, pad_ref, th, h, w, ns)
    acc = _conv3x3_strip(pad_ref, w_ref, th, w)
    o_ref[0] = (acc + b_ref[...] + t_ref[0]).astype(o_ref.dtype)


def gn_silu_conv_res_proj_kernel(x_ref, scale_ref, shift_ref, w_ref, b_ref,
                                 xs_ref, ws_ref, bs_ref, o_ref, pad_ref,
                                 *, th, h, w, ns):
    """block2: Conv3x3(SiLU(GN(h1))) + bias + (x @ ws + bs) fused shortcut."""
    _norm_silu_fill_pad(x_ref, scale_ref, shift_ref, pad_ref, th, h, w, ns)
    acc = _conv3x3_strip(pad_ref, w_ref, th, w)
    cs = xs_ref.shape[-1]
    xs = xs_ref[0].reshape(th * w, cs).astype(jnp.bfloat16)
    sc = jnp.dot(xs, ws_ref[...],
                 preferred_element_type=jnp.float32) + bs_ref[...]
    o_ref[0] = (acc + b_ref[...] + sc).astype(o_ref.dtype)


def gn_silu_conv_res_id_kernel(x_ref, scale_ref, shift_ref, w_ref, b_ref,
                               xs_ref, o_ref, pad_ref, *, th, h, w, ns):
    """block2 variant for in_ch == out_ch: identity shortcut fused in."""
    _norm_silu_fill_pad(x_ref, scale_ref, shift_ref, pad_ref, th, h, w, ns)
    acc = _conv3x3_strip(pad_ref, w_ref, th, w)
    cs = xs_ref.shape[-1]
    xs = xs_ref[0].reshape(th * w, cs).astype(jnp.float32)
    o_ref[0] = (acc + b_ref[...] + xs).astype(o_ref.dtype)


def silu_linear_kernel(a_ref, w_ref, b_ref, o_ref):
    """o = SiLU(a) @ w + b   (time-embedding projection, tiny)."""
    a = a_ref[...].astype(jnp.float32)
    a = a * jax.nn.sigmoid(a)
    o_ref[...] = (jnp.dot(a.astype(jnp.bfloat16), w_ref[...],
                          preferred_element_type=jnp.float32) + b_ref[...])


# -------------------------------- wrappers --------------------------------- #

def group_norm_scale_shift(x_flat, gamma, beta, groups, block_rows, eps=1e-5):
    """Return per-(batch, channel) (scale, shift) folding GN stats + affine.

    Stats are accumulated by a strip-tiled Pallas kernel (f32); the tiny
    per-group finalize runs in plain XLA on (B, C)-sized arrays.
    """
    b, hw, c = x_flat.shape
    assert hw % block_rows == 0
    ns = hw // block_rows
    sums, ssqs = pl.pallas_call(
        gn_stats_kernel,
        out_shape=(jax.ShapeDtypeStruct((b, 1, c), jnp.float32),
                   jax.ShapeDtypeStruct((b, 1, c), jnp.float32)),
        grid=(b, ns),
        in_specs=[pl.BlockSpec((1, block_rows, c), lambda i, j: (i, j, 0))],
        out_specs=[pl.BlockSpec((1, 1, c), lambda i, j: (i, 0, 0)),
                   pl.BlockSpec((1, 1, c), lambda i, j: (i, 0, 0))],
        compiler_params=pltpu.CompilerParams(
            dimension_semantics=("parallel", "arbitrary")),
    )(x_flat)

    n = hw * (c // groups)                                  # elems per group
    gsum = sums.reshape(b, groups, -1).sum(axis=-1)         # (B, G)
    gssq = ssqs.reshape(b, groups, -1).sum(axis=-1)
    mean = gsum / n
    var = gssq / n - mean * mean
    inv = jax.lax.rsqrt(var + eps)
    rep = c // groups
    mean_c = jnp.repeat(mean, rep, axis=-1)                 # (B, C)
    inv_c = jnp.repeat(inv, rep, axis=-1)
    scale = gamma[None, :] * inv_c
    shift = beta[None, :] - mean_c * scale
    return scale.reshape(b, 1, c), shift.reshape(b, 1, c)


def fused_gn_silu_conv3x3(x_nhwc, scale, shift, w_hwio, bias, *, block_h,
                          temb=None, shortcut_x=None, shortcut_w=None,
                          shortcut_b=None, out_dtype=jnp.float32):
    """Fused GroupNorm+SiLU+Conv3x3 (+bias +temb add / +fused 1x1 shortcut)."""
    b, h, w, cin = x_nhwc.shape
    cout = w_hwio.shape[-1]
    assert h % block_h == 0 and (block_h * w) % 8 == 0
    ns = h // block_h
    statics = dict(th=block_h, h=h, w=w, ns=ns)

    w_bf = w_hwio.astype(jnp.bfloat16)
    bias2d = bias.reshape(1, cout).astype(jnp.float32)

    inputs = [x_nhwc, scale, shift, w_bf, bias2d]
    in_specs = [
        pl.BlockSpec((1, h, w, cin), lambda i, j: (i, 0, 0, 0)),
        pl.BlockSpec((1, 1, cin), lambda i, j: (i, 0, 0)),
        pl.BlockSpec((1, 1, cin), lambda i, j: (i, 0, 0)),
        pl.BlockSpec((3, 3, cin, cout), lambda i, j: (0, 0, 0, 0)),
        pl.BlockSpec((1, cout), lambda i, j: (0, 0)),
    ]

    if temb is not None:
        kern = functools.partial(gn_silu_conv_temb_kernel, **statics)
        inputs += [temb]                                     # (B, 1, Cout)
        in_specs += [pl.BlockSpec((1, 1, cout), lambda i, j: (i, 0, 0))]
    elif shortcut_w is not None:
        kern = functools.partial(gn_silu_conv_res_proj_kernel, **statics)
        cs = shortcut_x.shape[-1]
        inputs += [shortcut_x, shortcut_w.astype(jnp.bfloat16),
                   shortcut_b.reshape(1, cout).astype(jnp.float32)]
        in_specs += [
            pl.BlockSpec((1, block_h, w, cs), lambda i, j: (i, j, 0, 0)),
            pl.BlockSpec((cs, cout), lambda i, j: (0, 0)),
            pl.BlockSpec((1, cout), lambda i, j: (0, 0)),
        ]
    else:
        kern = functools.partial(gn_silu_conv_res_id_kernel, **statics)
        inputs += [shortcut_x]
        in_specs += [pl.BlockSpec((1, block_h, w, cin), lambda i, j: (i, j, 0, 0))]

    return pl.pallas_call(
        kern,
        out_shape=jax.ShapeDtypeStruct((b, h * w, cout), out_dtype),
        grid=(b, ns),
        in_specs=in_specs,
        out_specs=pl.BlockSpec((1, block_h * w, cout), lambda i, j: (i, j, 0)),
        scratch_shapes=[pltpu.VMEM((block_h + 2, w + 2, cin), jnp.float32)],
        compiler_params=pltpu.CompilerParams(
            # Strip axis is also parallel -> both v7x TensorCores used at B=1.
            dimension_semantics=("parallel", "parallel"),
            # Explicit scoped-VMEM limit (raises v5e's 16 MiB default; shrink
            # block_h on v7x where physical VMEM is 64 MiB).
            vmem_limit_bytes=64 * 1024 * 1024),
    )(*inputs)


def silu_linear(temb, wt, bt):
    b, _ = temb.shape
    n = wt.shape[-1]
    return pl.pallas_call(
        silu_linear_kernel,
        out_shape=jax.ShapeDtypeStruct((b, n), jnp.float32),
    )(temb, wt.astype(jnp.bfloat16), bt.reshape(1, n))


# -------------------------------- ResBlock ---------------------------------- #

def resblock_forward(params, x_nhwc, temb, *, groups=32, block_h=None):
    b, h, w, cin = x_nhwc.shape
    cout = params["w1"].shape[-1]
    hw = h * w
    if block_h is None:                      # largest strip with <=512 rows of M
        block_h = 1
        for cand in range(h, 0, -1):
            if h % cand == 0 and (cand * w) % 8 == 0 and cand * w <= 512:
                block_h = cand
                break
    rt = block_h * w
    x_flat = x_nhwc.reshape(b, hw, cin)

    # time-embedding projection: t = Linear(SiLU(temb))            (B, 1, Cout)
    t = silu_linear(temb, params["wt"], params["bt"]).reshape(b, 1, cout)

    # ---- block1: GN stats -> fused GN+SiLU+Conv3x3 (+bias, +temb add) ----
    sc1, sh1 = group_norm_scale_shift(x_flat, params["gn1_g"], params["gn1_b"],
                                      groups, rt)
    h1 = fused_gn_silu_conv3x3(x_nhwc, sc1, sh1, params["w1"], params["b1"],
                               block_h=block_h, temb=t,
                               out_dtype=jnp.bfloat16)       # (B, HW, Cout) bf16

    # ---- block2: GN stats -> fused GN+SiLU+(Dropout=Id)+Conv3x3 + shortcut ----
    sc2, sh2 = group_norm_scale_shift(h1, params["gn2_g"], params["gn2_b"],
                                      groups, rt)
    h1_nhwc = h1.reshape(b, h, w, cout)
    if cin != cout:
        out = fused_gn_silu_conv3x3(h1_nhwc, sc2, sh2, params["w2"],
                                    params["b2"], block_h=block_h,
                                    shortcut_x=x_nhwc,
                                    shortcut_w=params["ws"],
                                    shortcut_b=params["bs"],
                                    out_dtype=jnp.float32)
    else:
        out = fused_gn_silu_conv3x3(h1_nhwc, sc2, sh2, params["w2"],
                                    params["b2"], block_h=block_h,
                                    shortcut_x=x_nhwc,
                                    out_dtype=jnp.float32)
    return out.reshape(b, h, w, cout)


# --------------------------- params / reference ----------------------------- #

def xavier_uniform(key, shape, fan_in, fan_out, gain=1.0):
    bound = gain * math.sqrt(6.0 / (fan_in + fan_out))
    return jax.random.uniform(key, shape, jnp.float32, -bound, bound)


def init_params(key, in_ch, out_ch, tdim):
    k1, k2, k3, k4 = jax.random.split(key, 4)
    return {
        "gn1_g": jnp.ones((in_ch,), jnp.float32),
        "gn1_b": jnp.zeros((in_ch,), jnp.float32),
        # conv1 weight stored HWIO (3, 3, in, out); torch fans are in*9 / out*9
        "w1": xavier_uniform(k1, (3, 3, in_ch, out_ch), in_ch * 9, out_ch * 9),
        "b1": jnp.zeros((out_ch,), jnp.float32),
        "wt": xavier_uniform(k2, (tdim, out_ch), tdim, out_ch),
        "bt": jnp.zeros((out_ch,), jnp.float32),
        "gn2_g": jnp.ones((out_ch,), jnp.float32),
        "gn2_b": jnp.zeros((out_ch,), jnp.float32),
        # block2 conv weight: xavier with gain 1e-5 (as in initialize())
        "w2": xavier_uniform(k3, (3, 3, out_ch, out_ch),
                             out_ch * 9, out_ch * 9, gain=1e-5),
        "b2": jnp.zeros((out_ch,), jnp.float32),
        # shortcut 1x1 conv: (in, out)
        "ws": xavier_uniform(k4, (in_ch, out_ch), in_ch, out_ch),
        "bs": jnp.zeros((out_ch,), jnp.float32),
    }


def ref_forward(params, x_nhwc, temb):
    """Pure-JAX f32 reference matching the PyTorch forward (eval mode)."""
    def gn_silu(x, g, bta, groups):
        b, h, w, c = x.shape
        xr = x.reshape(b, h, w, groups, c // groups)
        mean = xr.mean(axis=(1, 2, 4), keepdims=True)
        var = xr.var(axis=(1, 2, 4), keepdims=True)
        y = ((xr - mean) / jnp.sqrt(var + 1e-5)).reshape(b, h, w, c) * g + bta
        return y * jax.nn.sigmoid(y)

    def conv3(x, w, bias):
        return jax.lax.conv_general_dilated(
            x, w, (1, 1), "SAME",
            dimension_numbers=("NHWC", "HWIO", "NHWC")) + bias

    h = gn_silu(x_nhwc, params["gn1_g"], params["gn1_b"], 32)
    h = conv3(h, params["w1"], params["b1"])
    st = temb * jax.nn.sigmoid(temb)
    t = st @ params["wt"] + params["bt"]
    h = h + t[:, None, None, :]
    h = gn_silu(h, params["gn2_g"], params["gn2_b"], 32)
    h = conv3(h, params["w2"], params["b2"])
    sc = x_nhwc @ params["ws"] + params["bs"]
    return h + sc


# ----------------------------------- main ----------------------------------- #

if __name__ == "__main__":
    B, IN_CH, OUT_CH, TDIM, H, W = 2, 32, 64, 32, 8, 8
    BLOCK_H = 2          # 4 strips -> exercises top/middle/bottom halo paths

    key = jax.random.PRNGKey(0)
    kx, kt, kp = jax.random.split(key, 3)
    # PyTorch input would be NCHW (B, IN_CH, H, W); we carry it in NHWC.
    x_nchw = jax.random.normal(kx, (B, IN_CH, H, W), jnp.float32)
    x_nhwc = jnp.transpose(x_nchw, (0, 2, 3, 1))
    temb = jax.random.normal(kt, (B, TDIM), jnp.float32)

    params = init_params(kp, IN_CH, OUT_CH, TDIM)

    fwd = jax.jit(functools.partial(resblock_forward, block_h=BLOCK_H))
    out = jax.block_until_ready(fwd(params, x_nhwc, temb))

    ref = ref_forward(params, x_nhwc, temb)
    assert out.shape == (B, H, W, OUT_CH)
    err = float(jnp.max(jnp.abs(out - ref)))
    # bf16 MXU operands with f32 accumulation -> relaxed tolerance vs f32 ref.
    assert err < 5e-2, err

    print("KERNEL_OK")
</pallas_src>

<mosaic_0001>
module attributes {stable_mosaic.version = 11 : i64} {
  func.func @gn_stats_kernel(%arg0: i32, %arg1: i32, %arg2: memref<1x16x32xf32, #tpu.memory_space<vmem>>, %arg3: memref<1x1x32xf32, #tpu.memory_space<vmem>>, %arg4: memref<1x1x32xf32, #tpu.memory_space<vmem>>) attributes {dimension_semantics = [#tpu.dimension_semantics<parallel>, #tpu.dimension_semantics<arbitrary>], iteration_bounds = array<i64: 2, 4>, scalar_prefetch = 0 : i64, scratch_operands = 0 : i64, tpu.core_type = #tpu.core_type<tc>, window_params = [{transform_indices = @transform_0, window_bounds = array<i64: 1, 16, 32>}, {transform_indices = @transform_1, window_bounds = array<i64: 1, 1, 32>}, {transform_indices = @transform_2, window_bounds = array<i64: 1, 1, 32>}]} {
    %c0_i32 = arith.constant 0 : i32
    %0 = arith.cmpi eq, %arg1, %c0_i32 : i32
    %1 = arith.extui %0 : i1 to i32
    %c0_i32_0 = arith.constant 0 : i32
    %2 = arith.cmpi ne, %1, %c0_i32_0 : i32
    scf.if %2 {
      %cst_16 = arith.constant 0.000000e+00 : f32
      %22 = vector.broadcast %cst_16 : f32 to vector<1x1x32xf32>
      %c0_17 = arith.constant 0 : index
      %c0_18 = arith.constant 0 : index
      %c0_19 = arith.constant 0 : index
      %23 = vector.load %arg3[%c0_17, %c0_18, %c0_19] : memref<1x1x32xf32, #tpu.memory_space<vmem>>, vector<1x1x32xf32>
      tpu.vector_store %arg3[%c0_17, %c0_18, %c0_19], %22 {strides = array<i32>} : memref<1x1x32xf32, #tpu.memory_space<vmem>>, vector<1x1x32xf32>,
      %cst_20 = arith.constant 0.000000e+00 : f32
      %24 = vector.broadcast %cst_20 : f32 to vector<1x1x32xf32>
      %c0_21 = arith.constant 0 : index
      %c0_22 = arith.constant 0 : index
      %c0_23 = arith.constant 0 : index
      %25 = vector.load %arg4[%c0_21, %c0_22, %c0_23] : memref<1x1x32xf32, #tpu.memory_space<vmem>>, vector<1x1x32xf32>
      tpu.vector_store %arg4[%c0_21, %c0_22, %c0_23], %24 {strides = array<i32>} : memref<1x1x32xf32, #tpu.memory_space<vmem>>, vector<1x1x32xf32>,
    } else {
    }
    %c0 = arith.constant 0 : index
    %c0_1 = arith.constant 0 : index
    %c0_2 = arith.constant 0 : index
    %3 = vector.load %arg2[%c0, %c0_1, %c0_2] : memref<1x16x32xf32, #tpu.memory_space<vmem>>, vector<1x16x32xf32>
    %4 = vector.shape_cast %3 : vector<1x16x32xf32> to vector<16x32xf32>
    %c0_3 = arith.constant 0 : index
    %c0_4 = arith.constant 0 : index
    %c0_5 = arith.constant 0 : index
    %5 = vector.load %arg3[%c0_3, %c0_4, %c0_5] : memref<1x1x32xf32, #tpu.memory_space<vmem>>, vector<1x1x32xf32>
    %6 = vector.shape_cast %5 : vector<1x1x32xf32> to vector<1x32xf32>
    %cst = arith.constant dense<0.000000e+00> : vector<32xf32>
    %7 = vector.multi_reduction <add>, %4, %cst [0] : vector<16x32xf32> to vector<32xf32>
    %8 = vector.shape_cast %7 : vector<32xf32> to vector<1x32xf32>
    %9 = arith.addf %6, %8 : vector<1x32xf32>
    %c0_6 = arith.constant 0 : index
    %c0_7 = arith.constant 0 : index
    %c0_8 = arith.constant 0 : index
    %10 = vector.load %arg3[%c0_6, %c0_7, %c0_8] : memref<1x1x32xf32, #tpu.memory_space<vmem>>, vector<1x1x32xf32>
    %11 = vector.shape_cast %10 : vector<1x1x32xf32> to vector<1x32xf32>
    %12 = vector.shape_cast %9 : vector<1x32xf32> to vector<1x1x32xf32>
    tpu.vector_store %arg3[%c0_6, %c0_7, %c0_8], %12 {strides = array<i32>} : memref<1x1x32xf32, #tpu.memory_space<vmem>>, vector<1x1x32xf32>,
    %c0_9 = arith.constant 0 : index
    %c0_10 = arith.constant 0 : index
    %c0_11 = arith.constant 0 : index
    %13 = vector.load %arg4[%c0_9, %c0_10, %c0_11] : memref<1x1x32xf32, #tpu.memory_space<vmem>>, vector<1x1x32xf32>
    %14 = vector.shape_cast %13 : vector<1x1x32xf32> to vector<1x32xf32>
    %15 = arith.mulf %4, %4 : vector<16x32xf32>
    %cst_12 = arith.constant dense<0.000000e+00> : vector<32xf32>
    %16 = vector.multi_reduction <add>, %15, %cst_12 [0] : vector<16x32xf32> to vector<32xf32>
    %17 = vector.shape_cast %16 : vector<32xf32> to vector<1x32xf32>
    %18 = arith.addf %14, %17 : vector<1x32xf32>
    %c0_13 = arith.constant 0 : index
    %c0_14 = arith.constant 0 : index
    %c0_15 = arith.constant 0 : index
    %19 = vector.load %arg4[%c0_13, %c0_14, %c0_15] : memref<1x1x32xf32, #tpu.memory_space<vmem>>, vector<1x1x32xf32>
    %20 = vector.shape_cast %19 : vector<1x1x32xf32> to vector<1x32xf32>
    %21 = vector.shape_cast %18 : vector<1x32xf32> to vector<1x1x32xf32>
    tpu.vector_store %arg4[%c0_13, %c0_14, %c0_15], %21 {strides = array<i32>} : memref<1x1x32xf32, #tpu.memory_space<vmem>>, vector<1x1x32xf32>,
    return
  }
  func.func @transform_0(%arg0: i32, %arg1: i32) -> (i32, i32, i32) {
    %c0_i32 = arith.constant 0 : i32
    %c0_i32_0 = arith.constant 0 : i32
    return %arg0, %arg1, %c0_i32 : i32, i32, i32
  }
  func.func @transform_1(%arg0: i32, %arg1: i32) -> (i32, i32, i32) {
    %c0_i32 = arith.constant 0 : i32
    %c0_i32_0 = arith.constant 0 : i32
    %c0_i32_1 = arith.constant 0 : i32
    return %arg0, %c0_i32, %c0_i32_0 : i32, i32, i32
  }
  func.func @transform_2(%arg0: i32, %arg1: i32) -> (i32, i32, i32) {
    %c0_i32 = arith.constant 0 : i32
    %c0_i32_0 = arith.constant 0 : i32
    %c0_i32_1 = arith.constant 0 : i32
    return %arg0, %c0_i32, %c0_i32_0 : i32, i32, i32
  }
}

module attributes {stable_mosaic.version = 11 : i64} {
  func.func @silu_linear_kernel(%arg0: memref<2x32xf32, #tpu.memory_space<vmem>>, %arg1: memref<32x64xbf16, #tpu.memory_space<vmem>>, %arg2: memref<1x64xf32, #tpu.memory_space<vmem>>, %arg3: memref<2x64xf32, #tpu.memory_space<vmem>>) attributes {dimension_semantics = [], scalar_prefetch = 0 : i64, scratch_operands = 0 : i64, tpu.core_type = #tpu.core_type<tc>} {
    %c0 = arith.constant 0 : index
    %c0_0 = arith.constant 0 : index
    %0 = vector.load %arg0[%c0, %c0_0] : memref<2x32xf32, #tpu.memory_space<vmem>>, vector<2x32xf32>
    %1 = arith.negf %0 : vector<2x32xf32>
    %2 = math.exp %1 : vector<2x32xf32>
    %cst = arith.constant 1.000000e+00 : f32
    %3 = vector.broadcast %cst : f32 to vector<2x32xf32>
    %4 = arith.addf %3, %2 : vector<2x32xf32>
    %5 = arith.divf %3, %4 : vector<2x32xf32>
    %6 = arith.mulf %0, %5 : vector<2x32xf32>
    %7 = arith.truncf %6 : vector<2x32xf32> to vector<2x32xbf16>
    %c0_1 = arith.constant 0 : index
    %c0_2 = arith.constant 0 : index
    %8 = vector.load %arg1[%c0_1, %c0_2] : memref<32x64xbf16, #tpu.memory_space<vmem>>, vector<32x64xbf16>
    %cst_3 = arith.constant dense<0.000000e+00> : vector<2x64xf32>
    %9 = tpu.matmul %7, %8, %cst_3 {dimension_numbers = #tpu.dot_dimension_numbers<[1], [0], [0], [1], [0, 0, 1, 1], [], []>} : vector<2x32xbf16>, vector<32x64xbf16>, vector<2x64xf32> -> vector<2x64xf32>
    %c0_4 = arith.constant 0 : index
    %c0_5 = arith.constant 0 : index
    %10 = vector.load %arg2[%c0_4, %c0_5] : memref<1x64xf32, #tpu.memory_space<vmem>>, vector<1x64xf32>
    %11 = vector.broadcast %10 : vector<1x64xf32> to vector<2x64xf32>
    %12 = arith.addf %9, %11 : vector<2x64xf32>
    %c0_6 = arith.constant 0 : index
    %c0_7 = arith.constant 0 : index
    %13 = vector.load %arg3[%c0_6, %c0_7] : memref<2x64xf32, #tpu.memory_space<vmem>>, vector<2x64xf32>
    tpu.vector_store %arg3[%c0_6, %c0_7], %12 {strides = array<i32>} : memref<2x64xf32, #tpu.memory_space<vmem>>, vector<2x64xf32>,
    return
  }
}

module attributes {stable_mosaic.version = 11 : i64} {
  func.func @gn_silu_conv_temb_kernel(%arg0: i32, %arg1: i32, %arg2: memref<1x8x8x32xf32, #tpu.memory_space<vmem>>, %arg3: memref<1x1x32xf32, #tpu.memory_space<vmem>>, %arg4: memref<1x1x32xf32, #tpu.memory_space<vmem>>, %arg5: memref<3x3x32x64xbf16, #tpu.memory_space<vmem>>, %arg6: memref<1x64xf32, #tpu.memory_space<vmem>>, %arg7: memref<1x1x64xf32, #tpu.memory_space<vmem>>, %arg8: memref<1x16x64xbf16, #tpu.memory_space<vmem>>, %arg9: memref<4x10x32xf32, #tpu.memory_space<vmem>>) attributes {dimension_semantics = [#tpu.dimension_semantics<parallel>, #tpu.dimension_semantics<parallel>], iteration_bounds = array<i64: 2, 4>, scalar_prefetch = 0 : i64, scratch_operands = 1 : i64, tpu.core_type = #tpu.core_type<tc>, window_params = [{transform_indices = @transform_0, window_bounds = array<i64: 1, 8, 8, 32>}, {transform_indices = @transform_1, window_bounds = array<i64: 1, 1, 32>}, {transform_indices = @transform_2, window_bounds = array<i64: 1, 1, 32>}, {pipeline_mode = #tpu.pipeline_mode<synchronous>, transform_indices = @transform_3, window_bounds = array<i64: 3, 3, 32, 64>}, {pipeline_mode = #tpu.pipeline_mode<synchronous>, transform_indices = @transform_4, window_bounds = array<i64: 1, 64>}, {transform_indices = @transform_5, window_bounds = array<i64: 1, 1, 64>}, {transform_indices = @transform_6, window_bounds = array<i64: 1, 16, 64>}]} {
    %c0 = arith.constant 0 : index
    %c0_0 = arith.constant 0 : index
    %c0_1 = arith.constant 0 : index
    %0 = vector.load %arg3[%c0, %c0_0, %c0_1] : memref<1x1x32xf32, #tpu.memory_space<vmem>>, vector<1x1x32xf32>
    %1 = vector.shape_cast %0 : vector<1x1x32xf32> to vector<1x32xf32>
    %c0_2 = arith.constant 0 : index
    %c0_3 = arith.constant 0 : index
    %c0_4 = arith.constant 0 : index
    %2 = vector.load %arg4[%c0_2, %c0_3, %c0_4] : memref<1x1x32xf32, #tpu.memory_space<vmem>>, vector<1x1x32xf32>
    %3 = vector.shape_cast %2 : vector<1x1x32xf32> to vector<1x32xf32>
    %cst = arith.constant 0.000000e+00 : f32
    %4 = vector.broadcast %cst : f32 to vector<4x10x32xf32>
    %c0_5 = arith.constant 0 : index
    %c0_6 = arith.constant 0 : index
    %c0_7 = arith.constant 0 : index
    %5 = vector.load %arg9[%c0_5, %c0_6, %c0_7] : memref<4x10x32xf32, #tpu.memory_space<vmem>>, vector<4x10x32xf32>
    tpu.vector_store %arg9[%c0_5, %c0_6, %c0_7], %4 {strides = array<i32>} : memref<4x10x32xf32, #tpu.memory_space<vmem>>, vector<4x10x32xf32>,
    %c0_i32 = arith.constant 0 : i32
    %6 = arith.cmpi eq, %arg1, %c0_i32 : i32
    %7 = arith.extui %6 : i1 to i32
    %c0_i32_8 = arith.constant 0 : i32
    %8 = arith.cmpi ne, %7, %c0_i32_8 : i32
    scf.if %8 {
      %c0_92 = arith.constant 0 : index
      %c0_93 = arith.constant 0 : index
      %c0_94 = arith.constant 0 : index
      %c0_95 = arith.constant 0 : index
      %92 = vector.load %arg2[%c0_92, %c0_93, %c0_94, %c0_95] : memref<1x8x8x32xf32, #tpu.memory_space<vmem>>, vector<1x3x8x32xf32>
      %93 = vector.shape_cast %92 : vector<1x3x8x32xf32> to vector<3x8x32xf32>
      %94 = vector.shape_cast %1 : vector<1x32xf32> to vector<1x1x32xf32>
      %95 = vector.broadcast %94 : vector<1x1x32xf32> to vector<3x8x32xf32>
      %96 = arith.mulf %93, %95 : vector<3x8x32xf32>
      %97 = vector.shape_cast %3 : vector<1x32xf32> to vector<1x1x32xf32>
      %98 = vector.broadcast %97 : vector<1x1x32xf32> to vector<3x8x32xf32>
      %99 = arith.addf %96, %98 : vector<3x8x32xf32>
      %100 = arith.negf %99 : vector<3x8x32xf32>
      %101 = math.exp %100 : vector<3x8x32xf32>
      %cst_96 = arith.constant 1.000000e+00 : f32
      %102 = vector.broadcast %cst_96 : f32 to vector<3x8x32xf32>
      %103 = arith.addf %102, %101 : vector<3x8x32xf32>
      %104 = arith.divf %102, %103 : vector<3x8x32xf32>
      %105 = arith.mulf %99, %104 : vector<3x8x32xf32>
      %c1_97 = arith.constant 1 : index
      %c1_98 = arith.constant 1 : index
      %c0_99 = arith.constant 0 : index
      %106 = vector.load %arg9[%c1_97, %c1_98, %c0_99] : memref<4x10x32xf32, #tpu.memory_space<vmem>>, vector<3x8x32xf32>
      tpu.vector_store %arg9[%c1_97, %c1_98, %c0_99], %105 {strides = array<i32>} : memref<4x10x32xf32, #tpu.memory_space<vmem>>, vector<3x8x32xf32>,
    } else {
    }
    %c3_i32 = arith.constant 3 : i32
    %9 = arith.cmpi eq, %arg1, %c3_i32 : i32
    %10 = arith.extui %9 : i1 to i32
    %c0_i32_9 = arith.constant 0 : i32
    %11 = arith.cmpi ne, %10, %c0_i32_9 : i32
    scf.if %11 {
      %c0_92 = arith.constant 0 : index
      %c5 = arith.constant 5 : index
      %c0_93 = arith.constant 0 : index
      %c0_94 = arith.constant 0 : index
      %92 = vector.load %arg2[%c0_92, %c5, %c0_93, %c0_94] : memref<1x8x8x32xf32, #tpu.memory_space<vmem>>, vector<1x3x8x32xf32>
      %93 = vector.shape_cast %92 : vector<1x3x8x32xf32> to vector<3x8x32xf32>
      %94 = vector.shape_cast %1 : vector<1x32xf32> to vector<1x1x32xf32>
      %95 = vector.broadcast %94 : vector<1x1x32xf32> to vector<3x8x32xf32>
      %96 = arith.mulf %93, %95 : vector<3x8x32xf32>
      %97 = vector.shape_cast %3 : vector<1x32xf32> to vector<1x1x32xf32>
      %98 = vector.broadcast %97 : vector<1x1x32xf32> to vector<3x8x32xf32>
      %99 = arith.addf %96, %98 : vector<3x8x32xf32>
      %100 = arith.negf %99 : vector<3x8x32xf32>
      %101 = math.exp %100 : vector<3x8x32xf32>
      %cst_95 = arith.constant 1.000000e+00 : f32
      %102 = vector.broadcast %cst_95 : f32 to vector<3x8x32xf32>
      %103 = arith.addf %102, %101 : vector<3x8x32xf32>
      %104 = arith.divf %102, %103 : vector<3x8x32xf32>
      %105 = arith.mulf %99, %104 : vector<3x8x32xf32>
      %c0_96 = arith.constant 0 : index
      %c1_97 = arith.constant 1 : index
      %c0_98 = arith.constant 0 : index
      %106 = vector.load %arg9[%c0_96, %c1_97, %c0_98] : memref<4x10x32xf32, #tpu.memory_space<vmem>>, vector<3x8x32xf32>
      tpu.vector_store %arg9[%c0_96, %c1_97, %c0_98], %105 {strides = array<i32>} : memref<4x10x32xf32, #tpu.memory_space<vmem>>, vector<3x8x32xf32>,
    } else {
    }
    %c0_i32_10 = arith.constant 0 : i32
    %12 = arith.cmpi sgt, %arg1, %c0_i32_10 : i32
    %c3_i32_11 = arith.constant 3 : i32
    %13 = arith.cmpi slt, %arg1, %c3_i32_11 : i32
    %14 = arith.andi %12, %13 : i1
    %15 = arith.extui %14 : i1 to i32
    %c0_i32_12 = arith.constant 0 : i32
    %16 = arith.cmpi ne, %15, %c0_i32_12 : i32
    scf.if %16 {
      %c2_i32 = arith.constant 2 : i32
      %92 = arith.muli %arg1, %c2_i32 : i32
      %c1_i32 = arith.constant 1 : i32
      %93 = arith.subi %92, %c1_i32 : i32
      %c0_92 = arith.constant 0 : index
      %94 = arith.index_cast %93 : i32 to index
      %c0_93 = arith.constant 0 : index
      %c0_94 = arith.constant 0 : index
      %95 = vector.load %arg2[%c0_92, %94, %c0_93, %c0_94] : memref<1x8x8x32xf32, #tpu.memory_space<vmem>>, vector<1x4x8x32xf32>
      %96 = vector.shape_cast %95 : vector<1x4x8x32xf32> to vector<4x8x32xf32>
      %97 = vector.shape_cast %1 : vector<1x32xf32> to vector<1x1x32xf32>
      %98 = vector.broadcast %97 : vector<1x1x32xf32> to vector<4x8x32xf32>
      %99 = arith.mulf %96, %98 : vector<4x8x32xf32>
      %100 = vector.shape_cast %3 : vector<1x32xf32> to vector<1x1x32xf32>
      %101 = vector.broadcast %100 : vector<1x1x32xf32> to vector<4x8x32xf32>
      %102 = arith.addf %99, %101 : vector<4x8x32xf32>
      %103 = arith.negf %102 : vector<4x8x32xf32>
      %104 = math.exp %103 : vector<4x8x32xf32>
      %cst_95 = arith.constant 1.000000e+00 : f32
      %105 = vector.broadcast %cst_95 : f32 to vector<4x8x32xf32>
      %106 = arith.addf %105, %104 : vector<4x8x32xf32>
      %107 = arith.divf %105, %106 : vector<4x8x32xf32>
      %108 = arith.mulf %102, %107 : vector<4x8x32xf32>
      %c0_96 = arith.constant 0 : index
      %c1_97 = arith.constant 1 : index
      %c0_98 = arith.constant 0 : index
      %109 = vector.load %arg9[%c0_96, %c1_97, %c0_98] : memref<4x10x32xf32, #tpu.memory_space<vmem>>, vector<4x8x32xf32>
      tpu.vector_store %arg9[%c0_96, %c1_97, %c0_98], %108 {strides = array<i32>} : memref<4x10x32xf32, #tpu.memory_space<vmem>>, vector<4x8x32xf32>,
    } else {
    }
    %cst_13 = arith.constant 0.000000e+00 : f32
    %17 = vector.broadcast %cst_13 : f32 to vector<16x64xf32>
    %c0_14 = arith.constant 0 : index
    %c0_15 = arith.constant 0 : index
    %c0_16 = arith.constant 0 : index
    %18 = vector.load %arg9[%c0_14, %c0_15, %c0_16] : memref<4x10x32xf32, #tpu.memory_space<vmem>>, vector<2x8x32xf32>
    %19 = vector.shape_cast %18 : vector<2x8x32xf32> to vector<16x32xf32>
    %20 = arith.truncf %19 : vector<16x32xf32> to vector<16x32xbf16>
    %c0_17 = arith.constant 0 : index
    %c0_18 = arith.constant 0 : index
    %c0_19 = arith.constant 0 : index
    %c0_20 = arith.constant 0 : index
    %21 = vector.load %arg5[%c0_17, %c0_18, %c0_19, %c0_20] : memref<3x3x32x64xbf16, #tpu.memory_space<vmem>>, vector<1x1x32x64xbf16>
    %22 = vector.shape_cast %21 : vector<1x1x32x64xbf16> to vector<32x64xbf16>
    %cst_21 = arith.constant dense<0.000000e+00> : vector<16x64xf32>
    %23 = tpu.matmul %20, %22, %cst_21 {dimension_numbers = #tpu.dot_dimension_numbers<[1], [0], [0], [1], [0, 0, 1, 1], [], []>} : vector<16x32xbf16>, vector<32x64xbf16>, vector<16x64xf32> -> vector<16x64xf32>
    %24 = arith.addf %17, %23 : vector<16x64xf32>
    %c0_22 = arith.constant 0 : index
    %c1 = arith.constant 1 : index
    %c0_23 = arith.constant 0 : index
    %25 = vector.load %arg9[%c0_22, %c1, %c0_23] : memref<4x10x32xf32, #tpu.memory_space<vmem>>, vector<2x8x32xf32>
    %26 = vector.shape_cast %25 : vector<2x8x32xf32> to vector<16x32xf32>
    %27 = arith.truncf %26 : vector<16x32xf32> to vector<16x32xbf16>
    %c0_24 = arith.constant 0 : index
    %c1_25 = arith.constant 1 : index
    %c0_26 = arith.constant 0 : index
    %c0_27 = arith.constant 0 : index
    %28 = vector.load %arg5[%c0_24, %c1_25, %c0_26, %c0_27] : memref<3x3x32x64xbf16, #tpu.memory_space<vmem>>, vector<1x1x32x64xbf16>
    %29 = vector.shape_cast %28 : vector<1x1x32x64xbf16> to vector<32x64xbf16>
    %cst_28 = arith.constant dense<0.000000e+00> : vector<16x64xf32>
    %30 = tpu.matmul %27, %29, %cst_28 {dimension_numbers = #tpu.dot_dimension_numbers<[1], [0], [0], [1], [0, 0, 1, 1], [], []>} : vector<16x32xbf16>, vector<32x64xbf16>, vector<16x64xf32> -> vector<16x64xf32>
    %31 = arith.addf %24, %30 : vector<16x64xf32>
    %c0_29 = arith.constant 0 : index
    %c2 = arith.constant 2 : index
    %c0_30 = arith.constant 0 : index
    %32 = vector.load %arg9[%c0_29, %c2, %c0_30] : memref<4x10x32xf32, #tpu.memory_space<vmem>>, vector<2x8x32xf32>
    %33 = vector.shape_cast %32 : vector<2x8x32xf32> to vector<16x32xf32>
    %34 = arith.truncf %33 : vector<16x32xf32> to vector<16x32xbf16>
    %c0_31 = arith.constant 0 : index
    %c2_32 = arith.constant 2 : index
    %c0_33 = arith.constant 0 : index
    %c0_34 = arith.constant 0 : index
    %35 = vector.load %arg5[%c0_31, %c2_32, %c0_33, %c0_34] : memref<3x3x32x64xbf16, #tpu.memory_space<vmem>>, vector<1x1x32x64xbf16>
    %36 = vector.shape_cast %35 : vector<1x1x32x64xbf16> to vector<32x64xbf16>
    %cst_35 = arith.constant dense<0.000000e+00> : vector<16x64xf32>
    %37 = tpu.matmul %34, %36, %cst_35 {dimension_numbers = #tpu.dot_dimension_numbers<[1], [0], [0], [1], [0, 0, 1, 1], [], []>} : vector<16x32xbf16>, vector<32x64xbf16>, vector<16x64xf32> -> vector<16x64xf32>
    %38 = arith.addf %31, %37 : vector<16x64xf32>
    %c1_36 = arith.constant 1 : index
    %c0_37 = arith.constant 0 : index
    %c0_38 = arith.constant 0 : index
    %39 = vector.load %arg9[%c1_36, %c0_37, %c0_38] : memref<4x10x32xf32, #tpu.memory_space<vmem>>, vector<2x8x32xf32>
    %40 = vector.shape_cast %39 : vector<2x8x32xf32> to vector<16x32xf32>
    %41 = arith.truncf %40 : vector<16x32xf32> to vector<16x32xbf16>
    %c1_39 = arith.constant 1 : index
    %c0_40 = arith.constant 0 : index
    %c0_41 = arith.constant 0 : index
    %c0_42 = arith.constant 0 : index
    %42 = vector.load %arg5[%c1_39, %c0_40, %c0_41, %c0_42] : memref<3x3x32x64xbf16, #tpu.memory_space<vmem>>, vector<1x1x32x64xbf16>
    %43 = vector.shape_cast %42 : vector<1x1x32x64xbf16> to vector<32x64xbf16>
    %cst_43 = arith.constant dense<0.000000e+00> : vector<16x64xf32>
    %44 = tpu.matmul %41, %43, %cst_43 {dimension_numbers = #tpu.dot_dimension_numbers<[1], [0], [0], [1], [0, 0, 1, 1], [], []>} : vector<16x32xbf16>, vector<32x64xbf16>, vector<16x64xf32> -> vector<16x64xf32>
    %45 = arith.addf %38, %44 : vector<16x64xf32>
    %c1_44 = arith.constant 1 : index
    %c1_45 = arith.constant 1 : index
    %c0_46 = arith.constant 0 : index
    %46 = vector.load %arg9[%c1_44, %c1_45, %c0_46] : memref<4x10x32xf32, #tpu.memory_space<vmem>>, vector<2x8x32xf32>
    %47 = vector.shape_cast %46 : vector<2x8x32xf32> to vector<16x32xf32>
    %48 = arith.truncf %47 : vector<16x32xf32> to vector<16x32xbf16>
    %c1_47 = arith.constant 1 : index
    %c1_48 = arith.constant 1 : index
    %c0_49 = arith.constant 0 : index
    %c0_50 = arith.constant 0 : index
    %49 = vector.load %arg5[%c1_47, %c1_48, %c0_49, %c0_50] : memref<3x3x32x64xbf16, #tpu.memory_space<vmem>>, vector<1x1x32x64xbf16>
    %50 = vector.shape_cast %49 : vector<1x1x32x64xbf16> to vector<32x64xbf16>
    %cst_51 = arith.constant dense<0.000000e+00> : vector<16x64xf32>
    %51 = tpu.matmul %48, %50, %cst_51 {dimension_numbers = #tpu.dot_dimension_numbers<[1], [0], [0], [1], [0, 0, 1, 1], [], []>} : vector<16x32xbf16>, vector<32x64xbf16>, vector<16x64xf32> -> vector<16x64xf32>
    %52 = arith.addf %45, %51 : vector<16x64xf32>
    %c1_52 = arith.constant 1 : index
    %c2_53 = arith.constant 2 : index
    %c0_54 = arith.constant 0 : index
    %53 = vector.load %arg9[%c1_52, %c2_53, %c0_54] : memref<4x10x32xf32, #tpu.memory_space<vmem>>, vector<2x8x32xf32>
    %54 = vector.shape_cast %53 : vector<2x8x32xf32> to vector<16x32xf32>
    %55 = arith.truncf %54 : vector<16x32xf32> to vector<16x32xbf16>
    %c1_55 = arith.constant 1 : index
    %c2_56 = arith.constant 2 : index
    %c0_57 = arith.constant 0 : index
    %c0_58 = arith.constant 0 : index
    %56 = vector.load %arg5[%c1_55, %c2_56, %c0_57, %c0_58] : memref<3x3x32x64xbf16, #tpu.memory_space<vmem>>, vector<1x1x32x64xbf16>
    %57 = vector.shape_cast %56 : vector<1x1x32x64xbf16> to vector<32x64xbf16>
    %cst_59 = arith.constant dense<0.000000e+00> : vector<16x64xf32>
    %58 = tpu.matmul %55, %57, %cst_59 {dimension_numbers = #tpu.dot_dimension_numbers<[1], [0], [0], [1], [0, 0, 1, 1], [], []>} : vector<16x32xbf16>, vector<32x64xbf16>, vector<16x64xf32> -> vector<16x64xf32>
    %59 = arith.addf %52, %58 : vector<16x64xf32>
    %c2_60 = arith.constant 2 : index
    %c0_61 = arith.constant 0 : index
    %c0_62 = arith.constant 0 : index
    %60 = vector.load %arg9[%c2_60, %c0_61, %c0_62] : memref<4x10x32xf32, #tpu.memory_space<vmem>>, vector<2x8x32xf32>
    %61 = vector.shape_cast %60 : vector<2x8x32xf32> to vector<16x32xf32>
    %62 = arith.truncf %61 : vector<16x32xf32> to vector<16x32xbf16>
    %c2_63 = arith.constant 2 : index
    %c0_64 = arith.constant 0 : index
    %c0_65 = arith.constant 0 : index
    %c0_66 = arith.constant 0 : index
    %63 = vector.load %arg5[%c2_63, %c0_64, %c0_65, %c0_66] : memref<3x3x32x64xbf16, #tpu.memory_space<vmem>>, vector<1x1x32x64xbf16>
    %64 = vector.shape_cast %63 : vector<1x1x32x64xbf16> to vector<32x64xbf16>
    %cst_67 = arith.constant dense<0.000000e+00> : vector<16x64xf32>
    %65 = tpu.matmul %62, %64, %cst_67 {dimension_numbers = #tpu.dot_dimension_numbers<[1], [0], [0], [1], [0, 0, 1, 1], [], []>} : vector<16x32xbf16>, vector<32x64xbf16>, vector<16x64xf32> -> vector<16x64xf32>
    %66 = arith.addf %59, %65 : vector<16x64xf32>
    %c2_68 = arith.constant 2 : index
    %c1_69 = arith.constant 1 : index
    %c0_70 = arith.constant 0 : index
    %67 = vector.load %arg9[%c2_68, %c1_69, %c0_70] : memref<4x10x32xf32, #tpu.memory_space<vmem>>, vector<2x8x32xf32>
    %68 = vector.shape_cast %67 : vector<2x8x32xf32> to vector<16x32xf32>
    %69 = arith.truncf %68 : vector<16x32xf32> to vector<16x32xbf16>
    %c2_71 = arith.constant 2 : index
    %c1_72 = arith.constant 1 : index
    %c0_73 = arith.constant 0 : index
    %c0_74 = arith.constant 0 : index
    %70 = vector.load %arg5[%c2_71, %c1_72, %c0_73, %c0_74] : memref<3x3x32x64xbf16, #tpu.memory_space<vmem>>, vector<1x1x32x64xbf16>
    %71 = vector.shape_cast %70 : vector<1x1x32x64xbf16> to vector<32x64xbf16>
    %cst_75 = arith.constant dense<0.000000e+00> : vector<16x64xf32>
    %72 = tpu.matmul %69, %71, %cst_75 {dimension_numbers = #tpu.dot_dimension_numbers<[1], [0], [0], [1], [0, 0, 1, 1], [], []>} : vector<16x32xbf16>, vector<32x64xbf16>, vector<16x64xf32> -> vector<16x64xf32>
    %73 = arith.addf %66, %72 : vector<16x64xf32>
    %c2_76 = arith.constant 2 : index
    %c2_77 = arith.constant 2 : index
    %c0_78 = arith.constant 0 : index
    %74 = vector.load %arg9[%c2_76, %c2_77, %c0_78] : memref<4x10x32xf32, #tpu.memory_space<vmem>>, vector<2x8x32xf32>
    %75 = vector.shape_cast %74 : vector<2x8x32xf32> to vector<16x32xf32>
    %76 = arith.truncf %75 : vector<16x32xf32> to vector<16x32xbf16>
    %c2_79 = arith.constant 2 : index
    %c2_80 = arith.constant 2 : index
    %c0_81 = arith.constant 0 : index
    %c0_82 = arith.constant 0 : index
    %77 = vector.load %arg5[%c2_79, %c2_80, %c0_81, %c0_82] : memref<3x3x32x64xbf16, #tpu.memory_space<vmem>>, vector<1x1x32x64xbf16>
    %78 = vector.shape_cast %77 : vector<1x1x32x64xbf16> to vector<32x64xbf16>
    %cst_83 = arith.constant dense<0.000000e+00> : vector<16x64xf32>
    %79 = tpu.matmul %76, %78, %cst_83 {dimension_numbers = #tpu.dot_dimension_numbers<[1], [0], [0], [1], [0, 0, 1, 1], [], []>} : vector<16x32xbf16>, vector<32x64xbf16>, vector<16x64xf32> -> vector<16x64xf32>
    %80 = arith.addf %73, %79 : vector<16x64xf32>
    %c0_84 = arith.constant 0 : index
    %c0_85 = arith.constant 0 : index
    %81 = vector.load %arg6[%c0_84, %c0_85] : memref<1x64xf32, #tpu.memory_space<vmem>>, vector<1x64xf32>
    %82 = vector.broadcast %81 : vector<1x64xf32> to vector<16x64xf32>
    %83 = arith.addf %80, %82 : vector<16x64xf32>
    %c0_86 = arith.constant 0 : index
    %c0_87 = arith.constant 0 : index
    %c0_88 = arith.constant 0 : index
    %84 = vector.load %arg7[%c0_86, %c0_87, %c0_88] : memref<1x1x64xf32, #tpu.memory_space<vmem>>, vector<1x1x64xf32>
    %85 = vector.shape_cast %84 : vector<1x1x64xf32> to vector<1x64xf32>
    %86 = vector.broadcast %85 : vector<1x64xf32> to vector<16x64xf32>
    %87 = arith.addf %83, %86 : vector<16x64xf32>
    %88 = arith.truncf %87 : vector<16x64xf32> to vector<16x64xbf16>
    %c0_89 = arith.constant 0 : index
    %c0_90 = arith.constant 0 : index
    %c0_91 = arith.constant 0 : index
    %89 = vector.load %arg8[%c0_89, %c0_90, %c0_91] : memref<1x16x64xbf16, #tpu.memory_space<vmem>>, vector<1x16x64xbf16>
    %90 = vector.shape_cast %89 : vector<1x16x64xbf16> to vector<16x64xbf16>
    %91 = vector.shape_cast %88 : vector<16x64xbf16> to vector<1x16x64xbf16>
    tpu.vector_store %arg8[%c0_89, %c0_90, %c0_91], %91 {strides = array<i32>} : memref<1x16x64xbf16, #tpu.memory_space<vmem>>, vector<1x16x64xbf16>,
    return
  }
  func.func @transform_0(%arg0: i32, %arg1: i32) -> (i32, i32, i32, i32) {
    %c0_i32 = arith.constant 0 : i32
    %c0_i32_0 = arith.constant 0 : i32
    %c0_i32_1 = arith.constant 0 : i32
    %c0_i32_2 = arith.constant 0 : i32
    return %arg0, %c0_i32, %c0_i32_0, %c0_i32_1 : i32, i32, i32, i32
  }
  func.func @transform_1(%arg0: i32, %arg1: i32) -> (i32, i32, i32) {
    %c0_i32 = arith.constant 0 : i32
    %c0_i32_0 = arith.constant 0 : i32
    %c0_i32_1 = arith.constant 0 : i32
    return %arg0, %c0_i32, %c0_i32_0 : i32, i32, i32
  }
  func.func @transform_2(%arg0: i32, %arg1: i32) -> (i32, i32, i32) {
    %c0_i32 = arith.constant 0 : i32
    %c0_i32_0 = arith.constant 0 : i32
    %c0_i32_1 = arith.constant 0 : i32
    return %arg0, %c0_i32, %c0_i32_0 : i32, i32, i32
  }
  func.func @transform_3(%arg0: i32, %arg1: i32) -> (i32, i32, i32, i32) {
    %c0_i32 = arith.constant 0 : i32
    %c0_i32_0 = arith.constant 0 : i32
    %c0_i32_1 = arith.constant 0 : i32
    %c0_i32_2 = arith.constant 0 : i32
    %c0_i32_3 = arith.constant 0 : i32
    return %c0_i32, %c0_i32_0, %c0_i32_1, %c0_i32_2 : i32, i32, i32, i32
  }
  func.func @transform_4(%arg0: i32, %arg1: i32) -> (i32, i32) {
    %c0_i32 = arith.constant 0 : i32
    %c0_i32_0 = arith.constant 0 : i32
    %c0_i32_1 = arith.constant 0 : i32
    return %c0_i32, %c0_i32_0 : i32, i32
  }
  func.func @transform_5(%arg0: i32, %arg1: i32) -> (i32, i32, i32) {
    %c0_i32 = arith.constant 0 : i32
    %c0_i32_0 = arith.constant 0 : i32
    %c0_i32_1 = arith.constant 0 : i32
    return %arg0, %c0_i32, %c0_i32_0 : i32, i32, i32
  }
  func.func @transform_6(%arg0: i32, %arg1: i32) -> (i32, i32, i32) {
    %c0_i32 = arith.constant 0 : i32
    %c0_i32_0 = arith.constant 0 : i32
    return %arg0, %arg1, %c0_i32 : i32, i32, i32
  }
}

module attributes {stable_mosaic.version = 11 : i64} {
  func.func @gn_stats_kernel(%arg0: i32, %arg1: i32, %arg2: memref<1x16x64xbf16, #tpu.memory_space<vmem>>, %arg3: memref<1x1x64xf32, #tpu.memory_space<vmem>>, %arg4: memref<1x1x64xf32, #tpu.memory_space<vmem>>) attributes {dimension_semantics = [#tpu.dimension_semantics<parallel>, #tpu.dimension_semantics<arbitrary>], iteration_bounds = array<i64: 2, 4>, scalar_prefetch = 0 : i64, scratch_operands = 0 : i64, tpu.core_type = #tpu.core_type<tc>, window_params = [{transform_indices = @transform_0, window_bounds = array<i64: 1, 16, 64>}, {transform_indices = @transform_1, window_bounds = array<i64: 1, 1, 64>}, {transform_indices = @transform_2, window_bounds = array<i64: 1, 1, 64>}]} {
    %c0_i32 = arith.constant 0 : i32
    %0 = arith.cmpi eq, %arg1, %c0_i32 : i32
    %1 = arith.extui %0 : i1 to i32
    %c0_i32_0 = arith.constant 0 : i32
    %2 = arith.cmpi ne, %1, %c0_i32_0 : i32
    scf.if %2 {
      %cst_16 = arith.constant 0.000000e+00 : f32
      %23 = vector.broadcast %cst_16 : f32 to vector<1x1x64xf32>
      %c0_17 = arith.constant 0 : index
      %c0_18 = arith.constant 0 : index
      %c0_19 = arith.constant 0 : index
      %24 = vector.load %arg3[%c0_17, %c0_18, %c0_19] : memref<1x1x64xf32, #tpu.memory_space<vmem>>, vector<1x1x64xf32>
      tpu.vector_store %arg3[%c0_17, %c0_18, %c0_19], %23 {strides = array<i32>} : memref<1x1x64xf32, #tpu.memory_space<vmem>>, vector<1x1x64xf32>,
      %cst_20 = arith.constant 0.000000e+00 : f32
      %25 = vector.broadcast %cst_20 : f32 to vector<1x1x64xf32>
      %c0_21 = arith.constant 0 : index
      %c0_22 = arith.constant 0 : index
      %c0_23 = arith.constant 0 : index
      %26 = vector.load %arg4[%c0_21, %c0_22, %c0_23] : memref<1x1x64xf32, #tpu.memory_space<vmem>>, vector<1x1x64xf32>
      tpu.vector_store %arg4[%c0_21, %c0_22, %c0_23], %25 {strides = array<i32>} : memref<1x1x64xf32, #tpu.memory_space<vmem>>, vector<1x1x64xf32>,
    } else {
    }
    %c0 = arith.constant 0 : index
    %c0_1 = arith.constant 0 : index
    %c0_2 = arith.constant 0 : index
    %3 = vector.load %arg2[%c0, %c0_1, %c0_2] : memref<1x16x64xbf16, #tpu.memory_space<vmem>>, vector<1x16x64xbf16>
    %4 = vector.shape_cast %3 : vector<1x16x64xbf16> to vector<16x64xbf16>
    %5 = arith.extf %4 : vector<16x64xbf16> to vector<16x64xf32>
    %c0_3 = arith.constant 0 : index
    %c0_4 = arith.constant 0 : index
    %c0_5 = arith.constant 0 : index
    %6 = vector.load %arg3[%c0_3, %c0_4, %c0_5] : memref<1x1x64xf32, #tpu.memory_space<vmem>>, vector<1x1x64xf32>
    %7 = vector.shape_cast %6 : vector<1x1x64xf32> to vector<1x64xf32>
    %cst = arith.constant dense<0.000000e+00> : vector<64xf32>
    %8 = vector.multi_reduction <add>, %5, %cst [0] : vector<16x64xf32> to vector<64xf32>
    %9 = vector.shape_cast %8 : vector<64xf32> to vector<1x64xf32>
    %10 = arith.addf %7, %9 : vector<1x64xf32>
    %c0_6 = arith.constant 0 : index
    %c0_7 = arith.constant 0 : index
    %c0_8 = arith.constant 0 : index
    %11 = vector.load %arg3[%c0_6, %c0_7, %c0_8] : memref<1x1x64xf32, #tpu.memory_space<vmem>>, vector<1x1x64xf32>
    %12 = vector.shape_cast %11 : vector<1x1x64xf32> to vector<1x64xf32>
    %13 = vector.shape_cast %10 : vector<1x64xf32> to vector<1x1x64xf32>
    tpu.vector_store %arg3[%c0_6, %c0_7, %c0_8], %13 {strides = array<i32>} : memref<1x1x64xf32, #tpu.memory_space<vmem>>, vector<1x1x64xf32>,
    %c0_9 = arith.constant 0 : index
    %c0_10 = arith.constant 0 : index
    %c0_11 = arith.constant 0 : index
    %14 = vector.load %arg4[%c0_9, %c0_10, %c0_11] : memref<1x1x64xf32, #tpu.memory_space<vmem>>, vector<1x1x64xf32>
    %15 = vector.shape_cast %14 : vector<1x1x64xf32> to vector<1x64xf32>
    %16 = arith.mulf %5, %5 : vector<16x64xf32>
    %cst_12 = arith.constant dense<0.000000e+00> : vector<64xf32>
    %17 = vector.multi_reduction <add>, %16, %cst_12 [0] : vector<16x64xf32> to vector<64xf32>
    %18 = vector.shape_cast %17 : vector<64xf32> to vector<1x64xf32>
    %19 = arith.addf %15, %18 : vector<1x64xf32>
    %c0_13 = arith.constant 0 : index
    %c0_14 = arith.constant 0 : index
    %c0_15 = arith.constant 0 : index
    %20 = vector.load %arg4[%c0_13, %c0_14, %c0_15] : memref<1x1x64xf32, #tpu.memory_space<vmem>>, vector<1x1x64xf32>
    %21 = vector.shape_cast %20 : vector<1x1x64xf32> to vector<1x64xf32>
    %22 = vector.shape_cast %19 : vector<1x64xf32> to vector<1x1x64xf32>
    tpu.vector_store %arg4[%c0_13, %c0_14, %c0_15], %22 {strides = array<i32>} : memref<1x1x64xf32, #tpu.memory_space<vmem>>, vector<1x1x64xf32>,
    return
  }
  func.func @transform_0(%arg0: i32, %arg1: i32) -> (i32, i32, i32) {
    %c0_i32 = arith.constant 0 : i32
    %c0_i32_0 = arith.constant 0 : i32
    return %arg0, %arg1, %c0_i32 : i32, i32, i32
  }
  func.func @transform_1(%arg0: i32, %arg1: i32) -> (i32, i32, i32) {
    %c0_i32 = arith.constant 0 : i32
    %c0_i32_0 = arith.constant 0 : i32
    %c0_i32_1 = arith.constant 0 : i32
    return %arg0, %c0_i32, %c0_i32_0 : i32, i32, i32
  }
  func.func @transform_2(%arg0: i32, %arg1: i32) -> (i32, i32, i32) {
    %c0_i32 = arith.constant 0 : i32
    %c0_i32_0 = arith.constant 0 : i32
    %c0_i32_1 = arith.constant 0 : i32
    return %arg0, %c0_i32, %c0_i32_0 : i32, i32, i32
  }
}

module attributes {stable_mosaic.version = 11 : i64} {
  func.func @gn_silu_conv_res_proj_kernel(%arg0: i32, %arg1: i32, %arg2: memref<1x8x8x64xbf16, #tpu.memory_space<vmem>>, %arg3: memref<1x1x64xf32, #tpu.memory_space<vmem>>, %arg4: memref<1x1x64xf32, #tpu.memory_space<vmem>>, %arg5: memref<3x3x64x64xbf16, #tpu.memory_space<vmem>>, %arg6: memref<1x64xf32, #tpu.memory_space<vmem>>, %arg7: memref<1x2x8x32xf32, #tpu.memory_space<vmem>>, %arg8: memref<32x64xbf16, #tpu.memory_space<vmem>>, %arg9: memref<1x64xf32, #tpu.memory_space<vmem>>, %arg10: memref<1x16x64xf32, #tpu.memory_space<vmem>>, %arg11: memref<4x10x64xf32, #tpu.memory_space<vmem>>) attributes {dimension_semantics = [#tpu.dimension_semantics<parallel>, #tpu.dimension_semantics<parallel>], iteration_bounds = array<i64: 2, 4>, scalar_prefetch = 0 : i64, scratch_operands = 1 : i64, tpu.core_type = #tpu.core_type<tc>, window_params = [{transform_indices = @transform_0, window_bounds = array<i64: 1, 8, 8, 64>}, {transform_indices = @transform_1, window_bounds = array<i64: 1, 1, 64>}, {transform_indices = @transform_2, window_bounds = array<i64: 1, 1, 64>}, {pipeline_mode = #tpu.pipeline_mode<synchronous>, transform_indices = @transform_3, window_bounds = array<i64: 3, 3, 64, 64>}, {pipeline_mode = #tpu.pipeline_mode<synchronous>, transform_indices = @transform_4, window_bounds = array<i64: 1, 64>}, {transform_indices = @transform_5, window_bounds = array<i64: 1, 2, 8, 32>}, {pipeline_mode = #tpu.pipeline_mode<synchronous>, transform_indices = @transform_6, window_bounds = array<i64: 32, 64>}, {pipeline_mode = #tpu.pipeline_mode<synchronous>, transform_indices = @transform_7, window_bounds = array<i64: 1, 64>}, {transform_indices = @transform_8, window_bounds = array<i64: 1, 16, 64>}]} {
    %c0 = arith.constant 0 : index
    %c0_0 = arith.constant 0 : index
    %c0_1 = arith.constant 0 : index
    %0 = vector.load %arg3[%c0, %c0_0, %c0_1] : memref<1x1x64xf32, #tpu.memory_space<vmem>>, vector<1x1x64xf32>
    %1 = vector.shape_cast %0 : vector<1x1x64xf32> to vector<1x64xf32>
    %c0_2 = arith.constant 0 : index
    %c0_3 = arith.constant 0 : index
    %c0_4 = arith.constant 0 : index
    %2 = vector.load %arg4[%c0_2, %c0_3, %c0_4] : memref<1x1x64xf32, #tpu.memory_space<vmem>>, vector<1x1x64xf32>
    %3 = vector.shape_cast %2 : vector<1x1x64xf32> to vector<1x64xf32>
    %cst = arith.constant 0.000000e+00 : f32
    %4 = vector.broadcast %cst : f32 to vector<4x10x64xf32>
    %c0_5 = arith.constant 0 : index
    %c0_6 = arith.constant 0 : index
    %c0_7 = arith.constant 0 : index
    %5 = vector.load %arg11[%c0_5, %c0_6, %c0_7] : memref<4x10x64xf32, #tpu.memory_space<vmem>>, vector<4x10x64xf32>
    tpu.vector_store %arg11[%c0_5, %c0_6, %c0_7], %4 {strides = array<i32>} : memref<4x10x64xf32, #tpu.memory_space<vmem>>, vector<4x10x64xf32>,
    %c0_i32 = arith.constant 0 : i32
    %6 = arith.cmpi eq, %arg1, %c0_i32 : i32
    %7 = arith.extui %6 : i1 to i32
    %c0_i32_8 = arith.constant 0 : i32
    %8 = arith.cmpi ne, %7, %c0_i32_8 : i32
    scf.if %8 {
      %c0_98 = arith.constant 0 : index
      %c0_99 = arith.constant 0 : index
      %c0_100 = arith.constant 0 : index
      %c0_101 = arith.constant 0 : index
      %97 = vector.load %arg2[%c0_98, %c0_99, %c0_100, %c0_101] : memref<1x8x8x64xbf16, #tpu.memory_space<vmem>>, vector<1x3x8x64xbf16>
      %98 = vector.shape_cast %97 : vector<1x3x8x64xbf16> to vector<3x8x64xbf16>
      %99 = arith.extf %98 : vector<3x8x64xbf16> to vector<3x8x64xf32>
      %100 = vector.shape_cast %1 : vector<1x64xf32> to vector<1x1x64xf32>
      %101 = vector.broadcast %100 : vector<1x1x64xf32> to vector<3x8x64xf32>
      %102 = arith.mulf %99, %101 : vector<3x8x64xf32>
      %103 = vector.shape_cast %3 : vector<1x64xf32> to vector<1x1x64xf32>
      %104 = vector.broadcast %103 : vector<1x1x64xf32> to vector<3x8x64xf32>
      %105 = arith.addf %102, %104 : vector<3x8x64xf32>
      %106 = arith.negf %105 : vector<3x8x64xf32>
      %107 = math.exp %106 : vector<3x8x64xf32>
      %cst_102 = arith.constant 1.000000e+00 : f32
      %108 = vector.broadcast %cst_102 : f32 to vector<3x8x64xf32>
      %109 = arith.addf %108, %107 : vector<3x8x64xf32>
      %110 = arith.divf %108, %109 : vector<3x8x64xf32>
      %111 = arith.mulf %105, %110 : vector<3x8x64xf32>
      %c1_103 = arith.constant 1 : index
      %c1_104 = arith.constant 1 : index
      %c0_105 = arith.constant 0 : index
      %112 = vector.load %arg11[%c1_103, %c1_104, %c0_105] : memref<4x10x64xf32, #tpu.memory_space<vmem>>, vector<3x8x64xf32>
      tpu.vector_store %arg11[%c1_103, %c1_104, %c0_105], %111 {strides = array<i32>} : memref<4x10x64xf32, #tpu.memory_space<vmem>>, vector<3x8x64xf32>,
    } else {
    }
    %c3_i32 = arith.constant 3 : i32
    %9 = arith.cmpi eq, %arg1, %c3_i32 : i32
    %10 = arith.extui %9 : i1 to i32
    %c0_i32_9 = arith.constant 0 : i32
    %11 = arith.cmpi ne, %10, %c0_i32_9 : i32
    scf.if %11 {
      %c0_98 = arith.constant 0 : index
      %c5 = arith.constant 5 : index
      %c0_99 = arith.constant 0 : index
      %c0_100 = arith.constant 0 : index
      %97 = vector.load %arg2[%c0_98, %c5, %c0_99, %c0_100] : memref<1x8x8x64xbf16, #tpu.memory_space<vmem>>, vector<1x3x8x64xbf16>
      %98 = vector.shape_cast %97 : vector<1x3x8x64xbf16> to vector<3x8x64xbf16>
      %99 = arith.extf %98 : vector<3x8x64xbf16> to vector<3x8x64xf32>
      %100 = vector.shape_cast %1 : vector<1x64xf32> to vector<1x1x64xf32>
      %101 = vector.broadcast %100 : vector<1x1x64xf32> to vector<3x8x64xf32>
      %102 = arith.mulf %99, %101 : vector<3x8x64xf32>
      %103 = vector.shape_cast %3 : vector<1x64xf32> to vector<1x1x64xf32>
      %104 = vector.broadcast %103 : vector<1x1x64xf32> to vector<3x8x64xf32>
      %105 = arith.addf %102, %104 : vector<3x8x64xf32>
      %106 = arith.negf %105 : vector<3x8x64xf32>
      %107 = math.exp %106 : vector<3x8x64xf32>
      %cst_101 = arith.constant 1.000000e+00 : f32
      %108 = vector.broadcast %cst_101 : f32 to vector<3x8x64xf32>
      %109 = arith.addf %108, %107 : vector<3x8x64xf32>
      %110 = arith.divf %108, %109 : vector<3x8x64xf32>
      %111 = arith.mulf %105, %110 : vector<3x8x64xf32>
      %c0_102 = arith.constant 0 : index
      %c1_103 = arith.constant 1 : index
      %c0_104 = arith.constant 0 : index
      %112 = vector.load %arg11[%c0_102, %c1_103, %c0_104] : memref<4x10x64xf32, #tpu.memory_space<vmem>>, vector<3x8x64xf32>
      tpu.vector_store %arg11[%c0_102, %c1_103, %c0_104], %111 {strides = array<i32>} : memref<4x10x64xf32, #tpu.memory_space<vmem>>, vector<3x8x64xf32>,
    } else {
    }
    %c0_i32_10 = arith.constant 0 : i32
    %12 = arith.cmpi sgt, %arg1, %c0_i32_10 : i32
    %c3_i32_11 = arith.constant 3 : i32
    %13 = arith.cmpi slt, %arg1, %c3_i32_11 : i32
    %14 = arith.andi %12, %13 : i1
    %15 = arith.extui %14 : i1 to i32
    %c0_i32_12 = arith.constant 0 : i32
    %16 = arith.cmpi ne, %15, %c0_i32_12 : i32
    scf.if %16 {
      %c2_i32 = arith.constant 2 : i32
      %97 = arith.muli %arg1, %c2_i32 : i32
      %c1_i32 = arith.constant 1 : i32
      %98 = arith.subi %97, %c1_i32 : i32
      %c0_98 = arith.constant 0 : index
      %99 = arith.index_cast %98 : i32 to index
      %c0_99 = arith.constant 0 : index
      %c0_100 = arith.constant 0 : index
      %100 = vector.load %arg2[%c0_98, %99, %c0_99, %c0_100] : memref<1x8x8x64xbf16, #tpu.memory_space<vmem>>, vector<1x4x8x64xbf16>
      %101 = vector.shape_cast %100 : vector<1x4x8x64xbf16> to vector<4x8x64xbf16>
      %102 = arith.extf %101 : vector<4x8x64xbf16> to vector<4x8x64xf32>
      %103 = vector.shape_cast %1 : vector<1x64xf32> to vector<1x1x64xf32>
      %104 = vector.broadcast %103 : vector<1x1x64xf32> to vector<4x8x64xf32>
      %105 = arith.mulf %102, %104 : vector<4x8x64xf32>
      %106 = vector.shape_cast %3 : vector<1x64xf32> to vector<1x1x64xf32>
      %107 = vector.broadcast %106 : vector<1x1x64xf32> to vector<4x8x64xf32>
      %108 = arith.addf %105, %107 : vector<4x8x64xf32>
      %109 = arith.negf %108 : vector<4x8x64xf32>
      %110 = math.exp %109 : vector<4x8x64xf32>
      %cst_101 = arith.constant 1.000000e+00 : f32
      %111 = vector.broadcast %cst_101 : f32 to vector<4x8x64xf32>
      %112 = arith.addf %111, %110 : vector<4x8x64xf32>
      %113 = arith.divf %111, %112 : vector<4x8x64xf32>
      %114 = arith.mulf %108, %113 : vector<4x8x64xf32>
      %c0_102 = arith.constant 0 : index
      %c1_103 = arith.constant 1 : index
      %c0_104 = arith.constant 0 : index
      %115 = vector.load %arg11[%c0_102, %c1_103, %c0_104] : memref<4x10x64xf32, #tpu.memory_space<vmem>>, vector<4x8x64xf32>
      tpu.vector_store %arg11[%c0_102, %c1_103, %c0_104], %114 {strides = array<i32>} : memref<4x10x64xf32, #tpu.memory_space<vmem>>, vector<4x8x64xf32>,
    } else {
    }
    %cst_13 = arith.constant 0.000000e+00 : f32
    %17 = vector.broadcast %cst_13 : f32 to vector<16x64xf32>
    %c0_14 = arith.constant 0 : index
    %c0_15 = arith.constant 0 : index
    %c0_16 = arith.constant 0 : index
    %18 = vector.load %arg11[%c0_14, %c0_15, %c0_16] : memref<4x10x64xf32, #tpu.memory_space<vmem>>, vector<2x8x64xf32>
    %19 = vector.shape_cast %18 : vector<2x8x64xf32> to vector<16x64xf32>
    %20 = arith.truncf %19 : vector<16x64xf32> to vector<16x64xbf16>
    %c0_17 = arith.constant 0 : index
    %c0_18 = arith.constant 0 : index
    %c0_19 = arith.constant 0 : index
    %c0_20 = arith.constant 0 : index
    %21 = vector.load %arg5[%c0_17, %c0_18, %c0_19, %c0_20] : memref<3x3x64x64xbf16, #tpu.memory_space<vmem>>, vector<1x1x64x64xbf16>
    %22 = vector.shape_cast %21 : vector<1x1x64x64xbf16> to vector<64x64xbf16>
    %cst_21 = arith.constant dense<0.000000e+00> : vector<16x64xf32>
    %23 = tpu.matmul %20, %22, %cst_21 {dimension_numbers = #tpu.dot_dimension_numbers<[1], [0], [0], [1], [0, 0, 1, 1], [], []>} : vector<16x64xbf16>, vector<64x64xbf16>, vector<16x64xf32> -> vector<16x64xf32>
    %24 = arith.addf %17, %23 : vector<16x64xf32>
    %c0_22 = arith.constant 0 : index
    %c1 = arith.constant 1 : index
    %c0_23 = arith.constant 0 : index
    %25 = vector.load %arg11[%c0_22, %c1, %c0_23] : memref<4x10x64xf32, #tpu.memory_space<vmem>>, vector<2x8x64xf32>
    %26 = vector.shape_cast %25 : vector<2x8x64xf32> to vector<16x64xf32>
    %27 = arith.truncf %26 : vector<16x64xf32> to vector<16x64xbf16>
    %c0_24 = arith.constant 0 : index
    %c1_25 = arith.constant 1 : index
    %c0_26 = arith.constant 0 : index
    %c0_27 = arith.constant 0 : index
    %28 = vector.load %arg5[%c0_24, %c1_25, %c0_26, %c0_27] : memref<3x3x64x64xbf16, #tpu.memory_space<vmem>>, vector<1x1x64x64xbf16>
    %29 = vector.shape_cast %28 : vector<1x1x64x64xbf16> to vector<64x64xbf16>
    %cst_28 = arith.constant dense<0.000000e+00> : vector<16x64xf32>
    %30 = tpu.matmul %27, %29, %cst_28 {dimension_numbers = #tpu.dot_dimension_numbers<[1], [0], [0], [1], [0, 0, 1, 1], [], []>} : vector<16x64xbf16>, vector<64x64xbf16>, vector<16x64xf32> -> vector<16x64xf32>
    %31 = arith.addf %24, %30 : vector<16x64xf32>
    %c0_29 = arith.constant 0 : index
    %c2 = arith.constant 2 : index
    %c0_30 = arith.constant 0 : index
    %32 = vector.load %arg11[%c0_29, %c2, %c0_30] : memref<4x10x64xf32, #tpu.memory_space<vmem>>, vector<2x8x64xf32>
    %33 = vector.shape_cast %32 : vector<2x8x64xf32> to vector<16x64xf32>
    %34 = arith.truncf %33 : vector<16x64xf32> to vector<16x64xbf16>
    %c0_31 = arith.constant 0 : index
    %c2_32 = arith.constant 2 : index
    %c0_33 = arith.constant 0 : index
    %c0_34 = arith.constant 0 : index
    %35 = vector.load %arg5[%c0_31, %c2_32, %c0_33, %c0_34] : memref<3x3x64x64xbf16, #tpu.memory_space<vmem>>, vector<1x1x64x64xbf16>
    %36 = vector.shape_cast %35 : vector<1x1x64x64xbf16> to vector<64x64xbf16>
    %cst_35 = arith.constant dense<0.000000e+00> : vector<16x64xf32>
    %37 = tpu.matmul %34, %36, %cst_35 {dimension_numbers = #tpu.dot_dimension_numbers<[1], [0], [0], [1], [0, 0, 1, 1], [], []>} : vector<16x64xbf16>, vector<64x64xbf16>, vector<16x64xf32> -> vector<16x64xf32>
    %38 = arith.addf %31, %37 : vector<16x64xf32>
    %c1_36 = arith.constant 1 : index
    %c0_37 = arith.constant 0 : index
    %c0_38 = arith.constant 0 : index
    %39 = vector.load %arg11[%c1_36, %c0_37, %c0_38] : memref<4x10x64xf32, #tpu.memory_space<vmem>>, vector<2x8x64xf32>
    %40 = vector.shape_cast %39 : vector<2x8x64xf32> to vector<16x64xf32>
    %41 = arith.truncf %40 : vector<16x64xf32> to vector<16x64xbf16>
    %c1_39 = arith.constant 1 : index
    %c0_40 = arith.constant 0 : index
    %c0_41 = arith.constant 0 : index
    %c0_42 = arith.constant 0 : index
    %42 = vector.load %arg5[%c1_39, %c0_40, %c0_41, %c0_42] : memref<3x3x64x64xbf16, #tpu.memory_space<vmem>>, vector<1x1x64x64xbf16>
    %43 = vector.shape_cast %42 : vector<1x1x64x64xbf16> to vector<64x64xbf16>
    %cst_43 = arith.constant dense<0.000000e+00> : vector<16x64xf32>
    %44 = tpu.matmul %41, %43, %cst_43 {dimension_numbers = #tpu.dot_dimension_numbers<[1], [0], [0], [1], [0, 0, 1, 1], [], []>} : vector<16x64xbf16>, vector<64x64xbf16>, vector<16x64xf32> -> vector<16x64xf32>
    %45 = arith.addf %38, %44 : vector<16x64xf32>
    %c1_44 = arith.constant 1 : index
    %c1_45 = arith.constant 1 : index
    %c0_46 = arith.constant 0 : index
    %46 = vector.load %arg11[%c1_44, %c1_45, %c0_46] : memref<4x10x64xf32, #tpu.memory_space<vmem>>, vector<2x8x64xf32>
    %47 = vector.shape_cast %46 : vector<2x8x64xf32> to vector<16x64xf32>
    %48 = arith.truncf %47 : vector<16x64xf32> to vector<16x64xbf16>
    %c1_47 = arith.constant 1 : index
    %c1_48 = arith.constant 1 : index
    %c0_49 = arith.constant 0 : index
    %c0_50 = arith.constant 0 : index
    %49 = vector.load %arg5[%c1_47, %c1_48, %c0_49, %c0_50] : memref<3x3x64x64xbf16, #tpu.memory_space<vmem>>, vector<1x1x64x64xbf16>
    %50 = vector.shape_cast %49 : vector<1x1x64x64xbf16> to vector<64x64xbf16>
    %cst_51 = arith.constant dense<0.000000e+00> : vector<16x64xf32>
    %51 = tpu.matmul %48, %50, %cst_51 {dimension_numbers = #tpu.dot_dimension_numbers<[1], [0], [0], [1], [0, 0, 1, 1], [], []>} : vector<16x64xbf16>, vector<64x64xbf16>, vector<16x64xf32> -> vector<16x64xf32>
    %52 = arith.addf %45, %51 : vector<16x64xf32>
    %c1_52 = arith.constant 1 : index
    %c2_53 = arith.constant 2 : index
    %c0_54 = arith.constant 0 : index
    %53 = vector.load %arg11[%c1_52, %c2_53, %c0_54] : memref<4x10x64xf32, #tpu.memory_space<vmem>>, vector<2x8x64xf32>
    %54 = vector.shape_cast %53 : vector<2x8x64xf32> to vector<16x64xf32>
    %55 = arith.truncf %54 : vector<16x64xf32> to vector<16x64xbf16>
    %c1_55 = arith.constant 1 : index
    %c2_56 = arith.constant 2 : index
    %c0_57 = arith.constant 0 : index
    %c0_58 = arith.constant 0 : index
    %56 = vector.load %arg5[%c1_55, %c2_56, %c0_57, %c0_58] : memref<3x3x64x64xbf16, #tpu.memory_space<vmem>>, vector<1x1x64x64xbf16>
    %57 = vector.shape_cast %56 : vector<1x1x64x64xbf16> to vector<64x64xbf16>
    %cst_59 = arith.constant dense<0.000000e+00> : vector<16x64xf32>
    %58 = tpu.matmul %55, %57, %cst_59 {dimension_numbers = #tpu.dot_dimension_numbers<[1], [0], [0], [1], [0, 0, 1, 1], [], []>} : vector<16x64xbf16>, vector<64x64xbf16>, vector<16x64xf32> -> vector<16x64xf32>
    %59 = arith.addf %52, %58 : vector<16x64xf32>
    %c2_60 = arith.constant 2 : index
    %c0_61 = arith.constant 0 : index
    %c0_62 = arith.constant 0 : index
    %60 = vector.load %arg11[%c2_60, %c0_61, %c0_62] : memref<4x10x64xf32, #tpu.memory_space<vmem>>, vector<2x8x64xf32>
    %61 = vector.shape_cast %60 : vector<2x8x64xf32> to vector<16x64xf32>
    %62 = arith.truncf %61 : vector<16x64xf32> to vector<16x64xbf16>
    %c2_63 = arith.constant 2 : index
    %c0_64 = arith.constant 0 : index
    %c0_65 = arith.constant 0 : index
    %c0_66 = arith.constant 0 : index
    %63 = vector.load %arg5[%c2_63, %c0_64, %c0_65, %c0_66] : memref<3x3x64x64xbf16, #tpu.memory_space<vmem>>, vector<1x1x64x64xbf16>
    %64 = vector.shape_cast %63 : vector<1x1x64x64xbf16> to vector<64x64xbf16>
    %cst_67 = arith.constant dense<0.000000e+00> : vector<16x64xf32>
    %65 = tpu.matmul %62, %64, %cst_67 {dimension_numbers = #tpu.dot_dimension_numbers<[1], [0], [0], [1], [0, 0, 1, 1], [], []>} : vector<16x64xbf16>, vector<64x64xbf16>, vector<16x64xf32> -> vector<16x64xf32>
    %66 = arith.addf %59, %65 : vector<16x64xf32>
    %c2_68 = arith.constant 2 : index
    %c1_69 = arith.constant 1 : index
    %c0_70 = arith.constant 0 : index
    %67 = vector.load %arg11[%c2_68, %c1_69, %c0_70] : memref<4x10x64xf32, #tpu.memory_space<vmem>>, vector<2x8x64xf32>
    %68 = vector.shape_cast %67 : vector<2x8x64xf32> to vector<16x64xf32>
    %69 = arith.truncf %68 : vector<16x64xf32> to vector<16x64xbf16>
    %c2_71 = arith.constant 2 : index
    %c1_72 = arith.constant 1 : index
    %c0_73 = arith.constant 0 : index
    %c0_74 = arith.constant 0 : index
    %70 = vector.load %arg5[%c2_71, %c1_72, %c0_73, %c0_74] : memref<3x3x64x64xbf16, #tpu.memory_space<vmem>>, vector<1x1x64x64xbf16>
    %71 = vector.shape_cast %70 : vector<1x1x64x64xbf16> to vector<64x64xbf16>
    %cst_75 = arith.constant dense<0.000000e+00> : vector<16x64xf32>
    %72 = tpu.matmul %69, %71, %cst_75 {dimension_numbers = #tpu.dot_dimension_numbers<[1], [0], [0], [1], [0, 0, 1, 1], [], []>} : vector<16x64xbf16>, vector<64x64xbf16>, vector<16x64xf32> -> vector<16x64xf32>
    %73 = arith.addf %66, %72 : vector<16x64xf32>
    %c2_76 = arith.constant 2 : index
    %c2_77 = arith.constant 2 : index
    %c0_78 = arith.constant 0 : index
    %74 = vector.load %arg11[%c2_76, %c2_77, %c0_78] : memref<4x10x64xf32, #tpu.memory_space<vmem>>, vector<2x8x64xf32>
    %75 = vector.shape_cast %74 : vector<2x8x64xf32> to vector<16x64xf32>
    %76 = arith.truncf %75 : vector<16x64xf32> to vector<16x64xbf16>
    %c2_79 = arith.constant 2 : index
    %c2_80 = arith.constant 2 : index
    %c0_81 = arith.constant 0 : index
    %c0_82 = arith.constant 0 : index
    %77 = vector.load %arg5[%c2_79, %c2_80, %c0_81, %c0_82] : memref<3x3x64x64xbf16, #tpu.memory_space<vmem>>, vector<1x1x64x64xbf16>
    %78 = vector.shape_cast %77 : vector<1x1x64x64xbf16> to vector<64x64xbf16>
    %cst_83 = arith.constant dense<0.000000e+00> : vector<16x64xf32>
    %79 = tpu.matmul %76, %78, %cst_83 {dimension_numbers = #tpu.dot_dimension_numbers<[1], [0], [0], [1], [0, 0, 1, 1], [], []>} : vector<16x64xbf16>, vector<64x64xbf16>, vector<16x64xf32> -> vector<16x64xf32>
    %80 = arith.addf %73, %79 : vector<16x64xf32>
    %c0_84 = arith.constant 0 : index
    %c0_85 = arith.constant 0 : index
    %c0_86 = arith.constant 0 : index
    %c0_87 = arith.constant 0 : index
    %81 = vector.load %arg7[%c0_84, %c0_85, %c0_86, %c0_87] : memref<1x2x8x32xf32, #tpu.memory_space<vmem>>, vector<1x2x8x32xf32>
    %82 = vector.shape_cast %81 : vector<1x2x8x32xf32> to vector<2x8x32xf32>
    %83 = vector.shape_cast %82 : vector<2x8x32xf32> to vector<16x32xf32>
    %84 = arith.truncf %83 : vector<16x32xf32> to vector<16x32xbf16>
    %c0_88 = arith.constant 0 : index
    %c0_89 = arith.constant 0 : index
    %85 = vector.load %arg8[%c0_88, %c0_89] : memref<32x64xbf16, #tpu.memory_space<vmem>>, vector<32x64xbf16>
    %cst_90 = arith.constant dense<0.000000e+00> : vector<16x64xf32>
    %86 = tpu.matmul %84, %85, %cst_90 {dimension_numbers = #tpu.dot_dimension_numbers<[1], [0], [0], [1], [0, 0, 1, 1], [], []>} : vector<16x32xbf16>, vector<32x64xbf16>, vector<16x64xf32> -> vector<16x64xf32>
    %c0_91 = arith.constant 0 : index
    %c0_92 = arith.constant 0 : index
    %87 = vector.load %arg9[%c0_91, %c0_92] : memref<1x64xf32, #tpu.memory_space<vmem>>, vector<1x64xf32>
    %88 = vector.broadcast %87 : vector<1x64xf32> to vector<16x64xf32>
    %89 = arith.addf %86, %88 : vector<16x64xf32>
    %c0_93 = arith.constant 0 : index
    %c0_94 = arith.constant 0 : index
    %90 = vector.load %arg6[%c0_93, %c0_94] : memref<1x64xf32, #tpu.memory_space<vmem>>, vector<1x64xf32>
    %91 = vector.broadcast %90 : vector<1x64xf32> to vector<16x64xf32>
    %92 = arith.addf %80, %91 : vector<16x64xf32>
    %93 = arith.addf %92, %89 : vector<16x64xf32>
    %c0_95 = arith.constant 0 : index
    %c0_96 = arith.constant 0 : index
    %c0_97 = arith.constant 0 : index
    %94 = vector.load %arg10[%c0_95, %c0_96, %c0_97] : memref<1x16x64xf32, #tpu.memory_space<vmem>>, vector<1x16x64xf32>
    %95 = vector.shape_cast %94 : vector<1x16x64xf32> to vector<16x64xf32>
    %96 = vector.shape_cast %93 : vector<16x64xf32> to vector<1x16x64xf32>
    tpu.vector_store %arg10[%c0_95, %c0_96, %c0_97], %96 {strides = array<i32>} : memref<1x16x64xf32, #tpu.memory_space<vmem>>, vector<1x16x64xf32>,
    return
  }
  func.func @transform_0(%arg0: i32, %arg1: i32) -> (i32, i32, i32, i32) {
    %c0_i32 = arith.constant 0 : i32
    %c0_i32_0 = arith.constant 0 : i32
    %c0_i32_1 = arith.constant 0 : i32
    %c0_i32_2 = arith.constant 0 : i32
    return %arg0, %c0_i32, %c0_i32_0, %c0_i32_1 : i32, i32, i32, i32
  }
  func.func @transform_1(%arg0: i32, %arg1: i32) -> (i32, i32, i32) {
    %c0_i32 = arith.constant 0 : i32
    %c0_i32_0 = arith.constant 0 : i32
    %c0_i32_1 = arith.constant 0 : i32
    return %arg0, %c0_i32, %c0_i32_0 : i32, i32, i32
  }
  func.func @transform_2(%arg0: i32, %arg1: i32) -> (i32, i32, i32) {
    %c0_i32 = arith.constant 0 : i32
    %c0_i32_0 = arith.constant 0 : i32
    %c0_i32_1 = arith.constant 0 : i32
    return %arg0, %c0_i32, %c0_i32_0 : i32, i32, i32
  }
  func.func @transform_3(%arg0: i32, %arg1: i32) -> (i32, i32, i32, i32) {
    %c0_i32 = arith.constant 0 : i32
    %c0_i32_0 = arith.constant 0 : i32
    %c0_i32_1 = arith.constant 0 : i32
    %c0_i32_2 = arith.constant 0 : i32
    %c0_i32_3 = arith.constant 0 : i32
    return %c0_i32, %c0_i32_0, %c0_i32_1, %c0_i32_2 : i32, i32, i32, i32
  }
  func.func @transform_4(%arg0: i32, %arg1: i32) -> (i32, i32) {
    %c0_i32 = arith.constant 0 : i32
    %c0_i32_0 = arith.constant 0 : i32
    %c0_i32_1 = arith.constant 0 : i32
    return %c0_i32, %c0_i32_0 : i32, i32
  }
  func.func @transform_5(%arg0: i32, %arg1: i32) -> (i32, i32, i32, i32) {
    %c0_i32 = arith.constant 0 : i32
    %c0_i32_0 = arith.constant 0 : i32
    %c0_i32_1 = arith.constant 0 : i32
    return %arg0, %arg1, %c0_i32, %c0_i32_0 : i32, i32, i32, i32
  }
  func.func @transform_6(%arg0: i32, %arg1: i32) -> (i32, i32) {
    %c0_i32 = arith.constant 0 : i32
    %c0_i32_0 = arith.constant 0 : i32
    %c0_i32_1 = arith.constant 0 : i32
    return %c0_i32, %c0_i32_0 : i32, i32
  }
  func.func @transform_7(%arg0: i32, %arg1: i32) -> (i32, i32) {
    %c0_i32 = arith.constant 0 : i32
    %c0_i32_0 = arith.constant 0 : i32
    %c0_i32_1 = arith.constant 0 : i32
    return %c0_i32, %c0_i32_0 : i32, i32
  }
  func.func @transform_8(%arg0: i32, %arg1: i32) -> (i32, i32, i32) {
    %c0_i32 = arith.constant 0 : i32
    %c0_i32_0 = arith.constant 0 : i32
    return %arg0, %arg1, %c0_i32 : i32, i32, i32
  }
}

</mosaic_0001>

<llo_original>
// kernel: resblock_forward.5
$region0: #{resblock_forward.5}
  #allocation0 [shape = 'u32[]', space=smem, size = 0x4, offset = 0x4, fixed_abs, tag = 'smem constant byte address 0x4 - core index']
  #allocation1 [shape = 'u32[144,128]{1,0:T(1,128)}', space=vmem, size = 0x12000, scoped, tag = 'internal scratch']
  %s0 = inlined_call_operand.vmem [shape: f32[2,32], index: 0, kind: input, shape index: {}]
  %s1 = inlined_call_operand.vmem [shape: bf16[32,64], index: 1, kind: input, shape index: {}]
  %s2 = inlined_call_operand.hbm [shape: f32[1,64], index: 2, kind: input, shape index: {}]
  %s3 = inlined_call_operand.vmem [shape: f32[2,64], index: 3, kind: output, shape index: {}]
  %s4 = sld [smem:[#allocation0]]
  $region26: #{resblock_forward.5} parent=0
    _
  %s6 = ssub.s32 1, %s4
  %s7 = scalar_select 0, %s6, %s4
  $region1: #{resblock_forward.5} parent=0
    #allocation2 [shape = 'u8[512]{0}', space=vmem, size = 0x400, scoped, tag = 'input window, operand 2, single buffered']
    #allocation3 [shape = 's32[1]{0}', space=sflag, size = 0x4, scoped, tag = 'scoped memory for resblock_forward.5']
    %8 = vsyncpa [#allocation3], 0
    // Predicated region
    $region2: #{resblock_forward.5} parent=1 // pred_check
      _
    $region3: #{resblock_forward.5} parent=1 // pred_check_branch
      %10 = sbr.rel (0) target = $region5
    $region4: #{resblock_forward.5} parent=1 // pred_region
      _
    $region5: #{resblock_forward.5} parent=1 // pred_fallthru
      _
    // Predicated region
    $region6: #{resblock_forward.5} parent=1 // pred_check
      _
    $region7: #{resblock_forward.5} parent=1 // pred_check_branch
      %12 = sbr.rel (0) target = $region9
    $region8: #{resblock_forward.5} parent=1 // pred_region
      _
    $region9: #{resblock_forward.5} parent=1 // pred_fallthru
      _
    // Predicated region
    $region10: #{resblock_forward.5} parent=1 // pred_check
      _
    $region11: #{resblock_forward.5} parent=1 // pred_check_branch
      %14 = sbr.rel (0) target = $region13
    $region12: #{resblock_forward.5} parent=1 // pred_region
      %s16 = ssub.s32 16, 16
      %17 = vsyncadd [#allocation3], %s16
      %s19 = sshll.u32 [#allocation2], 4
      %s20 = int_to_ptr.vmem [resolvable:$true] %s19
      %22 = dma.hbm_to_vmem [thread:$0]  %s2, 16, %s20, [#allocation3]
    $region13: #{resblock_forward.5} parent=1 // pred_fallthru
      _
    // Predicated region
    $region14: #{resblock_forward.5} parent=1 // pred_check
      _
    $region15: #{resblock_forward.5} parent=1 // pred_check_branch
      %24 = sbr.rel (0) target = $region17
    $region16: #{resblock_forward.5} parent=1 // pred_region
      %25 = dma.done [#allocation3], 16
    $region17: #{resblock_forward.5} parent=1 // pred_fallthru
      _
    %v27 = vld [vmem:[%s0] sm:$0x3]
    %v28 = vxor.u32 %v27, 2147483648
    %v29 = vmul.f32 %v28, 1.442695
    %v30 = vpow.pop %v29
    %v31 = vadd.f32 %v30, 1.0
    %v32 = vrcp.pop %v31
    %v33 = vmul.f32 1.0, %v32
    %v34 = vmul.f32 %v27, %v33
    %v35 = vpack.c.bf16 %v34, %v34
    %v36 = vld [vmem:[%s1] sm:$0xf]
    %v37 = vld [vmem:[%s1 + $0x4] sm:$0xf]
    %v38 = vld [vmem:[%s1 + $0x8] sm:$0xf]
    %v39 = vld [vmem:[%s1 + $0xc] sm:$0xf]
    %v40 = vld [vmem:[#allocation2] sm:$0x1]
    %v42 = vlaneseq
    %v43 = vshrl.u32 %v42, 7
    %v44 = vsub.s32 0, %v43
    %v45 = vrot.slane %v40, %v44
    %v51 = vunpack.c.l.b16 %v36
    %v52 = vunpack.c.l.b16 %v37
    %v53 = vunpack.c.l.b16 %v38
    %v54 = vunpack.c.l.b16 %v39
    %v55 = vpack.c.b16 %v52, %v51
    %v56 = vpack.c.b16 %v54, %v53
    %vm59 = vcmask 261120
    %v61 = vsel %vm59, %v35, 0
    %63 = vmatprep.subr.bf16.mxu0 0
    %64 = vmatpush1.bf16.msra.mxu0 0
    %65 = vmatprep.subr.bf16.mxu0 0
    %66 = vmatpush1.bf16.msra.mxu0 0
    %67 = vmatprep.subr.bf16.mxu0 0
    %68 = vmatpush1.bf16.msra.mxu0 0
    %69 = vmatprep.subr.bf16.mxu0 0
    %70 = vmatpush1.bf16.msra.mxu0 0
    %71 = vmatprep.subr.bf16.mxu0 0
    %72 = vmatpush1.bf16.msra.mxu0 0
    %73 = vmatprep.subr.bf16.mxu0 0
    %74 = vmatpush1.bf16.msra.mxu0 0
    %75 = vmatprep.subr.bf16.mxu0 0
    %76 = vmatpush1.bf16.msra.mxu0 %v56
    %77 = vmatprep.subr.bf16.mxu0 0
    %78 = vmatpush1.bf16.msra.mxu0 %v55
    %79 = vmatprep.subr.bf16.mxu0 0
    %80 = vmatpush2.bf16.msra.mxu0 0
    %81 = vmatprep.subr.bf16.mxu0 0
    %82 = vmatpush2.bf16.msra.mxu0 0
    %83 = vmatprep.subr.bf16.mxu0 0
    %84 = vmatpush2.bf16.msra.mxu0 0
    %85 = vmatprep.subr.bf16.mxu0 0
    %86 = vmatpush2.bf16.msra.mxu0 0
    %87 = vmatprep.subr.bf16.mxu0 0
    %88 = vmatpush2.bf16.msra.mxu0 0
    %89 = vmatprep.subr.bf16.mxu0 0
    %90 = vmatpush2.bf16.msra.mxu0 0
    %91 = vmatprep.subr.bf16.mxu0 0
    %92 = vmatpush2.bf16.msra.mxu0 0
    %93 = vmatprep.subr.bf16.mxu0 0
    %94 = vmatpush2.bf16.msra.mxu0 0
    %95 = vmatprep.mubr.bf16.mxu0 0
    %96 = vmatmul.mubr.bf16.gmra.mxu0 %v61
    %v97 = vpop.f32.mrf.mxu0
    %v98 = vadd.f32 %v45, %v97
    %v99 = vpop.f32.mrf.mxu0
    %v100 = vpop.f32.mrf.mxu0
    %v101 = vpop.f32.mrf.mxu0
    %102 = vdwg.mxu0
    %vm103 = vcmask 517120
    %104 = vst.msk [vmem:[%s3] sm:$0x3] %vm103, %v98
    // Predicated region
    $region18: #{resblock_forward.5} parent=1 // pred_check
      _
    $region19: #{resblock_forward.5} parent=1 // pred_check_branch
      %106 = sbr.rel (0) target = $region21
    $region20: #{resblock_forward.5} parent=1 // pred_region
      _
    $region21: #{resblock_forward.5} parent=1 // pred_fallthru
      _
    // Predicated region
    $region22: #{resblock_forward.5} parent=1 // pred_check
      _
    $region23: #{resblock_forward.5} parent=1 // pred_check_branch
      %108 = sbr.rel (0) target = $region25
    $region24: #{resblock_forward.5} parent=1 // pred_region
      _
    $region25: #{resblock_forward.5} parent=1 // pred_fallthru
      _
    %109 = vsyncpa [#allocation3], 1

// kernel: resblock_forward.6
$region0: #{resblock_forward.6}
  #allocation0 [shape = 'u32[]', space=smem, size = 0x4, offset = 0x4, fixed_abs, tag = 'smem constant byte address 0x4 - core index']
  #allocation1 [shape = 'u32[144,128]{1,0:T(1,128)}', space=vmem, size = 0x12000, scoped, tag = 'internal scratch']
  %s0 = inlined_call_operand.hbm [shape: f32[2,64,32], index: 0, kind: input, shape index: {}]
  %s1 = inlined_call_operand.vmem [shape: f32[2,1,32], index: 1, kind: output, shape index: {0}]
  %s2 = inlined_call_operand.vmem [shape: f32[2,1,32], index: 2, kind: output, shape index: {1}]
  %3 = xla_tuple %s1, %s2
  %s4 = sld [smem:[#allocation0]]
  $region53: #{resblock_forward.6} parent=0
    _
  %s6 = ssub.s32 1, %s4
  %s7 = scalar_select 0, %s6, %s4
  $region1: #{resblock_forward.6} parent=0
    #allocation2 [shape = 'u8[16384]{0}', space=vmem, size = 0x4000, scoped, tag = 'input window, operand 0']
    #allocation3 [shape = 's32[2]{0}', space=sflag, size = 0x8, scoped, tag = 'scoped memory for resblock_forward.6']
    %8 = vsyncpa [#allocation3], 0
    %s9 = scalar_lea.sflag [#allocation3], 1
    %10 = vsyncpa %s9, 0
    loop: start=0, step=1, limit=10
    $region2: #{resblock_forward.6} parent=1 // loop_pre_header
      _
    $region3: #{resblock_forward.6} parent=1 // loop_header
      %s12 = sphi 0, %s16
      %p13 = scmp.ge.s32.totalorder %s12, 10
      %s19 = sphi 0, %s31
      %s20 = sphi 0, %s27
      %s21 = sphi 0, %s19
      %s22 = sphi 0, %s20
      %s23 = sphi 0, %s21
      %s24 = sphi 0, %s22
      %s36 = sphi 0, %s38
      %s39 = sphi 0, %s36
      %s40 = sphi 0, %s39
      %s56 = sphi 0, %s40
      %s62 = sphi 0, %s64
      %s65 = sphi 0, %s62
      %s66 = sphi 0, %s65
      %s82 = sphi 0, %s66
      %s88 = sphi 0, %s90
      %s91 = sphi 0, %s88
      %s92 = sphi 0, %s91
      %s108 = sphi 0, %s92
    $region4: #{resblock_forward.6} parent=1 // loop_header_branch
      %15 = sbr.rel (%p13) target = $region8
    $region5: #{resblock_forward.6} parent=1 // loop_body
      %s17 = ssub.s32 %s12, 1
      %s18 = ssub.s32 %s12, 2
      %s25 = sadd.s32 1, %s20
      %p26 = scmp.ge.s32.totalorder %s25, 4
      %s27 = scalar_select %p26, 0, %s25
      %s28 = sadd.s32 1, %s19
      %s29 = scalar_select %p26, %s28, %s19
      %p30 = scmp.ge.s32.totalorder %s29, 2
      %s31 = scalar_select %p30, 0, %s29
      %s32 = ssub.s32 %s19, %s31
      %s33 = ssub.s32 %s20, %s27
      %s34 = sor.u32 %s32, %s33
      %p35 = scmp.eq.s32.totalorder %s34, 0
      %s37 = sadd.s32 %s36, 1
      %s38 = scalar_select %p35, %s36, %s37
      %p41 = pneg %p35
      %p42 = scmp.eq.s32.totalorder %s12, 7
      %p43 = por %p41, %p42
      %p44 = scmp.ne.s32.totalorder %s36, %s39
      %p45 = scmp.eq.s32.totalorder %s12, 0
      %p46 = por %p44, %p45
      %p47 = scmp.ne.s32.totalorder %s36, %s39
      %p48 = scmp.eq.s32.totalorder %s17, 7
      %p49 = por %p47, %p48
      %p50 = scmp.ne.s32.totalorder %s39, %s40
      %p51 = scmp.eq.s32.totalorder %s17, 0
      %p52 = por %p50, %p51
      %p53 = scmp.ne.s32.totalorder %s39, %s40
      %p54 = scmp.eq.s32.totalorder %s18, 7
      %p55 = por %p53, %p54
      %p57 = scmp.ne.s32.totalorder %s40, %s56
      %p58 = scmp.eq.s32.totalorder %s18, 0
      %p59 = por %p57, %p58
      %s60 = ssub.s32 %s19, %s31
      %p61 = scmp.eq.s32.totalorder %s60, 0
      %s63 = sadd.s32 %s62, 1
      %s64 = scalar_select %p61, %s62, %s63
      %p67 = pneg %p61
      %p68 = scmp.eq.s32.totalorder %s12, 7
      %p69 = por %p67, %p68
      %p70 = scmp.ne.s32.totalorder %s62, %s65
      %p71 = scmp.eq.s32.totalorder %s12, 0
      %p72 = por %p70, %p71
      %p73 = scmp.ne.s32.totalorder %s62, %s65
      %p74 = scmp.eq.s32.totalorder %s17, 7
      %p75 = por %p73, %p74
      %p76 = scmp.ne.s32.totalorder %s65, %s66
      %p77 = scmp.eq.s32.totalorder %s17, 0
      %p78 = por %p76, %p77
      %p79 = scmp.ne.s32.totalorder %s65, %s66
      %p80 = scmp.eq.s32.totalorder %s18, 7
      %p81 = por %p79, %p80
      %p83 = scmp.ne.s32.totalorder %s66, %s82
      %p84 = scmp.eq.s32.totalorder %s18, 0
      %p85 = por %p83, %p84
      %s86 = ssub.s32 %s19, %s31
      %p87 = scmp.eq.s32.totalorder %s86, 0
      %s89 = sadd.s32 %s88, 1
      %s90 = scalar_select %p87, %s88, %s89
      %p93 = pneg %p87
      %p94 = scmp.eq.s32.totalorder %s12, 7
      %p95 = por %p93, %p94
      %p96 = scmp.ne.s32.totalorder %s88, %s91
      %p97 = scmp.eq.s32.totalorder %s12, 0
      %p98 = por %p96, %p97
      %p99 = scmp.ne.s32.totalorder %s88, %s91
      %p100 = scmp.eq.s32.totalorder %s17, 7
      %p101 = por %p99, %p100
      %p102 = scmp.ne.s32.totalorder %s91, %s92
      %p103 = scmp.eq.s32.totalorder %s17, 0
      %p104 = por %p102, %p103
      %p105 = scmp.ne.s32.totalorder %s91, %s92
      %p106 = scmp.eq.s32.totalorder %s18, 7
      %p107 = por %p105, %p106
      %p109 = scmp.ne.s32.totalorder %s92, %s108
      %p110 = scmp.eq.s32.totalorder %s18, 0
      %p111 = por %p109, %p110
      %p112 = scmp.le.s32.totalorder 1, %s12
      %p113 = scmp.lt.s32.totalorder %s12, 9
      %p114 = pnand %p112, %p113
      %p115 = pneg %p114
      // Predicated region
      $region9: #{resblock_forward.6} parent=5 // pred_check
        _
      $region10: #{resblock_forward.6} parent=5 // pred_check_branch
        %117 = sbr.rel (%p114) target = $region12
      $region11: #{resblock_forward.6} parent=5 // pred_region
        %s118 = ssub.s32 %s12, 1
      $region12: #{resblock_forward.6} parent=5 // pred_fallthru
        _
      %p119 = scmp.lt.s32.totalorder %s12, 8
      // Predicated region
      $region13: #{resblock_forward.6} parent=5 // pred_check
        %p120 = pneg %p119
      $region14: #{resblock_forward.6} parent=5 // pred_check_branch
        %122 = sbr.rel (%p120) target = $region16
      $region15: #{resblock_forward.6} parent=5 // pred_region
        // Predicated region
        $region17: #{resblock_forward.6} parent=15 // pred_check
          %p123 = pneg %p46
        $region18: #{resblock_forward.6} parent=15 // pred_check_branch
          %125 = sbr.rel (%p123) target = $region20
        $region19: #{resblock_forward.6} parent=15 // pred_region
          %s126 = sand.u32 %s36, 1
          %s127 = scalar_lea.sflag [#allocation3], %s126
          %s128 = sand.u32 %s36, 1
          %s129 = smul.addr %s128, 16
          %s130 = scalar_lea.vmem [#allocation2], %s129
          %s131 = smul.u32 2, %s20
          %s133 = ssub.s32 256, 256
          %134 = vsyncadd %s127, %s133
          %s135 = smul.addr %s19, 8
          %s136 = sadd.s32 %s131, %s135
          %s137 = smul.addr %s136, 128
          %s138 = scalar_lea.hbm %s0, %s137
          %s139 = sshll.u32 %s130, 4
          %s140 = int_to_ptr.vmem [resolvable:$true] %s139
          %145 = dma.hbm_to_vmem [thread:$0]  %s138, 256, %s140, %s127, 128, 128, 8
        $region20: #{resblock_forward.6} parent=15 // pred_fallthru
          _
      $region16: #{resblock_forward.6} parent=5 // pred_fallthru
        _
      %p146 = scmp.le.s32.totalorder 1, %s12
      %p147 = scmp.lt.s32.totalorder %s12, 9
      %p148 = pnand %p146, %p147
      %p149 = pneg %p148
      // Predicated region
      $region21: #{resblock_forward.6} parent=5 // pred_check
        _
      $region22: #{resblock_forward.6} parent=5 // pred_check_branch
        %151 = sbr.rel (%p148) target = $region24
      $region23: #{resblock_forward.6} parent=5 // pred_region
        %s152 = ssub.s32 %s12, 1
        %s153 = sand.u32 %s39, 1
        %s154 = scalar_lea.sflag [#allocation3], %s153
        %s155 = sand.u32 %s39, 1
        %s156 = smul.addr %s155, 16
        %s157 = scalar_lea.vmem [#allocation2], %s156
        // Predicated region
        $region25: #{resblock_forward.6} parent=23 // pred_check
          %p158 = pneg %p52
        $region26: #{resblock_forward.6} parent=23 // pred_check_branch
          %160 = sbr.rel (%p158) target = $region28
        $region27: #{resblock_forward.6} parent=23 // pred_region
          %161 = dma.done %s154, 256
        $region28: #{resblock_forward.6} parent=23 // pred_fallthru
          _
        %s162 = sand.u32 %s39, 1
        %s163 = scalar_lea.sflag [#allocation3], %s162
        %s164 = sand.u32 %s39, 1
        %s165 = smul.addr %s164, 16
        %s166 = scalar_lea.vmem [#allocation2], %s165
        %p167 = pneg %p52
        %p168 = pneg %p49
        %p169 = pneg %p78
        %p170 = pneg %p75
        %p171 = scmp.lt.s32.totalorder %s21, 1
        %s172 = scalar_select %p171, %s21, 1
        %s173 = scalar_lea.vmem %s1, %s172
        %p174 = pneg %p104
        %p175 = pneg %p101
        %p176 = scmp.lt.s32.totalorder %s21, 1
        %s177 = scalar_select %p176, %s21, 1
        %s178 = scalar_lea.vmem %s2, %s177
        %s179 = smul.u32 2, %s22
        %p180 = scmp.lt.s32.totalorder %s21, 1
        %s181 = scalar_select %p180, %s21, 1
        %s182 = scalar_lea.vmem %s1, %s181
        %p183 = scmp.lt.s32.totalorder %s21, 1
        %s184 = scalar_select %p183, %s21, 1
        %s185 = scalar_lea.vmem %s2, %s184
        %p186 = scmp.eq.s32.totalorder %s22, 0
        // Predicated region
        $region29: #{resblock_forward.6} parent=23 // pred_check
          %p187 = pneg %p186
        $region30: #{resblock_forward.6} parent=23 // pred_check_branch
          %189 = sbr.rel (%p187) target = $region32
        $region31: #{resblock_forward.6} parent=23 // pred_region
          %vm190 = vcmask 253952
          %191 = vst.msk [vmem:[%s182] sm:$0x1] %vm190, 0.0
          %192 = vst.msk [vmem:[%s185] sm:$0x1] %vm190, 0.0
        $region32: #{resblock_forward.6} parent=23 // pred_fallthru
          _
        %v193 = vld [vmem:[%s157] sm:$0xff]
        %v194 = vld [vmem:[%s157 + $0x8] sm:$0xff]
        %v195 = vld [vmem:[%s182] sm:$0x1]
        %vm196 = vcmask 261120
        %v197 = vsel %vm196, %v193, 0.0
        %v198 = vsel %vm196, %v194, 0.0
        %v199 = vadd.f32 %v197, %v198
        %v200 = vrot.slane %v199, 4
        %v201 = vadd.f32 %v199, %v200
        %v202 = vrot.slane %v201, 2
        %v203 = vadd.f32 %v201, %v202
        %v204 = vrot.slane %v203, 1
        %v205 = vadd.f32 %v203, %v204
        %v206 = vadd.f32 %v195, %v205
        %vm207 = vcmask 253952
        %208 = vst.msk [vmem:[%s182] sm:$0x1] %vm207, %v206
        %v209 = vld [vmem:[%s185] sm:$0x1]
        %v210 = vmul.f32 %v193, %v193
        %v211 = vmul.f32 %v194, %v194
        %v212 = vsel %vm196, %v210, 0.0
        %v213 = vsel %vm196, %v211, 0.0
        %v214 = vadd.f32 %v212, %v213
        %v215 = vrot.slane %v214, 4
        %v216 = vadd.f32 %v214, %v215
        %v217 = vrot.slane %v216, 2
        %v218 = vadd.f32 %v216, %v217
        %v219 = vrot.slane %v218, 1
        %v220 = vadd.f32 %v218, %v219
        %v221 = vadd.f32 %v209, %v220
        %222 = vst.msk [vmem:[%s185] sm:$0x1] %vm207, %v221
        %p223 = scmp.lt.s32.totalorder %s21, 1
        %s224 = scalar_select %p223, %s21, 1
        %s225 = scalar_lea.vmem %s1, %s224
        %p226 = scmp.lt.s32.totalorder %s21, 1
        %s227 = scalar_select %p226, %s21, 1
        %s228 = scalar_lea.vmem %s2, %s227
        // Predicated region
        $region33: #{resblock_forward.6} parent=23 // pred_check
          %p229 = pneg %p75
        $region34: #{resblock_forward.6} parent=23 // pred_check_branch
          %231 = sbr.rel (%p229) target = $region36
        $region35: #{resblock_forward.6} parent=23 // pred_region
          _
        $region36: #{resblock_forward.6} parent=23 // pred_fallthru
          _
        // Predicated region
        $region37: #{resblock_forward.6} parent=23 // pred_check
          %p232 = pneg %p101
        $region38: #{resblock_forward.6} parent=23 // pred_check_branch
          %234 = sbr.rel (%p232) target = $region40
        $region39: #{resblock_forward.6} parent=23 // pred_region
          _
        $region40: #{resblock_forward.6} parent=23 // pred_fallthru
          _
      $region24: #{resblock_forward.6} parent=5 // pred_fallthru
        _
      %p235 = scmp.le.s32.totalorder 2, %s12
      // Predicated region
      $region41: #{resblock_forward.6} parent=5 // pred_check
        %p236 = pneg %p235
      $region42: #{resblock_forward.6} parent=5 // pred_check_branch
        %238 = sbr.rel (%p236) target = $region44
      $region43: #{resblock_forward.6} parent=5 // pred_region
        %s239 = ssub.s32 %s12, 2
        // Predicated region
        $region45: #{resblock_forward.6} parent=43 // pred_check
          %p240 = pneg %p81
        $region46: #{resblock_forward.6} parent=43 // pred_check_branch
          %242 = sbr.rel (%p240) target = $region48
        $region47: #{resblock_forward.6} parent=43 // pred_region
          %p243 = scmp.lt.s32.totalorder %s23, 1
          %s244 = scalar_select %p243, %s23, 1
          %s245 = scalar_lea.vmem %s1, %s244
        $region48: #{resblock_forward.6} parent=43 // pred_fallthru
          _
        // Predicated region
        $region49: #{resblock_forward.6} parent=43 // pred_check
          %p246 = pneg %p107
        $region50: #{resblock_forward.6} parent=43 // pred_check_branch
          %248 = sbr.rel (%p246) target = $region52
        $region51: #{resblock_forward.6} parent=43 // pred_region
          %p249 = scmp.lt.s32.totalorder %s23, 1
          %s250 = scalar_select %p249, %s23, 1
          %s251 = scalar_lea.vmem %s2, %s250
        $region52: #{resblock_forward.6} parent=43 // pred_fallthru
          _
      $region44: #{resblock_forward.6} parent=5 // pred_fallthru
        _
    $region6: #{resblock_forward.6} parent=1 // loop_footer
      %s16 = sadd.s32 1, %s12
    $region7: #{resblock_forward.6} parent=1 // loop_footer_branch
      %11 = sbr.rel target = $region3
    $region8: #{resblock_forward.6} parent=1 // loop_exit
      _
    %252 = vsyncpa [#allocation3], 1
    %s253 = scalar_lea.sflag [#allocation3], 1
    %254 = vsyncpa %s253, 1

// kernel: resblock_forward.8
$region0: #{resblock_forward.8}
  #allocation0 [shape = 'u32[]', space=smem, size = 0x4, offset = 0x4, fixed_abs, tag = 'smem constant byte address 0x4 - core index']
  #allocation1 [shape = 'u32[144,128]{1,0:T(1,128)}', space=vmem, size = 0x12000, scoped, tag = 'internal scratch']
  %s0 = inlined_call_operand.vmem [shape: bf16[2,64,64], index: 0, kind: input, shape index: {}]
  %s1 = inlined_call_operand.vmem [shape: f32[2,1,64], index: 1, kind: output, shape index: {0}]
  %s2 = inlined_call_operand.vmem [shape: f32[2,1,64], index: 2, kind: output, shape index: {1}]
  %3 = xla_tuple %s1, %s2
  %s4 = sld [smem:[#allocation0]]
  $region49: #{resblock_forward.8} parent=0
    _
  %s6 = ssub.s32 1, %s4
  %s7 = scalar_select 0, %s6, %s4
  loop: start=0, step=1, limit=10
  $region2: #{resblock_forward.8} parent=0 // loop_pre_header
    _
  $region3: #{resblock_forward.8} parent=0 // loop_header
    %s9 = sphi 0, %s13
    %p10 = scmp.ge.s32.totalorder %s9, 10
    %s16 = sphi 0, %s28
    %s17 = sphi 0, %s24
    %s18 = sphi 0, %s16
    %s19 = sphi 0, %s17
    %s20 = sphi 0, %s18
    %s21 = sphi 0, %s19
    %s33 = sphi 0, %s35
    %s36 = sphi 0, %s33
    %s37 = sphi 0, %s36
    %s53 = sphi 0, %s37
    %s59 = sphi 0, %s61
    %s62 = sphi 0, %s59
    %s63 = sphi 0, %s62
    %s79 = sphi 0, %s63
    %s85 = sphi 0, %s87
    %s88 = sphi 0, %s85
    %s89 = sphi 0, %s88
    %s105 = sphi 0, %s89
  $region4: #{resblock_forward.8} parent=0 // loop_header_branch
    %12 = sbr.rel (%p10) target = $region8
  $region5: #{resblock_forward.8} parent=0 // loop_body
    %s14 = ssub.s32 %s9, 1
    %s15 = ssub.s32 %s9, 2
    %s22 = sadd.s32 1, %s17
    %p23 = scmp.ge.s32.totalorder %s22, 4
    %s24 = scalar_select %p23, 0, %s22
    %s25 = sadd.s32 1, %s16
    %s26 = scalar_select %p23, %s25, %s16
    %p27 = scmp.ge.s32.totalorder %s26, 2
    %s28 = scalar_select %p27, 0, %s26
    %s29 = ssub.s32 %s16, %s28
    %s30 = ssub.s32 %s17, %s24
    %s31 = sor.u32 %s29, %s30
    %p32 = scmp.eq.s32.totalorder %s31, 0
    %s34 = sadd.s32 %s33, 1
    %s35 = scalar_select %p32, %s33, %s34
    %p38 = pneg %p32
    %p39 = scmp.eq.s32.totalorder %s9, 7
    %p40 = por %p38, %p39
    %p41 = scmp.ne.s32.totalorder %s33, %s36
    %p42 = scmp.eq.s32.totalorder %s9, 0
    %p43 = por %p41, %p42
    %p44 = scmp.ne.s32.totalorder %s33, %s36
    %p45 = scmp.eq.s32.totalorder %s14, 7
    %p46 = por %p44, %p45
    %p47 = scmp.ne.s32.totalorder %s36, %s37
    %p48 = scmp.eq.s32.totalorder %s14, 0
    %p49 = por %p47, %p48
    %p50 = scmp.ne.s32.totalorder %s36, %s37
    %p51 = scmp.eq.s32.totalorder %s15, 7
    %p52 = por %p50, %p51
    %p54 = scmp.ne.s32.totalorder %s37, %s53
    %p55 = scmp.eq.s32.totalorder %s15, 0
    %p56 = por %p54, %p55
    %s57 = ssub.s32 %s16, %s28
    %p58 = scmp.eq.s32.totalorder %s57, 0
    %s60 = sadd.s32 %s59, 1
    %s61 = scalar_select %p58, %s59, %s60
    %p64 = pneg %p58
    %p65 = scmp.eq.s32.totalorder %s9, 7
    %p66 = por %p64, %p65
    %p67 = scmp.ne.s32.totalorder %s59, %s62
    %p68 = scmp.eq.s32.totalorder %s9, 0
    %p69 = por %p67, %p68
    %p70 = scmp.ne.s32.totalorder %s59, %s62
    %p71 = scmp.eq.s32.totalorder %s14, 7
    %p72 = por %p70, %p71
    %p73 = scmp.ne.s32.totalorder %s62, %s63
    %p74 = scmp.eq.s32.totalorder %s14, 0
    %p75 = por %p73, %p74
    %p76 = scmp.ne.s32.totalorder %s62, %s63
    %p77 = scmp.eq.s32.totalorder %s15, 7
    %p78 = por %p76, %p77
    %p80 = scmp.ne.s32.totalorder %s63, %s79
    %p81 = scmp.eq.s32.totalorder %s15, 0
    %p82 = por %p80, %p81
    %s83 = ssub.s32 %s16, %s28
    %p84 = scmp.eq.s32.totalorder %s83, 0
    %s86 = sadd.s32 %s85, 1
    %s87 = scalar_select %p84, %s85, %s86
    %p90 = pneg %p84
    %p91 = scmp.eq.s32.totalorder %s9, 7
    %p92 = por %p90, %p91
    %p93 = scmp.ne.s32.totalorder %s85, %s88
    %p94 = scmp.eq.s32.totalorder %s9, 0
    %p95 = por %p93, %p94
    %p96 = scmp.ne.s32.totalorder %s85, %s88
    %p97 = scmp.eq.s32.totalorder %s14, 7
    %p98 = por %p96, %p97
    %p99 = scmp.ne.s32.totalorder %s88, %s89
    %p100 = scmp.eq.s32.totalorder %s14, 0
    %p101 = por %p99, %p100
    %p102 = scmp.ne.s32.totalorder %s88, %s89
    %p103 = scmp.eq.s32.totalorder %s15, 7
    %p104 = por %p102, %p103
    %p106 = scmp.ne.s32.totalorder %s89, %s105
    %p107 = scmp.eq.s32.totalorder %s15, 0
    %p108 = por %p106, %p107
    %p109 = scmp.le.s32.totalorder 1, %s9
    %p110 = scmp.lt.s32.totalorder %s9, 9
    %p111 = pnand %p109, %p110
    %p112 = pneg %p111
    // Predicated region
    $region9: #{resblock_forward.8} parent=5 // pred_check
      _
    $region10: #{resblock_forward.8} parent=5 // pred_check_branch
      %114 = sbr.rel (%p111) target = $region12
    $region11: #{resblock_forward.8} parent=5 // pred_region
      %s115 = ssub.s32 %s9, 1
    $region12: #{resblock_forward.8} parent=5 // pred_fallthru
      _
    %p116 = scmp.lt.s32.totalorder %s9, 8
    // Predicated region
    $region13: #{resblock_forward.8} parent=5 // pred_check
      %p117 = pneg %p116
    $region14: #{resblock_forward.8} parent=5 // pred_check_branch
      %119 = sbr.rel (%p117) target = $region16
    $region15: #{resblock_forward.8} parent=5 // pred_region
      // Predicated region
      $region17: #{resblock_forward.8} parent=15 // pred_check
        %p120 = pneg %p43
      $region18: #{resblock_forward.8} parent=15 // pred_check_branch
        %122 = sbr.rel (%p120) target = $region20
      $region19: #{resblock_forward.8} parent=15 // pred_region
        %s123 = smul.u32 2, %s17
        %p124 = scmp.lt.s32.totalorder %s16, 1
        %s125 = scalar_select %p124, %s16, 1
        %p126 = scmp.lt.s32.totalorder %s123, 7
        %s127 = scalar_select %p126, %s123, 7
        %s128 = smul.addr %s125, 8
        %s129 = sadd.s32 %s127, %s128
        %s130 = smul.addr %s129, 4
        %s131 = scalar_lea.vmem %s0, %s130
        %s132 = smul.u32 2, %s17
      $region20: #{resblock_forward.8} parent=15 // pred_fallthru
        _
    $region16: #{resblock_forward.8} parent=5 // pred_fallthru
      _
    %p133 = scmp.le.s32.totalorder 1, %s9
    %p134 = scmp.lt.s32.totalorder %s9, 9
    %p135 = pnand %p133, %p134
    %p136 = pneg %p135
    // Predicated region
    $region21: #{resblock_forward.8} parent=5 // pred_check
      _
    $region22: #{resblock_forward.8} parent=5 // pred_check_branch
      %138 = sbr.rel (%p135) target = $region24
    $region23: #{resblock_forward.8} parent=5 // pred_region
      %s139 = ssub.s32 %s9, 1
      %s140 = smul.u32 2, %s19
      %p141 = scmp.lt.s32.totalorder %s18, 1
      %s142 = scalar_select %p141, %s18, 1
      %p143 = scmp.lt.s32.totalorder %s140, 7
      %s144 = scalar_select %p143, %s140, 7
      %s145 = smul.addr %s142, 8
      %s146 = sadd.s32 %s144, %s145
      %s147 = smul.addr %s146, 4
      %s148 = scalar_lea.vmem %s0, %s147
      %p149 = pneg %p49
      %p150 = pneg %p46
      %p151 = pneg %p75
      %p152 = pneg %p72
      %p153 = scmp.lt.s32.totalorder %s18, 1
      %s154 = scalar_select %p153, %s18, 1
      %s155 = scalar_lea.vmem %s1, %s154
      %p156 = pneg %p101
      %p157 = pneg %p98
      %p158 = scmp.lt.s32.totalorder %s18, 1
      %s159 = scalar_select %p158, %s18, 1
      %s160 = scalar_lea.vmem %s2, %s159
      %s161 = smul.u32 2, %s19
      %p162 = scmp.lt.s32.totalorder %s18, 1
      %s163 = scalar_select %p162, %s18, 1
      %p164 = scmp.lt.s32.totalorder %s161, 7
      %s165 = scalar_select %p164, %s161, 7
      %s166 = smul.addr %s163, 8
      %s167 = sadd.s32 %s165, %s166
      %s168 = smul.addr %s167, 4
      %s169 = scalar_lea.vmem %s0, %s168
      %s170 = smul.u32 2, %s19
      %p171 = scmp.lt.s32.totalorder %s18, 1
      %s172 = scalar_select %p171, %s18, 1
      %s173 = scalar_lea.vmem %s1, %s172
      %p174 = scmp.lt.s32.totalorder %s18, 1
      %s175 = scalar_select %p174, %s18, 1
      %s176 = scalar_lea.vmem %s2, %s175
      %p177 = scmp.eq.s32.totalorder %s19, 0
      // Predicated region
      $region25: #{resblock_forward.8} parent=23 // pred_check
        %p178 = pneg %p177
      $region26: #{resblock_forward.8} parent=23 // pred_check_branch
        %180 = sbr.rel (%p178) target = $region28
      $region27: #{resblock_forward.8} parent=23 // pred_region
        %vm181 = vcmask 516096
        %182 = vst.msk [vmem:[%s173] sm:$0x1] %vm181, 0.0
        %183 = vst.msk [vmem:[%s176] sm:$0x1] %vm181, 0.0
      $region28: #{resblock_forward.8} parent=23 // pred_fallthru
        _
      %v184 = vld [vmem:[%s169] sm:$0xf]
      %v185 = vld [vmem:[%s169 + $0x4] sm:$0xf]
      %v186 = vunpack.c.l.bf16 %v184
      %v187 = vunpack.c.l.bf16 %v185
      %v188 = vld [vmem:[%s173] sm:$0x1]
      %vm189 = vcmask 523264
      %v190 = vsel %vm189, %v186, 0.0
      %v191 = vsel %vm189, %v187, 0.0
      %v192 = vadd.f32 %v190, %v191
      %v193 = vrot.slane %v192, 4
      %v194 = vadd.f32 %v192, %v193
      %v195 = vrot.slane %v194, 2
      %v196 = vadd.f32 %v194, %v195
      %v197 = vrot.slane %v196, 1
      %v198 = vadd.f32 %v196, %v197
      %v199 = vadd.f32 %v188, %v198
      %vm200 = vcmask 516096
      %201 = vst.msk [vmem:[%s173] sm:$0x1] %vm200, %v199
      %v202 = vld [vmem:[%s176] sm:$0x1]
      %v203 = vmul.f32 %v186, %v186
      %v204 = vmul.f32 %v187, %v187
      %v205 = vsel %vm189, %v203, 0.0
      %v206 = vsel %vm189, %v204, 0.0
      %v207 = vadd.f32 %v205, %v206
      %v208 = vrot.slane %v207, 4
      %v209 = vadd.f32 %v207, %v208
      %v210 = vrot.slane %v209, 2
      %v211 = vadd.f32 %v209, %v210
      %v212 = vrot.slane %v211, 1
      %v213 = vadd.f32 %v211, %v212
      %v214 = vadd.f32 %v202, %v213
      %215 = vst.msk [vmem:[%s176] sm:$0x1] %vm200, %v214
      %p216 = scmp.lt.s32.totalorder %s18, 1
      %s217 = scalar_select %p216, %s18, 1
      %s218 = scalar_lea.vmem %s1, %s217
      %p219 = scmp.lt.s32.totalorder %s18, 1
      %s220 = scalar_select %p219, %s18, 1
      %s221 = scalar_lea.vmem %s2, %s220
      // Predicated region
      $region29: #{resblock_forward.8} parent=23 // pred_check
        %p222 = pneg %p72
      $region30: #{resblock_forward.8} parent=23 // pred_check_branch
        %224 = sbr.rel (%p222) target = $region32
      $region31: #{resblock_forward.8} parent=23 // pred_region
        _
      $region32: #{resblock_forward.8} parent=23 // pred_fallthru
        _
      // Predicated region
      $region33: #{resblock_forward.8} parent=23 // pred_check
        %p225 = pneg %p98
      $region34: #{resblock_forward.8} parent=23 // pred_check_branch
        %227 = sbr.rel (%p225) target = $region36
      $region35: #{resblock_forward.8} parent=23 // pred_region
        _
      $region36: #{resblock_forward.8} parent=23 // pred_fallthru
        _
    $region24: #{resblock_forward.8} parent=5 // pred_fallthru
      _
    %p228 = scmp.le.s32.totalorder 2, %s9
    // Predicated region
    $region37: #{resblock_forward.8} parent=5 // pred_check
      %p229 = pneg %p228
    $region38: #{resblock_forward.8} parent=5 // pred_check_branch
      %231 = sbr.rel (%p229) target = $region40
    $region39: #{resblock_forward.8} parent=5 // pred_region
      %s232 = ssub.s32 %s9, 2
      // Predicated region
      $region41: #{resblock_forward.8} parent=39 // pred_check
        %p233 = pneg %p78
      $region42: #{resblock_forward.8} parent=39 // pred_check_branch
        %235 = sbr.rel (%p233) target = $region44
      $region43: #{resblock_forward.8} parent=39 // pred_region
        %p236 = scmp.lt.s32.totalorder %s20, 1
        %s237 = scalar_select %p236, %s20, 1
        %s238 = scalar_lea.vmem %s1, %s237
      $region44: #{resblock_forward.8} parent=39 // pred_fallthru
        _
      // Predicated region
      $region45: #{resblock_forward.8} parent=39 // pred_check
        %p239 = pneg %p104
      $region46: #{resblock_forward.8} parent=39 // pred_check_branch
        %241 = sbr.rel (%p239) target = $region48
      $region47: #{resblock_forward.8} parent=39 // pred_region
        %p242 = scmp.lt.s32.totalorder %s20, 1
        %s243 = scalar_select %p242, %s20, 1
        %s244 = scalar_lea.vmem %s2, %s243
      $region48: #{resblock_forward.8} parent=39 // pred_fallthru
        _
    $region40: #{resblock_forward.8} parent=5 // pred_fallthru
      _
  $region6: #{resblock_forward.8} parent=0 // loop_footer
    %s13 = sadd.s32 1, %s9
  $region7: #{resblock_forward.8} parent=0 // loop_footer_branch
    %8 = sbr.rel target = $region3
  $region8: #{resblock_forward.8} parent=0 // loop_exit
    _

// kernel: resblock_forward.7
$region0: #{resblock_forward.7}
  #allocation0 [shape = 'u32[]', space=smem, size = 0x4, offset = 0x4, fixed_abs, tag = 'smem constant byte address 0x4 - core index']
  #allocation1 [shape = 'u32[144,128]{1,0:T(1,128)}', space=vmem, size = 0x12000, scoped, tag = 'internal scratch']
  #allocation2 [shape = 'f32[4,10,32]{2,1,0:T(8,128)}', space=vmem, size = 0x8000, scoped, tag = 'scratch operand']
  %s0 = inlined_call_operand.vmem [shape: f32[2,8,8,32], index: 0, kind: input, shape index: {}]
  %s1 = inlined_call_operand.vmem [shape: f32[2,1,32], index: 1, kind: input, shape index: {}]
  %s2 = inlined_call_operand.vmem [shape: f32[2,1,32], index: 2, kind: input, shape index: {}]
  %s3 = inlined_call_operand.vmem [shape: bf16[3,3,32,64], index: 3, kind: input, shape index: {}]
  %s4 = inlined_call_operand.vmem [shape: f32[1,64], index: 4, kind: input, shape index: {}]
  %s5 = inlined_call_operand.vmem [shape: f32[2,1,64], index: 5, kind: input, shape index: {}]
  %s6 = inlined_call_operand.vmem [shape: bf16[2,64,64], index: 6, kind: output, shape index: {}]
  %s7 = sld [smem:[#allocation0]]
  $region69: #{resblock_forward.7} parent=0
    _
  %s9 = ssub.s32 1, %s7
  %s10 = scalar_select 0, %s9, %s7
  loop: start=0, step=1, limit=10
  $region2: #{resblock_forward.7} parent=0 // loop_pre_header
    _
  $region3: #{resblock_forward.7} parent=0 // loop_header
    %s12 = sphi 0, %s16
    %p13 = scmp.ge.s32.totalorder %s12, 10
    %s19 = sphi 0, %s31
    %s20 = sphi 0, %s27
    %s21 = sphi 0, %s19
    %s22 = sphi 0, %s20
    %s23 = sphi 0, %s21
    %s24 = sphi 0, %s22
    %s34 = sphi 0, %s36
    %s37 = sphi 0, %s34
    %s38 = sphi 0, %s37
    %s54 = sphi 0, %s38
    %s60 = sphi 0, %s62
    %s63 = sphi 0, %s60
    %s64 = sphi 0, %s63
    %s80 = sphi 0, %s64
    %s86 = sphi 0, %s88
    %s89 = sphi 0, %s86
    %s90 = sphi 0, %s89
    %s106 = sphi 0, %s90
    %s110 = sphi 0, %s110
    %s112 = sphi 0, %s110
    %s113 = sphi 0, %s112
    %s127 = sphi 0, %s113
    %s131 = sphi 0, %s131
    %s133 = sphi 0, %s131
    %s134 = sphi 0, %s133
    %s148 = sphi 0, %s134
    %s154 = sphi 0, %s156
    %s157 = sphi 0, %s154
    %s158 = sphi 0, %s157
    %s174 = sphi 0, %s158
    %s182 = sphi 0, %s184
    %s185 = sphi 0, %s182
    %s186 = sphi 0, %s185
    %s202 = sphi 0, %s186
  $region4: #{resblock_forward.7} parent=0 // loop_header_branch
    %15 = sbr.rel (%p13) target = $region8
  $region5: #{resblock_forward.7} parent=0 // loop_body
    %s17 = ssub.s32 %s12, 1
    %s18 = ssub.s32 %s12, 2
    %s25 = sadd.s32 1, %s20
    %p26 = scmp.ge.s32.totalorder %s25, 4
    %s27 = scalar_select %p26, 0, %s25
    %s28 = sadd.s32 1, %s19
    %s29 = scalar_select %p26, %s28, %s19
    %p30 = scmp.ge.s32.totalorder %s29, 2
    %s31 = scalar_select %p30, 0, %s29
    %s32 = ssub.s32 %s19, %s31
    %p33 = scmp.eq.s32.totalorder %s32, 0
    %s35 = sadd.s32 %s34, 1
    %s36 = scalar_select %p33, %s34, %s35
    %p39 = pneg %p33
    %p40 = scmp.eq.s32.totalorder %s12, 7
    %p41 = por %p39, %p40
    %p42 = scmp.ne.s32.totalorder %s34, %s37
    %p43 = scmp.eq.s32.totalorder %s12, 0
    %p44 = por %p42, %p43
    %p45 = scmp.ne.s32.totalorder %s34, %s37
    %p46 = scmp.eq.s32.totalorder %s17, 7
    %p47 = por %p45, %p46
    %p48 = scmp.ne.s32.totalorder %s37, %s38
    %p49 = scmp.eq.s32.totalorder %s17, 0
    %p50 = por %p48, %p49
    %p51 = scmp.ne.s32.totalorder %s37, %s38
    %p52 = scmp.eq.s32.totalorder %s18, 7
    %p53 = por %p51, %p52
    %p55 = scmp.ne.s32.totalorder %s38, %s54
    %p56 = scmp.eq.s32.totalorder %s18, 0
    %p57 = por %p55, %p56
    %s58 = ssub.s32 %s19, %s31
    %p59 = scmp.eq.s32.totalorder %s58, 0
    %s61 = sadd.s32 %s60, 1
    %s62 = scalar_select %p59, %s60, %s61
    %p65 = pneg %p59
    %p66 = scmp.eq.s32.totalorder %s12, 7
    %p67 = por %p65, %p66
    %p68 = scmp.ne.s32.totalorder %s60, %s63
    %p69 = scmp.eq.s32.totalorder %s12, 0
    %p70 = por %p68, %p69
    %p71 = scmp.ne.s32.totalorder %s60, %s63
    %p72 = scmp.eq.s32.totalorder %s17, 7
    %p73 = por %p71, %p72
    %p74 = scmp.ne.s32.totalorder %s63, %s64
    %p75 = scmp.eq.s32.totalorder %s17, 0
    %p76 = por %p74, %p75
    %p77 = scmp.ne.s32.totalorder %s63, %s64
    %p78 = scmp.eq.s32.totalorder %s18, 7
    %p79 = por %p77, %p78
    %p81 = scmp.ne.s32.totalorder %s64, %s80
    %p82 = scmp.eq.s32.totalorder %s18, 0
    %p83 = por %p81, %p82
    %s84 = ssub.s32 %s19, %s31
    %p85 = scmp.eq.s32.totalorder %s84, 0
    %s87 = sadd.s32 %s86, 1
    %s88 = scalar_select %p85, %s86, %s87
    %p91 = pneg %p85
    %p92 = scmp.eq.s32.totalorder %s12, 7
    %p93 = por %p91, %p92
    %p94 = scmp.ne.s32.totalorder %s86, %s89
    %p95 = scmp.eq.s32.totalorder %s12, 0
    %p96 = por %p94, %p95
    %p97 = scmp.ne.s32.totalorder %s86, %s89
    %p98 = scmp.eq.s32.totalorder %s17, 7
    %p99 = por %p97, %p98
    %p100 = scmp.ne.s32.totalorder %s89, %s90
    %p101 = scmp.eq.s32.totalorder %s17, 0
    %p102 = por %p100, %p101
    %p103 = scmp.ne.s32.totalorder %s89, %s90
    %p104 = scmp.eq.s32.totalorder %s18, 7
    %p105 = por %p103, %p104
    %p107 = scmp.ne.s32.totalorder %s90, %s106
    %p108 = scmp.eq.s32.totalorder %s18, 0
    %p109 = por %p107, %p108
    %s111 = sadd.s32 %s110, 1
    %p114 = scmp.eq.s32.totalorder %s12, 7
    %p115 = scmp.ne.s32.totalorder %s110, %s112
    %p116 = scmp.eq.s32.totalorder %s12, 0
    %p117 = por %p115, %p116
    %p118 = scmp.ne.s32.totalorder %s110, %s112
    %p119 = scmp.eq.s32.totalorder %s17, 7
    %p120 = por %p118, %p119
    %p121 = scmp.ne.s32.totalorder %s112, %s113
    %p122 = scmp.eq.s32.totalorder %s17, 0
    %p123 = por %p121, %p122
    %p124 = scmp.ne.s32.totalorder %s112, %s113
    %p125 = scmp.eq.s32.totalorder %s18, 7
    %p126 = por %p124, %p125
    %p128 = scmp.ne.s32.totalorder %s113, %s127
    %p129 = scmp.eq.s32.totalorder %s18, 0
    %p130 = por %p128, %p129
    %s132 = sadd.s32 %s131, 1
    %p135 = scmp.eq.s32.totalorder %s12, 7
    %p136 = scmp.ne.s32.totalorder %s131, %s133
    %p137 = scmp.eq.s32.totalorder %s12, 0
    %p138 = por %p136, %p137
    %p139 = scmp.ne.s32.totalorder %s131, %s133
    %p140 = scmp.eq.s32.totalorder %s17, 7
    %p141 = por %p139, %p140
    %p142 = scmp.ne.s32.totalorder %s133, %s134
    %p143 = scmp.eq.s32.totalorder %s17, 0
    %p144 = por %p142, %p143
    %p145 = scmp.ne.s32.totalorder %s133, %s134
    %p146 = scmp.eq.s32.totalorder %s18, 7
    %p147 = por %p145, %p146
    %p149 = scmp.ne.s32.totalorder %s134, %s148
    %p150 = scmp.eq.s32.totalorder %s18, 0
    %p151 = por %p149, %p150
    %s152 = ssub.s32 %s19, %s31
    %p153 = scmp.eq.s32.totalorder %s152, 0
    %s155 = sadd.s32 %s154, 1
    %s156 = scalar_select %p153, %s154, %s155
    %p159 = pneg %p153
    %p160 = scmp.eq.s32.totalorder %s12, 7
    %p161 = por %p159, %p160
    %p162 = scmp.ne.s32.totalorder %s154, %s157
    %p163 = scmp.eq.s32.totalorder %s12, 0
    %p164 = por %p162, %p163
    %p165 = scmp.ne.s32.totalorder %s154, %s157
    %p166 = scmp.eq.s32.totalorder %s17, 7
    %p167 = por %p165, %p166
    %p168 = scmp.ne.s32.totalorder %s157, %s158
    %p169 = scmp.eq.s32.totalorder %s17, 0
    %p170 = por %p168, %p169
    %p171 = scmp.ne.s32.totalorder %s157, %s158
    %p172 = scmp.eq.s32.totalorder %s18, 7
    %p173 = por %p171, %p172
    %p175 = scmp.ne.s32.totalorder %s158, %s174
    %p176 = scmp.eq.s32.totalorder %s18, 0
    %p177 = por %p175, %p176
    %s178 = ssub.s32 %s19, %s31
    %s179 = ssub.s32 %s20, %s27
    %s180 = sor.u32 %s178, %s179
    %p181 = scmp.eq.s32.totalorder %s180, 0
    %s183 = sadd.s32 %s182, 1
    %s184 = scalar_select %p181, %s182, %s183
    %p187 = pneg %p181
    %p188 = scmp.eq.s32.totalorder %s12, 7
    %p189 = por %p187, %p188
    %p190 = scmp.ne.s32.totalorder %s182, %s185
    %p191 = scmp.eq.s32.totalorder %s12, 0
    %p192 = por %p190, %p191
    %p193 = scmp.ne.s32.totalorder %s182, %s185
    %p194 = scmp.eq.s32.totalorder %s17, 7
    %p195 = por %p193, %p194
    %p196 = scmp.ne.s32.totalorder %s185, %s186
    %p197 = scmp.eq.s32.totalorder %s17, 0
    %p198 = por %p196, %p197
    %p199 = scmp.ne.s32.totalorder %s185, %s186
    %p200 = scmp.eq.s32.totalorder %s18, 7
    %p201 = por %p199, %p200
    %p203 = scmp.ne.s32.totalorder %s186, %s202
    %p204 = scmp.eq.s32.totalorder %s18, 0
    %p205 = por %p203, %p204
    %p206 = scmp.le.s32.totalorder 1, %s12
    %p207 = scmp.lt.s32.totalorder %s12, 9
    %p208 = pnand %p206, %p207
    %p209 = pneg %p208
    // Predicated region
    $region9: #{resblock_forward.7} parent=5 // pred_check
      _
    $region10: #{resblock_forward.7} parent=5 // pred_check_branch
      %211 = sbr.rel (%p208) target = $region12
    $region11: #{resblock_forward.7} parent=5 // pred_region
      %s212 = ssub.s32 %s12, 1
      // Predicated region
      $region13: #{resblock_forward.7} parent=11 // pred_check
        %p213 = pneg %p123
      $region14: #{resblock_forward.7} parent=11 // pred_check_branch
        %215 = sbr.rel (%p213) target = $region16
      $region15: #{resblock_forward.7} parent=11 // pred_region
        _
      $region16: #{resblock_forward.7} parent=11 // pred_fallthru
        _
      // Predicated region
      $region17: #{resblock_forward.7} parent=11 // pred_check
        %p216 = pneg %p144
      $region18: #{resblock_forward.7} parent=11 // pred_check_branch
        %218 = sbr.rel (%p216) target = $region20
      $region19: #{resblock_forward.7} parent=11 // pred_region
        _
      $region20: #{resblock_forward.7} parent=11 // pred_fallthru
        _
    $region12: #{resblock_forward.7} parent=5 // pred_fallthru
      _
    %p219 = scmp.lt.s32.totalorder %s12, 8
    // Predicated region
    $region21: #{resblock_forward.7} parent=5 // pred_check
      %p220 = pneg %p219
    $region22: #{resblock_forward.7} parent=5 // pred_check_branch
      %222 = sbr.rel (%p220) target = $region24
    $region23: #{resblock_forward.7} parent=5 // pred_region
      // Predicated region
      $region25: #{resblock_forward.7} parent=23 // pred_check
        %p223 = pneg %p44
      $region26: #{resblock_forward.7} parent=23 // pred_check_branch
        %225 = sbr.rel (%p223) target = $region28
      $region27: #{resblock_forward.7} parent=23 // pred_region
        %p226 = scmp.lt.s32.totalorder %s19, 1
        %s227 = scalar_select %p226, %s19, 1
        %s228 = smul.addr %s227, 8
        %s229 = smul.addr %s228, 8
        %s230 = scalar_lea.vmem %s0, %s229
      $region28: #{resblock_forward.7} parent=23 // pred_fallthru
        _
      // Predicated region
      $region29: #{resblock_forward.7} parent=23 // pred_check
        %p231 = pneg %p70
      $region30: #{resblock_forward.7} parent=23 // pred_check_branch
        %233 = sbr.rel (%p231) target = $region32
      $region31: #{resblock_forward.7} parent=23 // pred_region
        %p234 = scmp.lt.s32.totalorder %s19, 1
        %s235 = scalar_select %p234, %s19, 1
        %s236 = scalar_lea.vmem %s1, %s235
      $region32: #{resblock_forward.7} parent=23 // pred_fallthru
        _
      // Predicated region
      $region33: #{resblock_forward.7} parent=23 // pred_check
        %p237 = pneg %p96
      $region34: #{resblock_forward.7} parent=23 // pred_check_branch
        %239 = sbr.rel (%p237) target = $region36
      $region35: #{resblock_forward.7} parent=23 // pred_region
        %p240 = scmp.lt.s32.totalorder %s19, 1
        %s241 = scalar_select %p240, %s19, 1
        %s242 = scalar_lea.vmem %s2, %s241
      $region36: #{resblock_forward.7} parent=23 // pred_fallthru
        _
      // Predicated region
      $region37: #{resblock_forward.7} parent=23 // pred_check
        %p243 = pneg %p164
      $region38: #{resblock_forward.7} parent=23 // pred_check_branch
        %245 = sbr.rel (%p243) target = $region40
      $region39: #{resblock_forward.7} parent=23 // pred_region
        %p246 = scmp.lt.s32.totalorder %s19, 1
        %s247 = scalar_select %p246, %s19, 1
        %s248 = scalar_lea.vmem %s5, %s247
      $region40: #{resblock_forward.7} parent=23 // pred_fallthru
        _
    $region24: #{resblock_forward.7} parent=5 // pred_fallthru
      _
    %p249 = scmp.le.s32.totalorder 1, %s12
    %p250 = scmp.lt.s32.totalorder %s12, 9
    %p251 = pnand %p249, %p250
    %p252 = pneg %p251
    // Predicated region
    $region41: #{resblock_forward.7} parent=5 // pred_check
      _
    $region42: #{resblock_forward.7} parent=5 // pred_check_branch
      %254 = sbr.rel (%p251) target = $region44
    $region43: #{resblock_forward.7} parent=5 // pred_region
      %s255 = ssub.s32 %s12, 1
      %p256 = scmp.lt.s32.totalorder %s21, 1
      %s257 = scalar_select %p256, %s21, 1
      %s258 = smul.addr %s257, 8
      %s259 = smul.addr %s258, 8
      %s260 = scalar_lea.vmem %s0, %s259
      %p261 = pneg %p50
      %p262 = pneg %p47
      %p263 = scmp.lt.s32.totalorder %s21, 1
      %s264 = scalar_select %p263, %s21, 1
      %s265 = scalar_lea.vmem %s1, %s264
      %p266 = pneg %p76
      %p267 = pneg %p73
      %p268 = scmp.lt.s32.totalorder %s21, 1
      %s269 = scalar_select %p268, %s21, 1
      %s270 = scalar_lea.vmem %s2, %s269
      %p271 = pneg %p102
      %p272 = pneg %p99
      %p273 = pneg %p123
      %p274 = pneg %p120
      %p275 = pneg %p144
      %p276 = pneg %p141
      %p277 = scmp.lt.s32.totalorder %s21, 1
      %s278 = scalar_select %p277, %s21, 1
      %s279 = scalar_lea.vmem %s5, %s278
      %p280 = pneg %p170
      %p281 = pneg %p167
      %p282 = pneg %p198
      %p283 = pneg %p195
      %s284 = smul.u32 2, %s22
      %p285 = scmp.lt.s32.totalorder %s21, 1
      %s286 = scalar_select %p285, %s21, 1
      %p287 = scmp.lt.s32.totalorder %s284, 7
      %s288 = scalar_select %p287, %s284, 7
      %s289 = smul.addr %s286, 8
      %s290 = sadd.s32 %s288, %s289
      %s291 = smul.addr %s290, 4
      %s292 = scalar_lea.vmem %s6, %s291
      %p293 = scmp.lt.s32.totalorder %s21, 1
      %s294 = scalar_select %p293, %s21, 1
      %s295 = smul.addr %s294, 8
      %s296 = smul.addr %s295, 8
      %s297 = scalar_lea.vmem %s0, %s296
      %p298 = scmp.lt.s32.totalorder %s21, 1
      %s299 = scalar_select %p298, %s21, 1
      %s300 = scalar_lea.vmem %s1, %s299
      %p301 = scmp.lt.s32.totalorder %s21, 1
      %s302 = scalar_select %p301, %s21, 1
      %s303 = scalar_lea.vmem %s2, %s302
      %p304 = scmp.lt.s32.totalorder %s21, 1
      %s305 = scalar_select %p304, %s21, 1
      %s306 = scalar_lea.vmem %s5, %s305
      %s307 = smul.u32 2, %s22
      %p308 = scmp.lt.s32.totalorder %s21, 1
      %s309 = scalar_select %p308, %s21, 1
      %p310 = scmp.lt.s32.totalorder %s307, 7
      %s311 = scalar_select %p310, %s307, 7
      %s312 = smul.addr %s309, 8
      %s313 = sadd.s32 %s311, %s312
      %s314 = smul.addr %s313, 4
      %s315 = scalar_lea.vmem %s6, %s314
      %s316 = smul.u32 2, %s22
      %v318 = vld [vmem:[%s300] sm:$0x1]
      %v319 = vld [vmem:[%s303] sm:$0x1]
      %vm320 = vcmask 261120
      %321 = vst.msk [vmem:[#allocation2] sm:$0xff] %vm320, 0.0
      %vm322 = vcmask 254976
      %323 = vst.msk [vmem:[#allocation2 + $0x8] sm:$0x3] %vm322, 0.0
      %324 = vst.msk [vmem:[#allocation2 + $0x10] sm:$0xff] %vm320, 0.0
      %325 = vst.msk [vmem:[#allocation2 + $0x18] sm:$0x3] %vm322, 0.0
      %326 = vst.msk [vmem:[#allocation2 + $0x20] sm:$0xff] %vm320, 0.0
      %327 = vst.msk [vmem:[#allocation2 + $0x28] sm:$0x3] %vm322, 0.0
      %328 = vst.msk [vmem:[#allocation2 + $0x30] sm:$0xff] %vm320, 0.0
      %329 = vst.msk [vmem:[#allocation2 + $0x38] sm:$0x3] %vm322, 0.0
      %p330 = scmp.eq.s32.totalorder %s22, 0
      // Predicated region
      $region45: #{resblock_forward.7} parent=43 // pred_check
        %p331 = pneg %p330
      $region46: #{resblock_forward.7} parent=43 // pred_check_branch
        %333 = sbr.rel (%p331) target = $region48
      $region47: #{resblock_forward.7} parent=43 // pred_region
        %v334 = vld [vmem:[%s297] sm:$0xff]
        %v335 = vld [vmem:[%s297 + $0x8] sm:$0xff]
        %v336 = vld [vmem:[%s297 + $0x10] sm:$0xff]
        %v338 = vlaneseq
        %v339 = vshrl.u32 %v338, 7
        %v340 = vsub.s32 0, %v339
        %v341 = vrot.slane %v318, %v340
        %v343 = vmul.f32 %v334, %v341
        %v344 = vmul.f32 %v335, %v341
        %v345 = vmul.f32 %v336, %v341
        %v347 = vlaneseq
        %v348 = vshrl.u32 %v347, 7
        %v349 = vsub.s32 0, %v348
        %v350 = vrot.slane %v319, %v349
        %v352 = vadd.f32 %v343, %v350
        %v353 = vadd.f32 %v344, %v350
        %v354 = vadd.f32 %v345, %v350
        %v355 = vxor.u32 %v352, 2147483648
        %v356 = vxor.u32 %v353, 2147483648
        %v357 = vxor.u32 %v354, 2147483648
        %v358 = vmul.f32 %v355, 1.442695
        %v359 = vpow.pop %v358
        %v360 = vmul.f32 %v356, 1.442695
        %v361 = vpow.pop %v360
        %v362 = vmul.f32 %v357, 1.442695
        %v363 = vpow.pop %v362
        %v364 = vadd.f32 %v359, 1.0
        %v365 = vadd.f32 %v361, 1.0
        %v366 = vadd.f32 %v363, 1.0
        %v367 = vrcp.pop %v364
        %v368 = vmul.f32 1.0, %v367
        %v369 = vrcp.pop %v365
        %v370 = vmul.f32 1.0, %v369
        %v371 = vrcp.pop %v366
        %v372 = vmul.f32 1.0, %v371
        %v373 = vmul.f32 %v352, %v368
        %v374 = vmul.f32 %v353, %v370
        %v375 = vmul.f32 %v354, %v372
        %s376 = scalar_lea.vmem [#allocation2], 16
        %377 = vst.msk [vmem:[%s376 + $0x1] sm:$0xff] %vm320, %v373
        %378 = vst.msk [vmem:[%s376 + $0x11] sm:$0xff] %vm320, %v374
        %379 = vst.msk [vmem:[%s376 + $0x21] sm:$0xff] %vm320, %v375
      $region48: #{resblock_forward.7} parent=43 // pred_fallthru
        _
      %p380 = scmp.eq.s32.totalorder %s22, 3
      // Predicated region
      $region49: #{resblock_forward.7} parent=43 // pred_check
        %p381 = pneg %p380
      $region50: #{resblock_forward.7} parent=43 // pred_check_branch
        %383 = sbr.rel (%p381) target = $region52
      $region51: #{resblock_forward.7} parent=43 // pred_region
        %s384 = scalar_lea.vmem %s297, 40
        %v385 = vld [vmem:[%s384] sm:$0xff]
        %v386 = vld [vmem:[%s384 + $0x8] sm:$0xff]
        %v387 = vld [vmem:[%s384 + $0x10] sm:$0xff]
        %v389 = vlaneseq
        %v390 = vshrl.u32 %v389, 7
        %v391 = vsub.s32 0, %v390
        %v392 = vrot.slane %v318, %v391
        %v394 = vmul.f32 %v385, %v392
        %v395 = vmul.f32 %v386, %v392
        %v396 = vmul.f32 %v387, %v392
        %v398 = vlaneseq
        %v399 = vshrl.u32 %v398, 7
        %v400 = vsub.s32 0, %v399
        %v401 = vrot.slane %v319, %v400
        %v403 = vadd.f32 %v394, %v401
        %v404 = vadd.f32 %v395, %v401
        %v405 = vadd.f32 %v396, %v401
        %v406 = vxor.u32 %v403, 2147483648
        %v407 = vxor.u32 %v404, 2147483648
        %v408 = vxor.u32 %v405, 2147483648
        %v409 = vmul.f32 %v406, 1.442695
        %v410 = vpow.pop %v409
        %v411 = vmul.f32 %v407, 1.442695
        %v412 = vpow.pop %v411
        %v413 = vmul.f32 %v408, 1.442695
        %v414 = vpow.pop %v413
        %v415 = vadd.f32 %v410, 1.0
        %v416 = vadd.f32 %v412, 1.0
        %v417 = vadd.f32 %v414, 1.0
        %v418 = vrcp.pop %v415
        %v419 = vmul.f32 1.0, %v418
        %v420 = vrcp.pop %v416
        %v421 = vmul.f32 1.0, %v420
        %v422 = vrcp.pop %v417
        %v423 = vmul.f32 1.0, %v422
        %v424 = vmul.f32 %v403, %v419
        %v425 = vmul.f32 %v404, %v421
        %v426 = vmul.f32 %v405, %v423
        %427 = vst.msk [vmem:[#allocation2 + $0x1] sm:$0xff] %vm320, %v424
        %428 = vst.msk [vmem:[#allocation2 + $0x11] sm:$0xff] %vm320, %v425
        %429 = vst.msk [vmem:[#allocation2 + $0x21] sm:$0xff] %vm320, %v426
      $region52: #{resblock_forward.7} parent=43 // pred_fallthru
        _
      %p430 = scmp.gt.s32.totalorder %s22, 0
      %p431 = scmp.lt.s32.totalorder %s22, 3
      %p432 = pnand %p430, %p431
      %p433 = pneg %p432
      // Predicated region
      $region53: #{resblock_forward.7} parent=43 // pred_check
        _
      $region54: #{resblock_forward.7} parent=43 // pred_check_branch
        %435 = sbr.rel (%p432) target = $region56
      $region55: #{resblock_forward.7} parent=43 // pred_region
        %s436 = smul.u32 %s22, 2
        %s437 = ssub.s32 %s436, 1
        %s438 = smul.u32 %s437, 8
        %s439 = scalar_lea.vmem %s297, %s438
        %v440 = vld [vmem:[%s439] sm:$0xff]
        %v441 = vld [vmem:[%s439 + $0x8] sm:$0xff]
        %v442 = vld [vmem:[%s439 + $0x10] sm:$0xff]
        %v443 = vld [vmem:[%s439 + $0x18] sm:$0xff]
        %v445 = vlaneseq
        %v446 = vshrl.u32 %v445, 7
        %v447 = vsub.s32 0, %v446
        %v448 = vrot.slane %v318, %v447
        %v450 = vmul.f32 %v440, %v448
        %v451 = vmul.f32 %v441, %v448
        %v452 = vmul.f32 %v442, %v448
        %v453 = vmul.f32 %v443, %v448
        %v455 = vlaneseq
        %v456 = vshrl.u32 %v455, 7
        %v457 = vsub.s32 0, %v456
        %v458 = vrot.slane %v319, %v457
        %v460 = vadd.f32 %v450, %v458
        %v461 = vadd.f32 %v451, %v458
        %v462 = vadd.f32 %v452, %v458
        %v463 = vadd.f32 %v453, %v458
        %v464 = vxor.u32 %v460, 2147483648
        %v465 = vxor.u32 %v461, 2147483648
        %v466 = vxor.u32 %v462, 2147483648
        %v467 = vxor.u32 %v463, 2147483648
        %v468 = vmul.f32 %v464, 1.442695
        %v469 = vpow.pop %v468
        %v470 = vmul.f32 %v465, 1.442695
        %v471 = vpow.pop %v470
        %v472 = vmul.f32 %v466, 1.442695
        %v473 = vpow.pop %v472
        %v474 = vmul.f32 %v467, 1.442695
        %v475 = vpow.pop %v474
        %v476 = vadd.f32 %v469, 1.0
        %v477 = vadd.f32 %v471, 1.0
        %v478 = vadd.f32 %v473, 1.0
        %v479 = vadd.f32 %v475, 1.0
        %v480 = vrcp.pop %v476
        %v481 = vmul.f32 1.0, %v480
        %v482 = vrcp.pop %v477
        %v483 = vmul.f32 1.0, %v482
        %v484 = vrcp.pop %v478
        %v485 = vmul.f32 1.0, %v484
        %v486 = vrcp.pop %v479
        %v487 = vmul.f32 1.0, %v486
        %v488 = vmul.f32 %v460, %v481
        %v489 = vmul.f32 %v461, %v483
        %v490 = vmul.f32 %v462, %v485
        %v491 = vmul.f32 %v463, %v487
        %492 = vst.msk [vmem:[#allocation2 + $0x1] sm:$0xff] %vm320, %v488
        %493 = vst.msk [vmem:[#allocation2 + $0x11] sm:$0xff] %vm320, %v489
        %494 = vst.msk [vmem:[#allocation2 + $0x21] sm:$0xff] %vm320, %v490
        %495 = vst.msk [vmem:[#allocation2 + $0x31] sm:$0xff] %vm320, %v491
      $region56: #{resblock_forward.7} parent=43 // pred_fallthru
        _
      %v496 = vld [vmem:[#allocation2] sm:$0xff]
      %v497 = vld [vmem:[#allocation2 + $0x10] sm:$0xff]
      %v498 = vpack.c.bf16 %v497, %v496
      %v499 = vld [vmem:[%s3] sm:$0xf]
      %v500 = vld [vmem:[%s3 + $0x4] sm:$0xf]
      %v501 = vld [vmem:[%s3 + $0x8] sm:$0xf]
      %v502 = vld [vmem:[%s3 + $0xc] sm:$0xf]
      %v503 = vld [vmem:[#allocation2 + $0x1] sm:$0xff]
      %v504 = vld [vmem:[#allocation2 + $0x11] sm:$0xff]
      %v505 = vpack.c.bf16 %v504, %v503
      %s506 = scalar_lea.vmem %s3, 16
      %v507 = vld [vmem:[%s506] sm:$0xf]
      %v508 = vld [vmem:[%s506 + $0x4] sm:$0xf]
      %v509 = vld [vmem:[%s506 + $0x8] sm:$0xf]
      %v510 = vld [vmem:[%s506 + $0xc] sm:$0xf]
      %v515 = vunpack.c.l.b16 %v507
      %v516 = vunpack.c.l.b16 %v508
      %v517 = vunpack.c.l.b16 %v509
      %v518 = vunpack.c.l.b16 %v510
      %v519 = vpack.c.b16 %v516, %v515
      %v520 = vpack.c.b16 %v518, %v517
      %v524 = vsel %vm320, %v505, 0
      %526 = vmatprep.subr.bf16.mxu0 0
      %527 = vmatpush1.bf16.msra.mxu0 0
      %528 = vmatprep.subr.bf16.mxu0 0
      %529 = vmatpush1.bf16.msra.mxu0 0
      %530 = vmatprep.subr.bf16.mxu0 0
      %531 = vmatpush1.bf16.msra.mxu0 0
      %532 = vmatprep.subr.bf16.mxu0 0
      %533 = vmatpush1.bf16.msra.mxu0 0
      %534 = vmatprep.subr.bf16.mxu0 0
      %535 = vmatpush1.bf16.msra.mxu0 0
      %536 = vmatprep.subr.bf16.mxu0 0
      %537 = vmatpush1.bf16.msra.mxu0 0
      %538 = vmatprep.subr.bf16.mxu0 0
      %539 = vmatpush1.bf16.msra.mxu0 %v520
      %540 = vmatprep.subr.bf16.mxu0 0
      %541 = vmatpush1.bf16.msra.mxu0 %v519
      %542 = vmatprep.subr.bf16.mxu0 0
      %543 = vmatpush2.bf16.msra.mxu0 0
      %544 = vmatprep.subr.bf16.mxu0 0
      %545 = vmatpush2.bf16.msra.mxu0 0
      %546 = vmatprep.subr.bf16.mxu0 0
      %547 = vmatpush2.bf16.msra.mxu0 0
      %548 = vmatprep.subr.bf16.mxu0 0
      %549 = vmatpush2.bf16.msra.mxu0 0
      %550 = vmatprep.subr.bf16.mxu0 0
      %551 = vmatpush2.bf16.msra.mxu0 0
      %552 = vmatprep.subr.bf16.mxu0 0
      %553 = vmatpush2.bf16.msra.mxu0 0
      %554 = vmatprep.subr.bf16.mxu0 0
      %555 = vmatpush2.bf16.msra.mxu0 0
      %556 = vmatprep.subr.bf16.mxu0 0
      %557 = vmatpush2.bf16.msra.mxu0 0
      %558 = vmatprep.mubr.bf16.mxu0 0
      %559 = vmatmul.mubr.bf16.gmra.mxu0 %v524
      %v560 = vpop.f32.mrf.mxu0
      %v561 = vadd.f32 0.0, %v560
      %v562 = vpop.f32.mrf.mxu0
      %v563 = vpop.f32.mrf.mxu0
      %v564 = vadd.f32 0.0, %v563
      %v565 = vpop.f32.mrf.mxu0
      %566 = vdwg.mxu0
      %v571 = vunpack.c.l.b16 %v499
      %v572 = vunpack.c.l.b16 %v500
      %v573 = vunpack.c.l.b16 %v501
      %v574 = vunpack.c.l.b16 %v502
      %v575 = vpack.c.b16 %v572, %v571
      %v576 = vpack.c.b16 %v574, %v573
      %v580 = vsel %vm320, %v498, 0
      %582 = vmatprep.subr.bf16.mxu0 0
      %583 = vmatpush1.bf16.msra.mxu0 0
      %584 = vmatprep.subr.bf16.mxu0 0
      %585 = vmatpush1.bf16.msra.mxu0 0
      %586 = vmatprep.subr.bf16.mxu0 0
      %587 = vmatpush1.bf16.msra.mxu0 0
      %588 = vmatprep.subr.bf16.mxu0 0
      %589 = vmatpush1.bf16.msra.mxu0 0
      %590 = vmatprep.subr.bf16.mxu0 0
      %591 = vmatpush1.bf16.msra.mxu0 0
      %592 = vmatprep.subr.bf16.mxu0 0
      %593 = vmatpush1.bf16.msra.mxu0 0
      %594 = vmatprep.subr.bf16.mxu0 0
      %595 = vmatpush1.bf16.msra.mxu0 %v576
      %596 = vmatprep.subr.bf16.mxu0 0
      %597 = vmatpush1.bf16.msra.mxu0 %v575
      %598 = vmatprep.subr.bf16.mxu0 0
      %599 = vmatpush2.bf16.msra.mxu0 0
      %600 = vmatprep.subr.bf16.mxu0 0
      %601 = vmatpush2.bf16.msra.mxu0 0
      %602 = vmatprep.subr.bf16.mxu0 0
      %603 = vmatpush2.bf16.msra.mxu0 0
      %604 = vmatprep.subr.bf16.mxu0 0
      %605 = vmatpush2.bf16.msra.mxu0 0
      %606 = vmatprep.subr.bf16.mxu0 0
      %607 = vmatpush2.bf16.msra.mxu0 0
      %608 = vmatprep.subr.bf16.mxu0 0
      %609 = vmatpush2.bf16.msra.mxu0 0
      %610 = vmatprep.subr.bf16.mxu0 0
      %611 = vmatpush2.bf16.msra.mxu0 0
      %612 = vmatprep.subr.bf16.mxu0 0
      %613 = vmatpush2.bf16.msra.mxu0 0
      %614 = vmatprep.mubr.bf16.mxu0 0
      %615 = vmatmul.mubr.bf16.gmra.mxu0 %v580
      %v616 = vpop.f32.mrf.mxu0
      %v617 = vadd.f32 %v561, %v616
      %v618 = vpop.f32.mrf.mxu0
      %v619 = vpop.f32.mrf.mxu0
      %v620 = vadd.f32 %v564, %v619
      %v621 = vpop.f32.mrf.mxu0
      %622 = vdwg.mxu0
      %v623 = vld [vmem:[#allocation2 + $0x2] sm:$0xff]
      %v624 = vld [vmem:[#allocation2 + $0x12] sm:$0xff]
      %v625 = vpack.c.bf16 %v624, %v623
      %s626 = scalar_lea.vmem %s3, 32
      %v627 = vld [vmem:[%s626] sm:$0xf]
      %v628 = vld [vmem:[%s626 + $0x4] sm:$0xf]
      %v629 = vld [vmem:[%s626 + $0x8] sm:$0xf]
      %v630 = vld [vmem:[%s626 + $0xc] sm:$0xf]
      %v635 = vunpack.c.l.b16 %v627
      %v636 = vunpack.c.l.b16 %v628
      %v637 = vunpack.c.l.b16 %v629
      %v638 = vunpack.c.l.b16 %v630
      %v639 = vpack.c.b16 %v636, %v635
      %v640 = vpack.c.b16 %v638, %v637
      %v644 = vsel %vm320, %v625, 0
      %646 = vmatprep.subr.bf16.mxu0 0
      %647 = vmatpush1.bf16.msra.mxu0 0
      %648 = vmatprep.subr.bf16.mxu0 0
      %649 = vmatpush1.bf16.msra.mxu0 0
      %650 = vmatprep.subr.bf16.mxu0 0
      %651 = vmatpush1.bf16.msra.mxu0 0
      %652 = vmatprep.subr.bf16.mxu0 0
      %653 = vmatpush1.bf16.msra.mxu0 0
      %654 = vmatprep.subr.bf16.mxu0 0
      %655 = vmatpush1.bf16.msra.mxu0 0
      %656 = vmatprep.subr.bf16.mxu0 0
      %657 = vmatpush1.bf16.msra.mxu0 0
      %658 = vmatprep.subr.bf16.mxu0 0
      %659 = vmatpush1.bf16.msra.mxu0 %v640
      %660 = vmatprep.subr.bf16.mxu0 0
      %661 = vmatpush1.bf16.msra.mxu0 %v639
      %662 = vmatprep.subr.bf16.mxu0 0
      %663 = vmatpush2.bf16.msra.mxu0 0
      %664 = vmatprep.subr.bf16.mxu0 0
      %665 = vmatpush2.bf16.msra.mxu0 0
      %666 = vmatprep.subr.bf16.mxu0 0
      %667 = vmatpush2.bf16.msra.mxu0 0
      %668 = vmatprep.subr.bf16.mxu0 0
      %669 = vmatpush2.bf16.msra.mxu0 0
      %670 = vmatprep.subr.bf16.mxu0 0
      %671 = vmatpush2.bf16.msra.mxu0 0
      %672 = vmatprep.subr.bf16.mxu0 0
      %673 = vmatpush2.bf16.msra.mxu0 0
      %674 = vmatprep.subr.bf16.mxu0 0
      %675 = vmatpush2.bf16.msra.mxu0 0
      %676 = vmatprep.subr.bf16.mxu0 0
      %677 = vmatpush2.bf16.msra.mxu0 0
      %678 = vmatprep.mubr.bf16.mxu0 0
      %679 = vmatmul.mubr.bf16.gmra.mxu0 %v644
      %v680 = vpop.f32.mrf.mxu0
      %v681 = vadd.f32 0.0, %v680
      %v682 = vpop.f32.mrf.mxu0
      %v683 = vpop.f32.mrf.mxu0
      %v684 = vadd.f32 0.0, %v683
      %v685 = vpop.f32.mrf.mxu0
      %686 = vdwg.mxu0
      %v687 = vadd.f32 %v617, %v681
      %v688 = vadd.f32 %v620, %v684
      %s689 = scalar_lea.vmem [#allocation2], 16
      %v690 = vld [vmem:[%s689] sm:$0xff]
      %v691 = vld [vmem:[%s689 + $0x10] sm:$0xff]
      %v692 = vpack.c.bf16 %v691, %v690
      %s693 = scalar_lea.vmem %s3, 48
      %v694 = vld [vmem:[%s693] sm:$0xf]
      %v695 = vld [vmem:[%s693 + $0x4] sm:$0xf]
      %v696 = vld [vmem:[%s693 + $0x8] sm:$0xf]
      %v697 = vld [vmem:[%s693 + $0xc] sm:$0xf]
      %v702 = vunpack.c.l.b16 %v694
      %v703 = vunpack.c.l.b16 %v695
      %v704 = vunpack.c.l.b16 %v696
      %v705 = vunpack.c.l.b16 %v697
      %v706 = vpack.c.b16 %v703, %v702
      %v707 = vpack.c.b16 %v705, %v704
      %v711 = vsel %vm320, %v692, 0
      %713 = vmatprep.subr.bf16.mxu0 0
      %714 = vmatpush1.bf16.msra.mxu0 0
      %715 = vmatprep.subr.bf16.mxu0 0
      %716 = vmatpush1.bf16.msra.mxu0 0
      %717 = vmatprep.subr.bf16.mxu0 0
      %718 = vmatpush1.bf16.msra.mxu0 0
      %719 = vmatprep.subr.bf16.mxu0 0
      %720 = vmatpush1.bf16.msra.mxu0 0
      %721 = vmatprep.subr.bf16.mxu0 0
      %722 = vmatpush1.bf16.msra.mxu0 0
      %723 = vmatprep.subr.bf16.mxu0 0
      %724 = vmatpush1.bf16.msra.mxu0 0
      %725 = vmatprep.subr.bf16.mxu0 0
      %726 = vmatpush1.bf16.msra.mxu0 %v707
      %727 = vmatprep.subr.bf16.mxu0 0
      %728 = vmatpush1.bf16.msra.mxu0 %v706
      %729 = vmatprep.subr.bf16.mxu0 0
      %730 = vmatpush2.bf16.msra.mxu0 0
      %731 = vmatprep.subr.bf16.mxu0 0
      %732 = vmatpush2.bf16.msra.mxu0 0
      %733 = vmatprep.subr.bf16.mxu0 0
      %734 = vmatpush2.bf16.msra.mxu0 0
      %735 = vmatprep.subr.bf16.mxu0 0
      %736 = vmatpush2.bf16.msra.mxu0 0
      %737 = vmatprep.subr.bf16.mxu0 0
      %738 = vmatpush2.bf16.msra.mxu0 0
      %739 = vmatprep.subr.bf16.mxu0 0
      %740 = vmatpush2.bf16.msra.mxu0 0
      %741 = vmatprep.subr.bf16.mxu0 0
      %742 = vmatpush2.bf16.msra.mxu0 0
      %743 = vmatprep.subr.bf16.mxu0 0
      %744 = vmatpush2.bf16.msra.mxu0 0
      %745 = vmatprep.mubr.bf16.mxu0 0
      %746 = vmatmul.mubr.bf16.gmra.mxu0 %v711
      %v747 = vpop.f32.mrf.mxu0
      %v748 = vadd.f32 0.0, %v747
      %v749 = vpop.f32.mrf.mxu0
      %v750 = vpop.f32.mrf.mxu0
      %v751 = vadd.f32 0.0, %v750
      %v752 = vpop.f32.mrf.mxu0
      %753 = vdwg.mxu0
      %v754 = vadd.f32 %v687, %v748
      %v755 = vadd.f32 %v688, %v751
      %v756 = vld [vmem:[%s689 + $0x1] sm:$0xff]
      %v757 = vld [vmem:[%s689 + $0x11] sm:$0xff]
      %v758 = vpack.c.bf16 %v757, %v756
      %s759 = scalar_lea.vmem %s3, 64
      %v760 = vld [vmem:[%s759] sm:$0xf]
      %v761 = vld [vmem:[%s759 + $0x4] sm:$0xf]
      %v762 = vld [vmem:[%s759 + $0x8] sm:$0xf]
      %v763 = vld [vmem:[%s759 + $0xc] sm:$0xf]
      %v768 = vunpack.c.l.b16 %v760
      %v769 = vunpack.c.l.b16 %v761
      %v770 = vunpack.c.l.b16 %v762
      %v771 = vunpack.c.l.b16 %v763
      %v772 = vpack.c.b16 %v769, %v768
      %v773 = vpack.c.b16 %v771, %v770
      %v777 = vsel %vm320, %v758, 0
      %779 = vmatprep.subr.bf16.mxu0 0
      %780 = vmatpush1.bf16.msra.mxu0 0
      %781 = vmatprep.subr.bf16.mxu0 0
      %782 = vmatpush1.bf16.msra.mxu0 0
      %783 = vmatprep.subr.bf16.mxu0 0
      %784 = vmatpush1.bf16.msra.mxu0 0
      %785 = vmatprep.subr.bf16.mxu0 0
      %786 = vmatpush1.bf16.msra.mxu0 0
      %787 = vmatprep.subr.bf16.mxu0 0
      %788 = vmatpush1.bf16.msra.mxu0 0
      %789 = vmatprep.subr.bf16.mxu0 0
      %790 = vmatpush1.bf16.msra.mxu0 0
      %791 = vmatprep.subr.bf16.mxu0 0
      %792 = vmatpush1.bf16.msra.mxu0 %v773
      %793 = vmatprep.subr.bf16.mxu0 0
      %794 = vmatpush1.bf16.msra.mxu0 %v772
      %795 = vmatprep.subr.bf16.mxu0 0
      %796 = vmatpush2.bf16.msra.mxu0 0
      %797 = vmatprep.subr.bf16.mxu0 0
      %798 = vmatpush2.bf16.msra.mxu0 0
      %799 = vmatprep.subr.bf16.mxu0 0
      %800 = vmatpush2.bf16.msra.mxu0 0
      %801 = vmatprep.subr.bf16.mxu0 0
      %802 = vmatpush2.bf16.msra.mxu0 0
      %803 = vmatprep.subr.bf16.mxu0 0
      %804 = vmatpush2.bf16.msra.mxu0 0
      %805 = vmatprep.subr.bf16.mxu0 0
      %806 = vmatpush2.bf16.msra.mxu0 0
      %807 = vmatprep.subr.bf16.mxu0 0
      %808 = vmatpush2.bf16.msra.mxu0 0
      %809 = vmatprep.subr.bf16.mxu0 0
      %810 = vmatpush2.bf16.msra.mxu0 0
      %811 = vmatprep.mubr.bf16.mxu0 0
      %812 = vmatmul.mubr.bf16.gmra.mxu0 %v777
      %v813 = vpop.f32.mrf.mxu0
      %v814 = vadd.f32 0.0, %v813
      %v815 = vpop.f32.mrf.mxu0
      %v816 = vpop.f32.mrf.mxu0
      %v817 = vadd.f32 0.0, %v816
      %v818 = vpop.f32.mrf.mxu0
      %819 = vdwg.mxu0
      %v820 = vadd.f32 %v754, %v814
      %v821 = vadd.f32 %v755, %v817
      %v822 = vld [vmem:[%s689 + $0x2] sm:$0xff]
      %v823 = vld [vmem:[%s689 + $0x12] sm:$0xff]
      %v824 = vpack.c.bf16 %v823, %v822
      %s825 = scalar_lea.vmem %s3, 80
      %v826 = vld [vmem:[%s825] sm:$0xf]
      %v827 = vld [vmem:[%s825 + $0x4] sm:$0xf]
      %v828 = vld [vmem:[%s825 + $0x8] sm:$0xf]
      %v829 = vld [vmem:[%s825 + $0xc] sm:$0xf]
      %v834 = vunpack.c.l.b16 %v826
      %v835 = vunpack.c.l.b16 %v827
      %v836 = vunpack.c.l.b16 %v828
      %v837 = vunpack.c.l.b16 %v829
      %v838 = vpack.c.b16 %v835, %v834
      %v839 = vpack.c.b16 %v837, %v836
      %v843 = vsel %vm320, %v824, 0
      %845 = vmatprep.subr.bf16.mxu0 0
      %846 = vmatpush1.bf16.msra.mxu0 0
      %847 = vmatprep.subr.bf16.mxu0 0
      %848 = vmatpush1.bf16.msra.mxu0 0
      %849 = vmatprep.subr.bf16.mxu0 0
      %850 = vmatpush1.bf16.msra.mxu0 0
      %851 = vmatprep.subr.bf16.mxu0 0
      %852 = vmatpush1.bf16.msra.mxu0 0
      %853 = vmatprep.subr.bf16.mxu0 0
      %854 = vmatpush1.bf16.msra.mxu0 0
      %855 = vmatprep.subr.bf16.mxu0 0
      %856 = vmatpush1.bf16.msra.mxu0 0
      %857 = vmatprep.subr.bf16.mxu0 0
      %858 = vmatpush1.bf16.msra.mxu0 %v839
      %859 = vmatprep.subr.bf16.mxu0 0
      %860 = vmatpush1.bf16.msra.mxu0 %v838
      %861 = vmatprep.subr.bf16.mxu0 0
      %862 = vmatpush2.bf16.msra.mxu0 0
      %863 = vmatprep.subr.bf16.mxu0 0
      %864 = vmatpush2.bf16.msra.mxu0 0
      %865 = vmatprep.subr.bf16.mxu0 0
      %866 = vmatpush2.bf16.msra.mxu0 0
      %867 = vmatprep.subr.bf16.mxu0 0
      %868 = vmatpush2.bf16.msra.mxu0 0
      %869 = vmatprep.subr.bf16.mxu0 0
      %870 = vmatpush2.bf16.msra.mxu0 0
      %871 = vmatprep.subr.bf16.mxu0 0
      %872 = vmatpush2.bf16.msra.mxu0 0
      %873 = vmatprep.subr.bf16.mxu0 0
      %874 = vmatpush2.bf16.msra.mxu0 0
      %875 = vmatprep.subr.bf16.mxu0 0
      %876 = vmatpush2.bf16.msra.mxu0 0
      %877 = vmatprep.mubr.bf16.mxu0 0
      %878 = vmatmul.mubr.bf16.gmra.mxu0 %v843
      %v879 = vpop.f32.mrf.mxu0
      %v880 = vadd.f32 0.0, %v879
      %v881 = vpop.f32.mrf.mxu0
      %v882 = vpop.f32.mrf.mxu0
      %v883 = vadd.f32 0.0, %v882
      %v884 = vpop.f32.mrf.mxu0
      %885 = vdwg.mxu0
      %v886 = vadd.f32 %v820, %v880
      %v887 = vadd.f32 %v821, %v883
      %s888 = scalar_lea.vmem [#allocation2], 32
      %v889 = vld [vmem:[%s888] sm:$0xff]
      %v890 = vld [vmem:[%s888 + $0x10] sm:$0xff]
      %v891 = vpack.c.bf16 %v890, %v889
      %s892 = scalar_lea.vmem %s3, 96
      %v893 = vld [vmem:[%s892] sm:$0xf]
      %v894 = vld [vmem:[%s892 + $0x4] sm:$0xf]
      %v895 = vld [vmem:[%s892 + $0x8] sm:$0xf]
      %v896 = vld [vmem:[%s892 + $0xc] sm:$0xf]
      %v901 = vunpack.c.l.b16 %v893
      %v902 = vunpack.c.l.b16 %v894
      %v903 = vunpack.c.l.b16 %v895
      %v904 = vunpack.c.l.b16 %v896
      %v905 = vpack.c.b16 %v902, %v901
      %v906 = vpack.c.b16 %v904, %v903
      %v910 = vsel %vm320, %v891, 0
      %912 = vmatprep.subr.bf16.mxu0 0
      %913 = vmatpush1.bf16.msra.mxu0 0
      %914 = vmatprep.subr.bf16.mxu0 0
      %915 = vmatpush1.bf16.msra.mxu0 0
      %916 = vmatprep.subr.bf16.mxu0 0
      %917 = vmatpush1.bf16.msra.mxu0 0
      %918 = vmatprep.subr.bf16.mxu0 0
      %919 = vmatpush1.bf16.msra.mxu0 0
      %920 = vmatprep.subr.bf16.mxu0 0
      %921 = vmatpush1.bf16.msra.mxu0 0
      %922 = vmatprep.subr.bf16.mxu0 0
      %923 = vmatpush1.bf16.msra.mxu0 0
      %924 = vmatprep.subr.bf16.mxu0 0
      %925 = vmatpush1.bf16.msra.mxu0 %v906
      %926 = vmatprep.subr.bf16.mxu0 0
      %927 = vmatpush1.bf16.msra.mxu0 %v905
      %928 = vmatprep.subr.bf16.mxu0 0
      %929 = vmatpush2.bf16.msra.mxu0 0
      %930 = vmatprep.subr.bf16.mxu0 0
      %931 = vmatpush2.bf16.msra.mxu0 0
      %932 = vmatprep.subr.bf16.mxu0 0
      %933 = vmatpush2.bf16.msra.mxu0 0
      %934 = vmatprep.subr.bf16.mxu0 0
      %935 = vmatpush2.bf16.msra.mxu0 0
      %936 = vmatprep.subr.bf16.mxu0 0
      %937 = vmatpush2.bf16.msra.mxu0 0
      %938 = vmatprep.subr.bf16.mxu0 0
      %939 = vmatpush2.bf16.msra.mxu0 0
      %940 = vmatprep.subr.bf16.mxu0 0
      %941 = vmatpush2.bf16.msra.mxu0 0
      %942 = vmatprep.subr.bf16.mxu0 0
      %943 = vmatpush2.bf16.msra.mxu0 0
      %944 = vmatprep.mubr.bf16.mxu0 0
      %945 = vmatmul.mubr.bf16.gmra.mxu0 %v910
      %v946 = vpop.f32.mrf.mxu0
      %v947 = vadd.f32 0.0, %v946
      %v948 = vpop.f32.mrf.mxu0
      %v949 = vpop.f32.mrf.mxu0
      %v950 = vadd.f32 0.0, %v949
      %v951 = vpop.f32.mrf.mxu0
      %952 = vdwg.mxu0
      %v953 = vadd.f32 %v886, %v947
      %v954 = vadd.f32 %v887, %v950
      %v955 = vld [vmem:[%s888 + $0x1] sm:$0xff]
      %v956 = vld [vmem:[%s888 + $0x11] sm:$0xff]
      %v957 = vpack.c.bf16 %v956, %v955
      %s958 = scalar_lea.vmem %s3, 112
      %v959 = vld [vmem:[%s958] sm:$0xf]
      %v960 = vld [vmem:[%s958 + $0x4] sm:$0xf]
      %v961 = vld [vmem:[%s958 + $0x8] sm:$0xf]
      %v962 = vld [vmem:[%s958 + $0xc] sm:$0xf]
      %v967 = vunpack.c.l.b16 %v959
      %v968 = vunpack.c.l.b16 %v960
      %v969 = vunpack.c.l.b16 %v961
      %v970 = vunpack.c.l.b16 %v962
      %v971 = vpack.c.b16 %v968, %v967
      %v972 = vpack.c.b16 %v970, %v969
      %v976 = vsel %vm320, %v957, 0
      %978 = vmatprep.subr.bf16.mxu0 0
      %979 = vmatpush1.bf16.msra.mxu0 0
      %980 = vmatprep.subr.bf16.mxu0 0
      %981 = vmatpush1.bf16.msra.mxu0 0
      %982 = vmatprep.subr.bf16.mxu0 0
      %983 = vmatpush1.bf16.msra.mxu0 0
      %984 = vmatprep.subr.bf16.mxu0 0
      %985 = vmatpush1.bf16.msra.mxu0 0
      %986 = vmatprep.subr.bf16.mxu0 0
      %987 = vmatpush1.bf16.msra.mxu0 0
      %988 = vmatprep.subr.bf16.mxu0 0
      %989 = vmatpush1.bf16.msra.mxu0 0
      %990 = vmatprep.subr.bf16.mxu0 0
      %991 = vmatpush1.bf16.msra.mxu0 %v972
      %992 = vmatprep.subr.bf16.mxu0 0
      %993 = vmatpush1.bf16.msra.mxu0 %v971
      %994 = vmatprep.subr.bf16.mxu0 0
      %995 = vmatpush2.bf16.msra.mxu0 0
      %996 = vmatprep.subr.bf16.mxu0 0
      %997 = vmatpush2.bf16.msra.mxu0 0
      %998 = vmatprep.subr.bf16.mxu0 0
      %999 = vmatpush2.bf16.msra.mxu0 0
      %1000 = vmatprep.subr.bf16.mxu0 0
      %1001 = vmatpush2.bf16.msra.mxu0 0
      %1002 = vmatprep.subr.bf16.mxu0 0
      %1003 = vmatpush2.bf16.msra.mxu0 0
      %1004 = vmatprep.subr.bf16.mxu0 0
      %1005 = vmatpush2.bf16.msra.mxu0 0
      %1006 = vmatprep.subr.bf16.mxu0 0
      %1007 = vmatpush2.bf16.msra.mxu0 0
      %1008 = vmatprep.subr.bf16.mxu0 0
      %1009 = vmatpush2.bf16.msra.mxu0 0
      %1010 = vmatprep.mubr.bf16.mxu0 0
      %1011 = vmatmul.mubr.bf16.gmra.mxu0 %v976
      %v1012 = vpop.f32.mrf.mxu0
      %v1013 = vadd.f32 0.0, %v1012
      %v1014 = vpop.f32.mrf.mxu0
      %v1015 = vpop.f32.mrf.mxu0
      %v1016 = vadd.f32 0.0, %v1015
      %v1017 = vpop.f32.mrf.mxu0
      %1018 = vdwg.mxu0
      %v1019 = vadd.f32 %v953, %v1013
      %v1020 = vadd.f32 %v954, %v1016
      %v1021 = vld [vmem:[%s888 + $0x2] sm:$0xff]
      %v1022 = vld [vmem:[%s888 + $0x12] sm:$0xff]
      %v1023 = vpack.c.bf16 %v1022, %v1021
      %s1024 = scalar_lea.vmem %s3, 128
      %v1025 = vld [vmem:[%s1024] sm:$0xf]
      %v1026 = vld [vmem:[%s1024 + $0x4] sm:$0xf]
      %v1027 = vld [vmem:[%s1024 + $0x8] sm:$0xf]
      %v1028 = vld [vmem:[%s1024 + $0xc] sm:$0xf]
      %v1033 = vunpack.c.l.b16 %v1025
      %v1034 = vunpack.c.l.b16 %v1026
      %v1035 = vunpack.c.l.b16 %v1027
      %v1036 = vunpack.c.l.b16 %v1028
      %v1037 = vpack.c.b16 %v1034, %v1033
      %v1038 = vpack.c.b16 %v1036, %v1035
      %v1042 = vsel %vm320, %v1023, 0
      %1044 = vmatprep.subr.bf16.mxu0 0
      %1045 = vmatpush1.bf16.msra.mxu0 0
      %1046 = vmatprep.subr.bf16.mxu0 0
      %1047 = vmatpush1.bf16.msra.mxu0 0
      %1048 = vmatprep.subr.bf16.mxu0 0
      %1049 = vmatpush1.bf16.msra.mxu0 0
      %1050 = vmatprep.subr.bf16.mxu0 0
      %1051 = vmatpush1.bf16.msra.mxu0 0
      %1052 = vmatprep.subr.bf16.mxu0 0
      %1053 = vmatpush1.bf16.msra.mxu0 0
      %1054 = vmatprep.subr.bf16.mxu0 0
      %1055 = vmatpush1.bf16.msra.mxu0 0
      %1056 = vmatprep.subr.bf16.mxu0 0
      %1057 = vmatpush1.bf16.msra.mxu0 %v1038
      %1058 = vmatprep.subr.bf16.mxu0 0
      %1059 = vmatpush1.bf16.msra.mxu0 %v1037
      %1060 = vmatprep.subr.bf16.mxu0 0
      %1061 = vmatpush2.bf16.msra.mxu0 0
      %1062 = vmatprep.subr.bf16.mxu0 0
      %1063 = vmatpush2.bf16.msra.mxu0 0
      %1064 = vmatprep.subr.bf16.mxu0 0
      %1065 = vmatpush2.bf16.msra.mxu0 0
      %1066 = vmatprep.subr.bf16.mxu0 0
      %1067 = vmatpush2.bf16.msra.mxu0 0
      %1068 = vmatprep.subr.bf16.mxu0 0
      %1069 = vmatpush2.bf16.msra.mxu0 0
      %1070 = vmatprep.subr.bf16.mxu0 0
      %1071 = vmatpush2.bf16.msra.mxu0 0
      %1072 = vmatprep.subr.bf16.mxu0 0
      %1073 = vmatpush2.bf16.msra.mxu0 0
      %1074 = vmatprep.subr.bf16.mxu0 0
      %1075 = vmatpush2.bf16.msra.mxu0 0
      %1076 = vmatprep.mubr.bf16.mxu0 0
      %1077 = vmatmul.mubr.bf16.gmra.mxu0 %v1042
      %v1078 = vpop.f32.mrf.mxu0
      %v1079 = vadd.f32 0.0, %v1078
      %v1080 = vpop.f32.mrf.mxu0
      %v1081 = vpop.f32.mrf.mxu0
      %v1082 = vadd.f32 0.0, %v1081
      %v1083 = vpop.f32.mrf.mxu0
      %1084 = vdwg.mxu0
      %v1085 = vadd.f32 %v1019, %v1079
      %v1086 = vadd.f32 %v1020, %v1082
      %v1087 = vld [vmem:[%s4] sm:$0x1]
      %v1089 = vlaneseq
      %v1090 = vshrl.u32 %v1089, 7
      %v1091 = vsub.s32 0, %v1090
      %v1092 = vrot.slane %v1087, %v1091
      %v1094 = vadd.f32 %v1085, %v1092
      %v1095 = vadd.f32 %v1086, %v1092
      %v1096 = vld [vmem:[%s306] sm:$0x1]
      %v1098 = vlaneseq
      %v1099 = vshrl.u32 %v1098, 7
      %v1100 = vsub.s32 0, %v1099
      %v1101 = vrot.slane %v1096, %v1100
      %v1103 = vadd.f32 %v1094, %v1101
      %v1104 = vadd.f32 %v1095, %v1101
      %v1105 = vpack.c.bf16 %v1104, %v1103
      %v1107 = vunpack.c.l.b16 %v1105
      %v1108 = vunpack.c.h.b16 %v1105
      %v1109 = vpack.c.b16 %v1107, %v1107
      %v1110 = vpack.c.b16 %v1108, %v1108
      %vm1113 = vcmask 519168
      %1114 = vst.msk [vmem:[%s315] sm:$0xf] %vm1113, %v1109
      %1115 = vst.msk [vmem:[%s315 + $0x4] sm:$0xf] %vm1113, %v1110
      %s1116 = smul.u32 2, %s22
      %p1117 = scmp.lt.s32.totalorder %s21, 1
      %s1118 = scalar_select %p1117, %s21, 1
      %p1119 = scmp.lt.s32.totalorder %s1116, 7
      %s1120 = scalar_select %p1119, %s1116, 7
      %s1121 = smul.addr %s1118, 8
      %s1122 = sadd.s32 %s1120, %s1121
      %s1123 = smul.addr %s1122, 4
      %s1124 = scalar_lea.vmem %s6, %s1123
      // Predicated region
      $region57: #{resblock_forward.7} parent=43 // pred_check
        %p1125 = pneg %p195
      $region58: #{resblock_forward.7} parent=43 // pred_check_branch
        %1127 = sbr.rel (%p1125) target = $region60
      $region59: #{resblock_forward.7} parent=43 // pred_region
        %s1128 = smul.u32 2, %s22
      $region60: #{resblock_forward.7} parent=43 // pred_fallthru
        _
    $region44: #{resblock_forward.7} parent=5 // pred_fallthru
      _
    %p1129 = scmp.le.s32.totalorder 2, %s12
    // Predicated region
    $region61: #{resblock_forward.7} parent=5 // pred_check
      %p1130 = pneg %p1129
    $region62: #{resblock_forward.7} parent=5 // pred_check_branch
      %1132 = sbr.rel (%p1130) target = $region64
    $region63: #{resblock_forward.7} parent=5 // pred_region
      %s1133 = ssub.s32 %s12, 2
      // Predicated region
      $region65: #{resblock_forward.7} parent=63 // pred_check
        %p1134 = pneg %p201
      $region66: #{resblock_forward.7} parent=63 // pred_check_branch
        %1136 = sbr.rel (%p1134) target = $region68
      $region67: #{resblock_forward.7} parent=63 // pred_region
        %s1137 = smul.u32 2, %s24
        %p1138 = scmp.lt.s32.totalorder %s23, 1
        %s1139 = scalar_select %p1138, %s23, 1
        %p1140 = scmp.lt.s32.totalorder %s1137, 7
        %s1141 = scalar_select %p1140, %s1137, 7
        %s1142 = smul.addr %s1139, 8
        %s1143 = sadd.s32 %s1141, %s1142
        %s1144 = smul.addr %s1143, 4
        %s1145 = scalar_lea.vmem %s6, %s1144
      $region68: #{resblock_forward.7} parent=63 // pred_fallthru
        _
    $region64: #{resblock_forward.7} parent=5 // pred_fallthru
      _
  $region6: #{resblock_forward.7} parent=0 // loop_footer
    %s16 = sadd.s32 1, %s12
  $region7: #{resblock_forward.7} parent=0 // loop_footer_branch
    %11 = sbr.rel target = $region3
  $region8: #{resblock_forward.7} parent=0 // loop_exit
    _

// kernel: resblock_forward.9
$region0: #{resblock_forward.9}
  #allocation0 [shape = 'u32[]', space=smem, size = 0x4, offset = 0x4, fixed_abs, tag = 'smem constant byte address 0x4 - core index']
  #allocation1 [shape = 'u32[144,128]{1,0:T(1,128)}', space=vmem, size = 0x12000, scoped, tag = 'internal scratch']
  #allocation2 [shape = 'f32[4,10,64]{2,1,0:T(8,128)}', space=vmem, size = 0x8000, scoped, tag = 'scratch operand']
  %s0 = inlined_call_operand.vmem [shape: bf16[2,8,8,64], index: 0, kind: input, shape index: {}]
  %s1 = inlined_call_operand.vmem [shape: f32[2,1,64], index: 1, kind: input, shape index: {}]
  %s2 = inlined_call_operand.vmem [shape: f32[2,1,64], index: 2, kind: input, shape index: {}]
  %s3 = inlined_call_operand.vmem [shape: bf16[3,3,64,64], index: 3, kind: input, shape index: {}]
  %s4 = inlined_call_operand.vmem [shape: f32[1,64], index: 4, kind: input, shape index: {}]
  %s5 = inlined_call_operand.vmem [shape: f32[2,8,8,32], index: 5, kind: input, shape index: {}]
  %s6 = inlined_call_operand.vmem [shape: bf16[32,64], index: 6, kind: input, shape index: {}]
  %s7 = inlined_call_operand.vmem [shape: f32[1,64], index: 7, kind: input, shape index: {}]
  %s8 = inlined_call_operand.hbm [shape: f32[2,64,64], index: 8, kind: output, shape index: {}]
  %s9 = sld [smem:[#allocation0]]
  $region77: #{resblock_forward.9} parent=0
    _
  %s11 = ssub.s32 1, %s9
  %s12 = scalar_select 0, %s11, %s9
  $region1: #{resblock_forward.9} parent=0
    #allocation3 [shape = 'u8[16384]{0}', space=vmem, size = 0x4000, scoped, tag = 'output window, operand 0']
    #allocation4 [shape = 's32[2]{0}', space=sflag, size = 0x8, scoped, tag = 'scoped memory for resblock_forward.9']
    %13 = vsyncpa [#allocation4], 0
    %s14 = scalar_lea.sflag [#allocation4], 1
    %15 = vsyncpa %s14, 0
    loop: start=0, step=1, limit=10
    $region2: #{resblock_forward.9} parent=1 // loop_pre_header
      _
    $region3: #{resblock_forward.9} parent=1 // loop_header
      %s17 = sphi 0, %s21
      %p18 = scmp.ge.s32.totalorder %s17, 10
      %s24 = sphi 0, %s36
      %s25 = sphi 0, %s32
      %s26 = sphi 0, %s24
      %s27 = sphi 0, %s25
      %s28 = sphi 0, %s26
      %s29 = sphi 0, %s27
      %s39 = sphi 0, %s41
      %s42 = sphi 0, %s39
      %s43 = sphi 0, %s42
      %s59 = sphi 0, %s43
      %s65 = sphi 0, %s67
      %s68 = sphi 0, %s65
      %s69 = sphi 0, %s68
      %s85 = sphi 0, %s69
      %s91 = sphi 0, %s93
      %s94 = sphi 0, %s91
      %s95 = sphi 0, %s94
      %s111 = sphi 0, %s95
      %s115 = sphi 0, %s115
      %s117 = sphi 0, %s115
      %s118 = sphi 0, %s117
      %s132 = sphi 0, %s118
      %s136 = sphi 0, %s136
      %s138 = sphi 0, %s136
      %s139 = sphi 0, %s138
      %s153 = sphi 0, %s139
      %s161 = sphi 0, %s163
      %s164 = sphi 0, %s161
      %s165 = sphi 0, %s164
      %s181 = sphi 0, %s165
      %s185 = sphi 0, %s185
      %s187 = sphi 0, %s185
      %s188 = sphi 0, %s187
      %s202 = sphi 0, %s188
      %s206 = sphi 0, %s206
      %s208 = sphi 0, %s206
      %s209 = sphi 0, %s208
      %s223 = sphi 0, %s209
      %s231 = sphi 0, %s233
      %s234 = sphi 0, %s231
      %s235 = sphi 0, %s234
      %s251 = sphi 0, %s235
    $region4: #{resblock_forward.9} parent=1 // loop_header_branch
      %20 = sbr.rel (%p18) target = $region8
    $region5: #{resblock_forward.9} parent=1 // loop_body
      %s22 = ssub.s32 %s17, 1
      %s23 = ssub.s32 %s17, 2
      %s30 = sadd.s32 1, %s25
      %p31 = scmp.ge.s32.totalorder %s30, 4
      %s32 = scalar_select %p31, 0, %s30
      %s33 = sadd.s32 1, %s24
      %s34 = scalar_select %p31, %s33, %s24
      %p35 = scmp.ge.s32.totalorder %s34, 2
      %s36 = scalar_select %p35, 0, %s34
      %s37 = ssub.s32 %s24, %s36
      %p38 = scmp.eq.s32.totalorder %s37, 0
      %s40 = sadd.s32 %s39, 1
      %s41 = scalar_select %p38, %s39, %s40
      %p44 = pneg %p38
      %p45 = scmp.eq.s32.totalorder %s17, 7
      %p46 = por %p44, %p45
      %p47 = scmp.ne.s32.totalorder %s39, %s42
      %p48 = scmp.eq.s32.totalorder %s17, 0
      %p49 = por %p47, %p48
      %p50 = scmp.ne.s32.totalorder %s39, %s42
      %p51 = scmp.eq.s32.totalorder %s22, 7
      %p52 = por %p50, %p51
      %p53 = scmp.ne.s32.totalorder %s42, %s43
      %p54 = scmp.eq.s32.totalorder %s22, 0
      %p55 = por %p53, %p54
      %p56 = scmp.ne.s32.totalorder %s42, %s43
      %p57 = scmp.eq.s32.totalorder %s23, 7
      %p58 = por %p56, %p57
      %p60 = scmp.ne.s32.totalorder %s43, %s59
      %p61 = scmp.eq.s32.totalorder %s23, 0
      %p62 = por %p60, %p61
      %s63 = ssub.s32 %s24, %s36
      %p64 = scmp.eq.s32.totalorder %s63, 0
      %s66 = sadd.s32 %s65, 1
      %s67 = scalar_select %p64, %s65, %s66
      %p70 = pneg %p64
      %p71 = scmp.eq.s32.totalorder %s17, 7
      %p72 = por %p70, %p71
      %p73 = scmp.ne.s32.totalorder %s65, %s68
      %p74 = scmp.eq.s32.totalorder %s17, 0
      %p75 = por %p73, %p74
      %p76 = scmp.ne.s32.totalorder %s65, %s68
      %p77 = scmp.eq.s32.totalorder %s22, 7
      %p78 = por %p76, %p77
      %p79 = scmp.ne.s32.totalorder %s68, %s69
      %p80 = scmp.eq.s32.totalorder %s22, 0
      %p81 = por %p79, %p80
      %p82 = scmp.ne.s32.totalorder %s68, %s69
      %p83 = scmp.eq.s32.totalorder %s23, 7
      %p84 = por %p82, %p83
      %p86 = scmp.ne.s32.totalorder %s69, %s85
      %p87 = scmp.eq.s32.totalorder %s23, 0
      %p88 = por %p86, %p87
      %s89 = ssub.s32 %s24, %s36
      %p90 = scmp.eq.s32.totalorder %s89, 0
      %s92 = sadd.s32 %s91, 1
      %s93 = scalar_select %p90, %s91, %s92
      %p96 = pneg %p90
      %p97 = scmp.eq.s32.totalorder %s17, 7
      %p98 = por %p96, %p97
      %p99 = scmp.ne.s32.totalorder %s91, %s94
      %p100 = scmp.eq.s32.totalorder %s17, 0
      %p101 = por %p99, %p100
      %p102 = scmp.ne.s32.totalorder %s91, %s94
      %p103 = scmp.eq.s32.totalorder %s22, 7
      %p104 = por %p102, %p103
      %p105 = scmp.ne.s32.totalorder %s94, %s95
      %p106 = scmp.eq.s32.totalorder %s22, 0
      %p107 = por %p105, %p106
      %p108 = scmp.ne.s32.totalorder %s94, %s95
      %p109 = scmp.eq.s32.totalorder %s23, 7
      %p110 = por %p108, %p109
      %p112 = scmp.ne.s32.totalorder %s95, %s111
      %p113 = scmp.eq.s32.totalorder %s23, 0
      %p114 = por %p112, %p113
      %s116 = sadd.s32 %s115, 1
      %p119 = scmp.eq.s32.totalorder %s17, 7
      %p120 = scmp.ne.s32.totalorder %s115, %s117
      %p121 = scmp.eq.s32.totalorder %s17, 0
      %p122 = por %p120, %p121
      %p123 = scmp.ne.s32.totalorder %s115, %s117
      %p124 = scmp.eq.s32.totalorder %s22, 7
      %p125 = por %p123, %p124
      %p126 = scmp.ne.s32.totalorder %s117, %s118
      %p127 = scmp.eq.s32.totalorder %s22, 0
      %p128 = por %p126, %p127
      %p129 = scmp.ne.s32.totalorder %s117, %s118
      %p130 = scmp.eq.s32.totalorder %s23, 7
      %p131 = por %p129, %p130
      %p133 = scmp.ne.s32.totalorder %s118, %s132
      %p134 = scmp.eq.s32.totalorder %s23, 0
      %p135 = por %p133, %p134
      %s137 = sadd.s32 %s136, 1
      %p140 = scmp.eq.s32.totalorder %s17, 7
      %p141 = scmp.ne.s32.totalorder %s136, %s138
      %p142 = scmp.eq.s32.totalorder %s17, 0
      %p143 = por %p141, %p142
      %p144 = scmp.ne.s32.totalorder %s136, %s138
      %p145 = scmp.eq.s32.totalorder %s22, 7
      %p146 = por %p144, %p145
      %p147 = scmp.ne.s32.totalorder %s138, %s139
      %p148 = scmp.eq.s32.totalorder %s22, 0
      %p149 = por %p147, %p148
      %p150 = scmp.ne.s32.totalorder %s138, %s139
      %p151 = scmp.eq.s32.totalorder %s23, 7
      %p152 = por %p150, %p151
      %p154 = scmp.ne.s32.totalorder %s139, %s153
      %p155 = scmp.eq.s32.totalorder %s23, 0
      %p156 = por %p154, %p155
      %s157 = ssub.s32 %s24, %s36
      %s158 = ssub.s32 %s25, %s32
      %s159 = sor.u32 %s157, %s158
      %p160 = scmp.eq.s32.totalorder %s159, 0
      %s162 = sadd.s32 %s161, 1
      %s163 = scalar_select %p160, %s161, %s162
      %p166 = pneg %p160
      %p167 = scmp.eq.s32.totalorder %s17, 7
      %p168 = por %p166, %p167
      %p169 = scmp.ne.s32.totalorder %s161, %s164
      %p170 = scmp.eq.s32.totalorder %s17, 0
      %p171 = por %p169, %p170
      %p172 = scmp.ne.s32.totalorder %s161, %s164
      %p173 = scmp.eq.s32.totalorder %s22, 7
      %p174 = por %p172, %p173
      %p175 = scmp.ne.s32.totalorder %s164, %s165
      %p176 = scmp.eq.s32.totalorder %s22, 0
      %p177 = por %p175, %p176
      %p178 = scmp.ne.s32.totalorder %s164, %s165
      %p179 = scmp.eq.s32.totalorder %s23, 7
      %p180 = por %p178, %p179
      %p182 = scmp.ne.s32.totalorder %s165, %s181
      %p183 = scmp.eq.s32.totalorder %s23, 0
      %p184 = por %p182, %p183
      %s186 = sadd.s32 %s185, 1
      %p189 = scmp.eq.s32.totalorder %s17, 7
      %p190 = scmp.ne.s32.totalorder %s185, %s187
      %p191 = scmp.eq.s32.totalorder %s17, 0
      %p192 = por %p190, %p191
      %p193 = scmp.ne.s32.totalorder %s185, %s187
      %p194 = scmp.eq.s32.totalorder %s22, 7
      %p195 = por %p193, %p194
      %p196 = scmp.ne.s32.totalorder %s187, %s188
      %p197 = scmp.eq.s32.totalorder %s22, 0
      %p198 = por %p196, %p197
      %p199 = scmp.ne.s32.totalorder %s187, %s188
      %p200 = scmp.eq.s32.totalorder %s23, 7
      %p201 = por %p199, %p200
      %p203 = scmp.ne.s32.totalorder %s188, %s202
      %p204 = scmp.eq.s32.totalorder %s23, 0
      %p205 = por %p203, %p204
      %s207 = sadd.s32 %s206, 1
      %p210 = scmp.eq.s32.totalorder %s17, 7
      %p211 = scmp.ne.s32.totalorder %s206, %s208
      %p212 = scmp.eq.s32.totalorder %s17, 0
      %p213 = por %p211, %p212
      %p214 = scmp.ne.s32.totalorder %s206, %s208
      %p215 = scmp.eq.s32.totalorder %s22, 7
      %p216 = por %p214, %p215
      %p217 = scmp.ne.s32.totalorder %s208, %s209
      %p218 = scmp.eq.s32.totalorder %s22, 0
      %p219 = por %p217, %p218
      %p220 = scmp.ne.s32.totalorder %s208, %s209
      %p221 = scmp.eq.s32.totalorder %s23, 7
      %p222 = por %p220, %p221
      %p224 = scmp.ne.s32.totalorder %s209, %s223
      %p225 = scmp.eq.s32.totalorder %s23, 0
      %p226 = por %p224, %p225
      %s227 = ssub.s32 %s24, %s36
      %s228 = ssub.s32 %s25, %s32
      %s229 = sor.u32 %s227, %s228
      %p230 = scmp.eq.s32.totalorder %s229, 0
      %s232 = sadd.s32 %s231, 1
      %s233 = scalar_select %p230, %s231, %s232
      %p236 = pneg %p230
      %p237 = scmp.eq.s32.totalorder %s17, 7
      %p238 = por %p236, %p237
      %p239 = scmp.ne.s32.totalorder %s231, %s234
      %p240 = scmp.eq.s32.totalorder %s17, 0
      %p241 = por %p239, %p240
      %p242 = scmp.ne.s32.totalorder %s231, %s234
      %p243 = scmp.eq.s32.totalorder %s22, 7
      %p244 = por %p242, %p243
      %p245 = scmp.ne.s32.totalorder %s234, %s235
      %p246 = scmp.eq.s32.totalorder %s22, 0
      %p247 = por %p245, %p246
      %p248 = scmp.ne.s32.totalorder %s234, %s235
      %p249 = scmp.eq.s32.totalorder %s23, 7
      %p250 = por %p248, %p249
      %p252 = scmp.ne.s32.totalorder %s235, %s251
      %p253 = scmp.eq.s32.totalorder %s23, 0
      %p254 = por %p252, %p253
      %p255 = scmp.le.s32.totalorder 1, %s17
      %p256 = scmp.lt.s32.totalorder %s17, 9
      %p257 = pnand %p255, %p256
      %p258 = pneg %p257
      // Predicated region
      $region9: #{resblock_forward.9} parent=5 // pred_check
        _
      $region10: #{resblock_forward.9} parent=5 // pred_check_branch
        %260 = sbr.rel (%p257) target = $region12
      $region11: #{resblock_forward.9} parent=5 // pred_region
        %s261 = ssub.s32 %s17, 1
        // Predicated region
        $region13: #{resblock_forward.9} parent=11 // pred_check
          %p262 = pneg %p128
        $region14: #{resblock_forward.9} parent=11 // pred_check_branch
          %264 = sbr.rel (%p262) target = $region16
        $region15: #{resblock_forward.9} parent=11 // pred_region
          _
        $region16: #{resblock_forward.9} parent=11 // pred_fallthru
          _
        // Predicated region
        $region17: #{resblock_forward.9} parent=11 // pred_check
          %p265 = pneg %p149
        $region18: #{resblock_forward.9} parent=11 // pred_check_branch
          %267 = sbr.rel (%p265) target = $region20
        $region19: #{resblock_forward.9} parent=11 // pred_region
          _
        $region20: #{resblock_forward.9} parent=11 // pred_fallthru
          _
        // Predicated region
        $region21: #{resblock_forward.9} parent=11 // pred_check
          %p268 = pneg %p198
        $region22: #{resblock_forward.9} parent=11 // pred_check_branch
          %270 = sbr.rel (%p268) target = $region24
        $region23: #{resblock_forward.9} parent=11 // pred_region
          _
        $region24: #{resblock_forward.9} parent=11 // pred_fallthru
          _
        // Predicated region
        $region25: #{resblock_forward.9} parent=11 // pred_check
          %p271 = pneg %p219
        $region26: #{resblock_forward.9} parent=11 // pred_check_branch
          %273 = sbr.rel (%p271) target = $region28
        $region27: #{resblock_forward.9} parent=11 // pred_region
          _
        $region28: #{resblock_forward.9} parent=11 // pred_fallthru
          _
      $region12: #{resblock_forward.9} parent=5 // pred_fallthru
        _
      %p274 = scmp.lt.s32.totalorder %s17, 8
      // Predicated region
      $region29: #{resblock_forward.9} parent=5 // pred_check
        %p275 = pneg %p274
      $region30: #{resblock_forward.9} parent=5 // pred_check_branch
        %277 = sbr.rel (%p275) target = $region32
      $region31: #{resblock_forward.9} parent=5 // pred_region
        // Predicated region
        $region33: #{resblock_forward.9} parent=31 // pred_check
          %p278 = pneg %p49
        $region34: #{resblock_forward.9} parent=31 // pred_check_branch
          %280 = sbr.rel (%p278) target = $region36
        $region35: #{resblock_forward.9} parent=31 // pred_region
          %p281 = scmp.lt.s32.totalorder %s24, 1
          %s282 = scalar_select %p281, %s24, 1
          %s283 = smul.addr %s282, 8
          %s284 = smul.addr %s283, 4
          %s285 = scalar_lea.vmem %s0, %s284
        $region36: #{resblock_forward.9} parent=31 // pred_fallthru
          _
        // Predicated region
        $region37: #{resblock_forward.9} parent=31 // pred_check
          %p286 = pneg %p75
        $region38: #{resblock_forward.9} parent=31 // pred_check_branch
          %288 = sbr.rel (%p286) target = $region40
        $region39: #{resblock_forward.9} parent=31 // pred_region
          %p289 = scmp.lt.s32.totalorder %s24, 1
          %s290 = scalar_select %p289, %s24, 1
          %s291 = scalar_lea.vmem %s1, %s290
        $region40: #{resblock_forward.9} parent=31 // pred_fallthru
          _
        // Predicated region
        $region41: #{resblock_forward.9} parent=31 // pred_check
          %p292 = pneg %p101
        $region42: #{resblock_forward.9} parent=31 // pred_check_branch
          %294 = sbr.rel (%p292) target = $region44
        $region43: #{resblock_forward.9} parent=31 // pred_region
          %p295 = scmp.lt.s32.totalorder %s24, 1
          %s296 = scalar_select %p295, %s24, 1
          %s297 = scalar_lea.vmem %s2, %s296
        $region44: #{resblock_forward.9} parent=31 // pred_fallthru
          _
        // Predicated region
        $region45: #{resblock_forward.9} parent=31 // pred_check
          %p298 = pneg %p171
        $region46: #{resblock_forward.9} parent=31 // pred_check_branch
          %300 = sbr.rel (%p298) target = $region48
        $region47: #{resblock_forward.9} parent=31 // pred_region
          %s301 = smul.u32 2, %s25
          %p302 = scmp.lt.s32.totalorder %s24, 1
          %s303 = scalar_select %p302, %s24, 1
          %p304 = scmp.lt.s32.totalorder %s301, 7
          %s305 = scalar_select %p304, %s301, 7
          %s306 = smul.addr %s303, 8
          %s307 = sadd.s32 %s305, %s306
          %s308 = smul.addr %s307, 8
          %s309 = scalar_lea.vmem %s5, %s308
          %s310 = smul.u32 2, %s25
        $region48: #{resblock_forward.9} parent=31 // pred_fallthru
          _
      $region32: #{resblock_forward.9} parent=5 // pred_fallthru
        _
      %p311 = scmp.le.s32.totalorder 1, %s17
      %p312 = scmp.lt.s32.totalorder %s17, 9
      %p313 = pnand %p311, %p312
      %p314 = pneg %p313
      // Predicated region
      $region49: #{resblock_forward.9} parent=5 // pred_check
        _
      $region50: #{resblock_forward.9} parent=5 // pred_check_branch
        %316 = sbr.rel (%p313) target = $region52
      $region51: #{resblock_forward.9} parent=5 // pred_region
        %s317 = ssub.s32 %s17, 1
        %p318 = scmp.lt.s32.totalorder %s26, 1
        %s319 = scalar_select %p318, %s26, 1
        %s320 = smul.addr %s319, 8
        %s321 = smul.addr %s320, 4
        %s322 = scalar_lea.vmem %s0, %s321
        %p323 = pneg %p55
        %p324 = pneg %p52
        %p325 = scmp.lt.s32.totalorder %s26, 1
        %s326 = scalar_select %p325, %s26, 1
        %s327 = scalar_lea.vmem %s1, %s326
        %p328 = pneg %p81
        %p329 = pneg %p78
        %p330 = scmp.lt.s32.totalorder %s26, 1
        %s331 = scalar_select %p330, %s26, 1
        %s332 = scalar_lea.vmem %s2, %s331
        %p333 = pneg %p107
        %p334 = pneg %p104
        %p335 = pneg %p128
        %p336 = pneg %p125
        %p337 = pneg %p149
        %p338 = pneg %p146
        %s339 = smul.u32 2, %s27
        %p340 = scmp.lt.s32.totalorder %s26, 1
        %s341 = scalar_select %p340, %s26, 1
        %p342 = scmp.lt.s32.totalorder %s339, 7
        %s343 = scalar_select %p342, %s339, 7
        %s344 = smul.addr %s341, 8
        %s345 = sadd.s32 %s343, %s344
        %s346 = smul.addr %s345, 8
        %s347 = scalar_lea.vmem %s5, %s346
        %p348 = pneg %p177
        %p349 = pneg %p174
        %p350 = pneg %p198
        %p351 = pneg %p195
        %p352 = pneg %p219
        %p353 = pneg %p216
        %p354 = pneg %p247
        %p355 = pneg %p244
        %s356 = sand.u32 %s234, 1
        %s357 = scalar_lea.sflag [#allocation4], %s356
        %s358 = sand.u32 %s234, 1
        %s359 = smul.addr %s358, 16
        %s360 = scalar_lea.vmem [#allocation3], %s359
        %p361 = scmp.lt.s32.totalorder %s26, 1
        %s362 = scalar_select %p361, %s26, 1
        %s363 = smul.addr %s362, 8
        %s364 = smul.addr %s363, 4
        %s365 = scalar_lea.vmem %s0, %s364
        %p366 = scmp.lt.s32.totalorder %s26, 1
        %s367 = scalar_select %p366, %s26, 1
        %s368 = scalar_lea.vmem %s1, %s367
        %p369 = scmp.lt.s32.totalorder %s26, 1
        %s370 = scalar_select %p369, %s26, 1
        %s371 = scalar_lea.vmem %s2, %s370
        %s372 = smul.u32 2, %s27
        %p373 = scmp.lt.s32.totalorder %s26, 1
        %s374 = scalar_select %p373, %s26, 1
        %p375 = scmp.lt.s32.totalorder %s372, 7
        %s376 = scalar_select %p375, %s372, 7
        %s377 = smul.addr %s374, 8
        %s378 = sadd.s32 %s376, %s377
        %s379 = smul.addr %s378, 8
        %s380 = scalar_lea.vmem %s5, %s379
        %s381 = smul.u32 2, %s27
        %s382 = smul.u32 2, %s27
        %v384 = vld [vmem:[%s368] sm:$0x1]
        %v385 = vld [vmem:[%s371] sm:$0x1]
        %vm386 = vcmask 523264
        %387 = vst.msk [vmem:[#allocation2] sm:$0xff] %vm386, 0.0
        %vm388 = vcmask 517120
        %389 = vst.msk [vmem:[#allocation2 + $0x8] sm:$0x3] %vm388, 0.0
        %390 = vst.msk [vmem:[#allocation2 + $0x10] sm:$0xff] %vm386, 0.0
        %391 = vst.msk [vmem:[#allocation2 + $0x18] sm:$0x3] %vm388, 0.0
        %392 = vst.msk [vmem:[#allocation2 + $0x20] sm:$0xff] %vm386, 0.0
        %393 = vst.msk [vmem:[#allocation2 + $0x28] sm:$0x3] %vm388, 0.0
        %394 = vst.msk [vmem:[#allocation2 + $0x30] sm:$0xff] %vm386, 0.0
        %395 = vst.msk [vmem:[#allocation2 + $0x38] sm:$0x3] %vm388, 0.0
        %p396 = scmp.eq.s32.totalorder %s27, 0
        // Predicated region
        $region53: #{resblock_forward.9} parent=51 // pred_check
          %p397 = pneg %p396
        $region54: #{resblock_forward.9} parent=51 // pred_check_branch
          %399 = sbr.rel (%p397) target = $region56
        $region55: #{resblock_forward.9} parent=51 // pred_region
          %v400 = vld [vmem:[%s365] sm:$0xf]
          %v401 = vld [vmem:[%s365 + $0x4] sm:$0xf]
          %v402 = vld [vmem:[%s365 + $0x8] sm:$0xf]
          %v403 = vunpack.c.l.bf16 %v400
          %v404 = vunpack.c.l.bf16 %v401
          %v405 = vunpack.c.l.bf16 %v402
          %v407 = vlaneseq
          %v408 = vshrl.u32 %v407, 7
          %v409 = vsub.s32 0, %v408
          %v410 = vrot.slane %v384, %v409
          %v412 = vmul.f32 %v403, %v410
          %v413 = vmul.f32 %v404, %v410
          %v414 = vmul.f32 %v405, %v410
          %v416 = vlaneseq
          %v417 = vshrl.u32 %v416, 7
          %v418 = vsub.s32 0, %v417
          %v419 = vrot.slane %v385, %v418
          %v421 = vadd.f32 %v412, %v419
          %v422 = vadd.f32 %v413, %v419
          %v423 = vadd.f32 %v414, %v419
          %v424 = vxor.u32 %v421, 2147483648
          %v425 = vxor.u32 %v422, 2147483648
          %v426 = vxor.u32 %v423, 2147483648
          %v427 = vmul.f32 %v424, 1.442695
          %v428 = vpow.pop %v427
          %v429 = vmul.f32 %v425, 1.442695
          %v430 = vpow.pop %v429
          %v431 = vmul.f32 %v426, 1.442695
          %v432 = vpow.pop %v431
          %v433 = vadd.f32 %v428, 1.0
          %v434 = vadd.f32 %v430, 1.0
          %v435 = vadd.f32 %v432, 1.0
          %v436 = vrcp.pop %v433
          %v437 = vmul.f32 1.0, %v436
          %v438 = vrcp.pop %v434
          %v439 = vmul.f32 1.0, %v438
          %v440 = vrcp.pop %v435
          %v441 = vmul.f32 1.0, %v440
          %v442 = vmul.f32 %v421, %v437
          %v443 = vmul.f32 %v422, %v439
          %v444 = vmul.f32 %v423, %v441
          %s445 = scalar_lea.vmem [#allocation2], 16
          %446 = vst.msk [vmem:[%s445 + $0x1] sm:$0xff] %vm386, %v442
          %447 = vst.msk [vmem:[%s445 + $0x11] sm:$0xff] %vm386, %v443
          %448 = vst.msk [vmem:[%s445 + $0x21] sm:$0xff] %vm386, %v444
        $region56: #{resblock_forward.9} parent=51 // pred_fallthru
          _
        %p449 = scmp.eq.s32.totalorder %s27, 3
        // Predicated region
        $region57: #{resblock_forward.9} parent=51 // pred_check
          %p450 = pneg %p449
        $region58: #{resblock_forward.9} parent=51 // pred_check_branch
          %452 = sbr.rel (%p450) target = $region60
        $region59: #{resblock_forward.9} parent=51 // pred_region
          %s453 = scalar_lea.vmem %s365, 20
          %v454 = vld [vmem:[%s453] sm:$0xf]
          %v455 = vld [vmem:[%s453 + $0x4] sm:$0xf]
          %v456 = vld [vmem:[%s453 + $0x8] sm:$0xf]
          %v457 = vunpack.c.l.bf16 %v454
          %v458 = vunpack.c.l.bf16 %v455
          %v459 = vunpack.c.l.bf16 %v456
          %v461 = vlaneseq
          %v462 = vshrl.u32 %v461, 7
          %v463 = vsub.s32 0, %v462
          %v464 = vrot.slane %v384, %v463
          %v466 = vmul.f32 %v457, %v464
          %v467 = vmul.f32 %v458, %v464
          %v468 = vmul.f32 %v459, %v464
          %v470 = vlaneseq
          %v471 = vshrl.u32 %v470, 7
          %v472 = vsub.s32 0, %v471
          %v473 = vrot.slane %v385, %v472
          %v475 = vadd.f32 %v466, %v473
          %v476 = vadd.f32 %v467, %v473
          %v477 = vadd.f32 %v468, %v473
          %v478 = vxor.u32 %v475, 2147483648
          %v479 = vxor.u32 %v476, 2147483648
          %v480 = vxor.u32 %v477, 2147483648
          %v481 = vmul.f32 %v478, 1.442695
          %v482 = vpow.pop %v481
          %v483 = vmul.f32 %v479, 1.442695
          %v484 = vpow.pop %v483
          %v485 = vmul.f32 %v480, 1.442695
          %v486 = vpow.pop %v485
          %v487 = vadd.f32 %v482, 1.0
          %v488 = vadd.f32 %v484, 1.0
          %v489 = vadd.f32 %v486, 1.0
          %v490 = vrcp.pop %v487
          %v491 = vmul.f32 1.0, %v490
          %v492 = vrcp.pop %v488
          %v493 = vmul.f32 1.0, %v492
          %v494 = vrcp.pop %v489
          %v495 = vmul.f32 1.0, %v494
          %v496 = vmul.f32 %v475, %v491
          %v497 = vmul.f32 %v476, %v493
          %v498 = vmul.f32 %v477, %v495
          %499 = vst.msk [vmem:[#allocation2 + $0x1] sm:$0xff] %vm386, %v496
          %500 = vst.msk [vmem:[#allocation2 + $0x11] sm:$0xff] %vm386, %v497
          %501 = vst.msk [vmem:[#allocation2 + $0x21] sm:$0xff] %vm386, %v498
        $region60: #{resblock_forward.9} parent=51 // pred_fallthru
          _
        %p502 = scmp.gt.s32.totalorder %s27, 0
        %p503 = scmp.lt.s32.totalorder %s27, 3
        %p504 = pnand %p502, %p503
        %p505 = pneg %p504
        // Predicated region
        $region61: #{resblock_forward.9} parent=51 // pred_check
          _
        $region62: #{resblock_forward.9} parent=51 // pred_check_branch
          %507 = sbr.rel (%p504) target = $region64
        $region63: #{resblock_forward.9} parent=51 // pred_region
          %s508 = smul.u32 %s27, 2
          %s509 = ssub.s32 %s508, 1
          %s510 = smul.addr %s509, 4
          %s511 = scalar_lea.vmem %s365, %s510
          %v512 = vld [vmem:[%s511] sm:$0xf]
          %v513 = vld [vmem:[%s511 + $0x4] sm:$0xf]
          %v514 = vld [vmem:[%s511 + $0x8] sm:$0xf]
          %v515 = vld [vmem:[%s511 + $0xc] sm:$0xf]
          %v516 = vunpack.c.l.bf16 %v512
          %v517 = vunpack.c.l.bf16 %v513
          %v518 = vunpack.c.l.bf16 %v514
          %v519 = vunpack.c.l.bf16 %v515
          %v521 = vlaneseq
          %v522 = vshrl.u32 %v521, 7
          %v523 = vsub.s32 0, %v522
          %v524 = vrot.slane %v384, %v523
          %v526 = vmul.f32 %v516, %v524
          %v527 = vmul.f32 %v517, %v524
          %v528 = vmul.f32 %v518, %v524
          %v529 = vmul.f32 %v519, %v524
          %v531 = vlaneseq
          %v532 = vshrl.u32 %v531, 7
          %v533 = vsub.s32 0, %v532
          %v534 = vrot.slane %v385, %v533
          %v536 = vadd.f32 %v526, %v534
          %v537 = vadd.f32 %v527, %v534
          %v538 = vadd.f32 %v528, %v534
          %v539 = vadd.f32 %v529, %v534
          %v540 = vxor.u32 %v536, 2147483648
          %v541 = vxor.u32 %v537, 2147483648
          %v542 = vxor.u32 %v538, 2147483648
          %v543 = vxor.u32 %v539, 2147483648
          %v544 = vmul.f32 %v540, 1.442695
          %v545 = vpow.pop %v544
          %v546 = vmul.f32 %v541, 1.442695
          %v547 = vpow.pop %v546
          %v548 = vmul.f32 %v542, 1.442695
          %v549 = vpow.pop %v548
          %v550 = vmul.f32 %v543, 1.442695
          %v551 = vpow.pop %v550
          %v552 = vadd.f32 %v545, 1.0
          %v553 = vadd.f32 %v547, 1.0
          %v554 = vadd.f32 %v549, 1.0
          %v555 = vadd.f32 %v551, 1.0
          %v556 = vrcp.pop %v552
          %v557 = vmul.f32 1.0, %v556
          %v558 = vrcp.pop %v553
          %v559 = vmul.f32 1.0, %v558
          %v560 = vrcp.pop %v554
          %v561 = vmul.f32 1.0, %v560
          %v562 = vrcp.pop %v555
          %v563 = vmul.f32 1.0, %v562
          %v564 = vmul.f32 %v536, %v557
          %v565 = vmul.f32 %v537, %v559
          %v566 = vmul.f32 %v538, %v561
          %v567 = vmul.f32 %v539, %v563
          %568 = vst.msk [vmem:[#allocation2 + $0x1] sm:$0xff] %vm386, %v564
          %569 = vst.msk [vmem:[#allocation2 + $0x11] sm:$0xff] %vm386, %v565
          %570 = vst.msk [vmem:[#allocation2 + $0x21] sm:$0xff] %vm386, %v566
          %571 = vst.msk [vmem:[#allocation2 + $0x31] sm:$0xff] %vm386, %v567
        $region64: #{resblock_forward.9} parent=51 // pred_fallthru
          _
        %v572 = vld [vmem:[#allocation2] sm:$0xff]
        %v573 = vld [vmem:[#allocation2 + $0x10] sm:$0xff]
        %v574 = vpack.c.bf16 %v573, %v572
        %v575 = vld [vmem:[%s3] sm:$0xf]
        %v576 = vld [vmem:[%s3 + $0x4] sm:$0xf]
        %v577 = vld [vmem:[%s3 + $0x8] sm:$0xf]
        %v578 = vld [vmem:[%s3 + $0xc] sm:$0xf]
        %v579 = vld [vmem:[%s3 + $0x10] sm:$0xf]
        %v580 = vld [vmem:[%s3 + $0x14] sm:$0xf]
        %v581 = vld [vmem:[%s3 + $0x18] sm:$0xf]
        %v582 = vld [vmem:[%s3 + $0x1c] sm:$0xf]
        %v583 = vld [vmem:[#allocation2 + $0x1] sm:$0xff]
        %v584 = vld [vmem:[#allocation2 + $0x11] sm:$0xff]
        %v585 = vpack.c.bf16 %v584, %v583
        %s586 = scalar_lea.vmem %s3, 32
        %v587 = vld [vmem:[%s586] sm:$0xf]
        %v588 = vld [vmem:[%s586 + $0x4] sm:$0xf]
        %v589 = vld [vmem:[%s586 + $0x8] sm:$0xf]
        %v590 = vld [vmem:[%s586 + $0xc] sm:$0xf]
        %v591 = vld [vmem:[%s586 + $0x10] sm:$0xf]
        %v592 = vld [vmem:[%s586 + $0x14] sm:$0xf]
        %v593 = vld [vmem:[%s586 + $0x18] sm:$0xf]
        %v594 = vld [vmem:[%s586 + $0x1c] sm:$0xf]
        %v603 = vunpack.c.l.b16 %v587
        %v604 = vunpack.c.l.b16 %v588
        %v605 = vunpack.c.l.b16 %v589
        %v606 = vunpack.c.l.b16 %v590
        %v607 = vunpack.c.l.b16 %v591
        %v608 = vunpack.c.l.b16 %v592
        %v609 = vunpack.c.l.b16 %v593
        %v610 = vunpack.c.l.b16 %v594
        %v611 = vpack.c.b16 %v604, %v603
        %v612 = vpack.c.b16 %v606, %v605
        %v613 = vpack.c.b16 %v608, %v607
        %v614 = vpack.c.b16 %v610, %v609
        %v620 = vsel %vm386, %v585, 0
        %622 = vmatprep.subr.bf16.mxu0 0
        %623 = vmatpush1.bf16.msra.mxu0 0
        %624 = vmatprep.subr.bf16.mxu0 0
        %625 = vmatpush1.bf16.msra.mxu0 0
        %626 = vmatprep.subr.bf16.mxu0 0
        %627 = vmatpush1.bf16.msra.mxu0 0
        %628 = vmatprep.subr.bf16.mxu0 0
        %629 = vmatpush1.bf16.msra.mxu0 0
        %630 = vmatprep.subr.bf16.mxu0 0
        %631 = vmatpush1.bf16.msra.mxu0 %v614
        %632 = vmatprep.subr.bf16.mxu0 0
        %633 = vmatpush1.bf16.msra.mxu0 %v613
        %634 = vmatprep.subr.bf16.mxu0 0
        %635 = vmatpush1.bf16.msra.mxu0 %v612
        %636 = vmatprep.subr.bf16.mxu0 0
        %637 = vmatpush1.bf16.msra.mxu0 %v611
        %638 = vmatprep.subr.bf16.mxu0 0
        %639 = vmatpush2.bf16.msra.mxu0 0
        %640 = vmatprep.subr.bf16.mxu0 0
        %641 = vmatpush2.bf16.msra.mxu0 0
        %642 = vmatprep.subr.bf16.mxu0 0
        %643 = vmatpush2.bf16.msra.mxu0 0
        %644 = vmatprep.subr.bf16.mxu0 0
        %645 = vmatpush2.bf16.msra.mxu0 0
        %646 = vmatprep.subr.bf16.mxu0 0
        %647 = vmatpush2.bf16.msra.mxu0 0
        %648 = vmatprep.subr.bf16.mxu0 0
        %649 = vmatpush2.bf16.msra.mxu0 0
        %650 = vmatprep.subr.bf16.mxu0 0
        %651 = vmatpush2.bf16.msra.mxu0 0
        %652 = vmatprep.subr.bf16.mxu0 0
        %653 = vmatpush2.bf16.msra.mxu0 0
        %654 = vmatprep.mubr.bf16.mxu0 0
        %655 = vmatmul.mubr.bf16.gmra.mxu0 %v620
        %v656 = vpop.f32.mrf.mxu0
        %v657 = vadd.f32 0.0, %v656
        %v658 = vpop.f32.mrf.mxu0
        %v659 = vpop.f32.mrf.mxu0
        %v660 = vadd.f32 0.0, %v659
        %v661 = vpop.f32.mrf.mxu0
        %662 = vdwg.mxu0
        %v671 = vunpack.c.l.b16 %v575
        %v672 = vunpack.c.l.b16 %v576
        %v673 = vunpack.c.l.b16 %v577
        %v674 = vunpack.c.l.b16 %v578
        %v675 = vunpack.c.l.b16 %v579
        %v676 = vunpack.c.l.b16 %v580
        %v677 = vunpack.c.l.b16 %v581
        %v678 = vunpack.c.l.b16 %v582
        %v679 = vpack.c.b16 %v672, %v671
        %v680 = vpack.c.b16 %v674, %v673
        %v681 = vpack.c.b16 %v676, %v675
        %v682 = vpack.c.b16 %v678, %v677
        %v688 = vsel %vm386, %v574, 0
        %690 = vmatprep.subr.bf16.mxu0 0
        %691 = vmatpush1.bf16.msra.mxu0 0
        %692 = vmatprep.subr.bf16.mxu0 0
        %693 = vmatpush1.bf16.msra.mxu0 0
        %694 = vmatprep.subr.bf16.mxu0 0
        %695 = vmatpush1.bf16.msra.mxu0 0
        %696 = vmatprep.subr.bf16.mxu0 0
        %697 = vmatpush1.bf16.msra.mxu0 0
        %698 = vmatprep.subr.bf16.mxu0 0
        %699 = vmatpush1.bf16.msra.mxu0 %v682
        %700 = vmatprep.subr.bf16.mxu0 0
        %701 = vmatpush1.bf16.msra.mxu0 %v681
        %702 = vmatprep.subr.bf16.mxu0 0
        %703 = vmatpush1.bf16.msra.mxu0 %v680
        %704 = vmatprep.subr.bf16.mxu0 0
        %705 = vmatpush1.bf16.msra.mxu0 %v679
        %706 = vmatprep.subr.bf16.mxu0 0
        %707 = vmatpush2.bf16.msra.mxu0 0
        %708 = vmatprep.subr.bf16.mxu0 0
        %709 = vmatpush2.bf16.msra.mxu0 0
        %710 = vmatprep.subr.bf16.mxu0 0
        %711 = vmatpush2.bf16.msra.mxu0 0
        %712 = vmatprep.subr.bf16.mxu0 0
        %713 = vmatpush2.bf16.msra.mxu0 0
        %714 = vmatprep.subr.bf16.mxu0 0
        %715 = vmatpush2.bf16.msra.mxu0 0
        %716 = vmatprep.subr.bf16.mxu0 0
        %717 = vmatpush2.bf16.msra.mxu0 0
        %718 = vmatprep.subr.bf16.mxu0 0
        %719 = vmatpush2.bf16.msra.mxu0 0
        %720 = vmatprep.subr.bf16.mxu0 0
        %721 = vmatpush2.bf16.msra.mxu0 0
        %722 = vmatprep.mubr.bf16.mxu0 0
        %723 = vmatmul.mubr.bf16.gmra.mxu0 %v688
        %v724 = vpop.f32.mrf.mxu0
        %v725 = vadd.f32 %v657, %v724
        %v726 = vpop.f32.mrf.mxu0
        %v727 = vpop.f32.mrf.mxu0
        %v728 = vadd.f32 %v660, %v727
        %v729 = vpop.f32.mrf.mxu0
        %730 = vdwg.mxu0
        %v731 = vld [vmem:[#allocation2 + $0x2] sm:$0xff]
        %v732 = vld [vmem:[#allocation2 + $0x12] sm:$0xff]
        %v733 = vpack.c.bf16 %v732, %v731
        %s734 = scalar_lea.vmem %s3, 64
        %v735 = vld [vmem:[%s734] sm:$0xf]
        %v736 = vld [vmem:[%s734 + $0x4] sm:$0xf]
        %v737 = vld [vmem:[%s734 + $0x8] sm:$0xf]
        %v738 = vld [vmem:[%s734 + $0xc] sm:$0xf]
        %v739 = vld [vmem:[%s734 + $0x10] sm:$0xf]
        %v740 = vld [vmem:[%s734 + $0x14] sm:$0xf]
        %v741 = vld [vmem:[%s734 + $0x18] sm:$0xf]
        %v742 = vld [vmem:[%s734 + $0x1c] sm:$0xf]
        %v751 = vunpack.c.l.b16 %v735
        %v752 = vunpack.c.l.b16 %v736
        %v753 = vunpack.c.l.b16 %v737
        %v754 = vunpack.c.l.b16 %v738
        %v755 = vunpack.c.l.b16 %v739
        %v756 = vunpack.c.l.b16 %v740
        %v757 = vunpack.c.l.b16 %v741
        %v758 = vunpack.c.l.b16 %v742
        %v759 = vpack.c.b16 %v752, %v751
        %v760 = vpack.c.b16 %v754, %v753
        %v761 = vpack.c.b16 %v756, %v755
        %v762 = vpack.c.b16 %v758, %v757
        %v768 = vsel %vm386, %v733, 0
        %770 = vmatprep.subr.bf16.mxu0 0
        %771 = vmatpush1.bf16.msra.mxu0 0
        %772 = vmatprep.subr.bf16.mxu0 0
        %773 = vmatpush1.bf16.msra.mxu0 0
        %774 = vmatprep.subr.bf16.mxu0 0
        %775 = vmatpush1.bf16.msra.mxu0 0
        %776 = vmatprep.subr.bf16.mxu0 0
        %777 = vmatpush1.bf16.msra.mxu0 0
        %778 = vmatprep.subr.bf16.mxu0 0
        %779 = vmatpush1.bf16.msra.mxu0 %v762
        %780 = vmatprep.subr.bf16.mxu0 0
        %781 = vmatpush1.bf16.msra.mxu0 %v761
        %782 = vmatprep.subr.bf16.mxu0 0
        %783 = vmatpush1.bf16.msra.mxu0 %v760
        %784 = vmatprep.subr.bf16.mxu0 0
        %785 = vmatpush1.bf16.msra.mxu0 %v759
        %786 = vmatprep.subr.bf16.mxu0 0
        %787 = vmatpush2.bf16.msra.mxu0 0
        %788 = vmatprep.subr.bf16.mxu0 0
        %789 = vmatpush2.bf16.msra.mxu0 0
        %790 = vmatprep.subr.bf16.mxu0 0
        %791 = vmatpush2.bf16.msra.mxu0 0
        %792 = vmatprep.subr.bf16.mxu0 0
        %793 = vmatpush2.bf16.msra.mxu0 0
        %794 = vmatprep.subr.bf16.mxu0 0
        %795 = vmatpush2.bf16.msra.mxu0 0
        %796 = vmatprep.subr.bf16.mxu0 0
        %797 = vmatpush2.bf16.msra.mxu0 0
        %798 = vmatprep.subr.bf16.mxu0 0
        %799 = vmatpush2.bf16.msra.mxu0 0
        %800 = vmatprep.subr.bf16.mxu0 0
        %801 = vmatpush2.bf16.msra.mxu0 0
        %802 = vmatprep.mubr.bf16.mxu0 0
        %803 = vmatmul.mubr.bf16.gmra.mxu0 %v768
        %v804 = vpop.f32.mrf.mxu0
        %v805 = vadd.f32 0.0, %v804
        %v806 = vpop.f32.mrf.mxu0
        %v807 = vpop.f32.mrf.mxu0
        %v808 = vadd.f32 0.0, %v807
        %v809 = vpop.f32.mrf.mxu0
        %810 = vdwg.mxu0
        %v811 = vadd.f32 %v725, %v805
        %v812 = vadd.f32 %v728, %v808
        %s813 = scalar_lea.vmem [#allocation2], 16
        %v814 = vld [vmem:[%s813] sm:$0xff]
        %v815 = vld [vmem:[%s813 + $0x10] sm:$0xff]
        %v816 = vpack.c.bf16 %v815, %v814
        %s817 = scalar_lea.vmem %s3, 96
        %v818 = vld [vmem:[%s817] sm:$0xf]
        %v819 = vld [vmem:[%s817 + $0x4] sm:$0xf]
        %v820 = vld [vmem:[%s817 + $0x8] sm:$0xf]
        %v821 = vld [vmem:[%s817 + $0xc] sm:$0xf]
        %v822 = vld [vmem:[%s817 + $0x10] sm:$0xf]
        %v823 = vld [vmem:[%s817 + $0x14] sm:$0xf]
        %v824 = vld [vmem:[%s817 + $0x18] sm:$0xf]
        %v825 = vld [vmem:[%s817 + $0x1c] sm:$0xf]
        %v834 = vunpack.c.l.b16 %v818
        %v835 = vunpack.c.l.b16 %v819
        %v836 = vunpack.c.l.b16 %v820
        %v837 = vunpack.c.l.b16 %v821
        %v838 = vunpack.c.l.b16 %v822
        %v839 = vunpack.c.l.b16 %v823
        %v840 = vunpack.c.l.b16 %v824
        %v841 = vunpack.c.l.b16 %v825
        %v842 = vpack.c.b16 %v835, %v834
        %v843 = vpack.c.b16 %v837, %v836
        %v844 = vpack.c.b16 %v839, %v838
        %v845 = vpack.c.b16 %v841, %v840
        %v851 = vsel %vm386, %v816, 0
        %853 = vmatprep.subr.bf16.mxu0 0
        %854 = vmatpush1.bf16.msra.mxu0 0
        %855 = vmatprep.subr.bf16.mxu0 0
        %856 = vmatpush1.bf16.msra.mxu0 0
        %857 = vmatprep.subr.bf16.mxu0 0
        %858 = vmatpush1.bf16.msra.mxu0 0
        %859 = vmatprep.subr.bf16.mxu0 0
        %860 = vmatpush1.bf16.msra.mxu0 0
        %861 = vmatprep.subr.bf16.mxu0 0
        %862 = vmatpush1.bf16.msra.mxu0 %v845
        %863 = vmatprep.subr.bf16.mxu0 0
        %864 = vmatpush1.bf16.msra.mxu0 %v844
        %865 = vmatprep.subr.bf16.mxu0 0
        %866 = vmatpush1.bf16.msra.mxu0 %v843
        %867 = vmatprep.subr.bf16.mxu0 0
        %868 = vmatpush1.bf16.msra.mxu0 %v842
        %869 = vmatprep.subr.bf16.mxu0 0
        %870 = vmatpush2.bf16.msra.mxu0 0
        %871 = vmatprep.subr.bf16.mxu0 0
        %872 = vmatpush2.bf16.msra.mxu0 0
        %873 = vmatprep.subr.bf16.mxu0 0
        %874 = vmatpush2.bf16.msra.mxu0 0
        %875 = vmatprep.subr.bf16.mxu0 0
        %876 = vmatpush2.bf16.msra.mxu0 0
        %877 = vmatprep.subr.bf16.mxu0 0
        %878 = vmatpush2.bf16.msra.mxu0 0
        %879 = vmatprep.subr.bf16.mxu0 0
        %880 = vmatpush2.bf16.msra.mxu0 0
        %881 = vmatprep.subr.bf16.mxu0 0
        %882 = vmatpush2.bf16.msra.mxu0 0
        %883 = vmatprep.subr.bf16.mxu0 0
        %884 = vmatpush2.bf16.msra.mxu0 0
        %885 = vmatprep.mubr.bf16.mxu0 0
        %886 = vmatmul.mubr.bf16.gmra.mxu0 %v851
        %v887 = vpop.f32.mrf.mxu0
        %v888 = vadd.f32 0.0, %v887
        %v889 = vpop.f32.mrf.mxu0
        %v890 = vpop.f32.mrf.mxu0
        %v891 = vadd.f32 0.0, %v890
        %v892 = vpop.f32.mrf.mxu0
        %893 = vdwg.mxu0
        %v894 = vadd.f32 %v811, %v888
        %v895 = vadd.f32 %v812, %v891
        %v896 = vld [vmem:[%s813 + $0x1] sm:$0xff]
        %v897 = vld [vmem:[%s813 + $0x11] sm:$0xff]
        %v898 = vpack.c.bf16 %v897, %v896
        %s899 = scalar_lea.vmem %s3, 128
        %v900 = vld [vmem:[%s899] sm:$0xf]
        %v901 = vld [vmem:[%s899 + $0x4] sm:$0xf]
        %v902 = vld [vmem:[%s899 + $0x8] sm:$0xf]
        %v903 = vld [vmem:[%s899 + $0xc] sm:$0xf]
        %v904 = vld [vmem:[%s899 + $0x10] sm:$0xf]
        %v905 = vld [vmem:[%s899 + $0x14] sm:$0xf]
        %v906 = vld [vmem:[%s899 + $0x18] sm:$0xf]
        %v907 = vld [vmem:[%s899 + $0x1c] sm:$0xf]
        %v916 = vunpack.c.l.b16 %v900
        %v917 = vunpack.c.l.b16 %v901
        %v918 = vunpack.c.l.b16 %v902
        %v919 = vunpack.c.l.b16 %v903
        %v920 = vunpack.c.l.b16 %v904
        %v921 = vunpack.c.l.b16 %v905
        %v922 = vunpack.c.l.b16 %v906
        %v923 = vunpack.c.l.b16 %v907
        %v924 = vpack.c.b16 %v917, %v916
        %v925 = vpack.c.b16 %v919, %v918
        %v926 = vpack.c.b16 %v921, %v920
        %v927 = vpack.c.b16 %v923, %v922
        %v933 = vsel %vm386, %v898, 0
        %935 = vmatprep.subr.bf16.mxu0 0
        %936 = vmatpush1.bf16.msra.mxu0 0
        %937 = vmatprep.subr.bf16.mxu0 0
        %938 = vmatpush1.bf16.msra.mxu0 0
        %939 = vmatprep.subr.bf16.mxu0 0
        %940 = vmatpush1.bf16.msra.mxu0 0
        %941 = vmatprep.subr.bf16.mxu0 0
        %942 = vmatpush1.bf16.msra.mxu0 0
        %943 = vmatprep.subr.bf16.mxu0 0
        %944 = vmatpush1.bf16.msra.mxu0 %v927
        %945 = vmatprep.subr.bf16.mxu0 0
        %946 = vmatpush1.bf16.msra.mxu0 %v926
        %947 = vmatprep.subr.bf16.mxu0 0
        %948 = vmatpush1.bf16.msra.mxu0 %v925
        %949 = vmatprep.subr.bf16.mxu0 0
        %950 = vmatpush1.bf16.msra.mxu0 %v924
        %951 = vmatprep.subr.bf16.mxu0 0
        %952 = vmatpush2.bf16.msra.mxu0 0
        %953 = vmatprep.subr.bf16.mxu0 0
        %954 = vmatpush2.bf16.msra.mxu0 0
        %955 = vmatprep.subr.bf16.mxu0 0
        %956 = vmatpush2.bf16.msra.mxu0 0
        %957 = vmatprep.subr.bf16.mxu0 0
        %958 = vmatpush2.bf16.msra.mxu0 0
        %959 = vmatprep.subr.bf16.mxu0 0
        %960 = vmatpush2.bf16.msra.mxu0 0
        %961 = vmatprep.subr.bf16.mxu0 0
        %962 = vmatpush2.bf16.msra.mxu0 0
        %963 = vmatprep.subr.bf16.mxu0 0
        %964 = vmatpush2.bf16.msra.mxu0 0
        %965 = vmatprep.subr.bf16.mxu0 0
        %966 = vmatpush2.bf16.msra.mxu0 0
        %967 = vmatprep.mubr.bf16.mxu0 0
        %968 = vmatmul.mubr.bf16.gmra.mxu0 %v933
        %v969 = vpop.f32.mrf.mxu0
        %v970 = vadd.f32 0.0, %v969
        %v971 = vpop.f32.mrf.mxu0
        %v972 = vpop.f32.mrf.mxu0
        %v973 = vadd.f32 0.0, %v972
        %v974 = vpop.f32.mrf.mxu0
        %975 = vdwg.mxu0
        %v976 = vadd.f32 %v894, %v970
        %v977 = vadd.f32 %v895, %v973
        %v978 = vld [vmem:[%s813 + $0x2] sm:$0xff]
        %v979 = vld [vmem:[%s813 + $0x12] sm:$0xff]
        %v980 = vpack.c.bf16 %v979, %v978
        %s981 = scalar_lea.vmem %s3, 160
        %v982 = vld [vmem:[%s981] sm:$0xf]
        %v983 = vld [vmem:[%s981 + $0x4] sm:$0xf]
        %v984 = vld [vmem:[%s981 + $0x8] sm:$0xf]
        %v985 = vld [vmem:[%s981 + $0xc] sm:$0xf]
        %v986 = vld [vmem:[%s981 + $0x10] sm:$0xf]
        %v987 = vld [vmem:[%s981 + $0x14] sm:$0xf]
        %v988 = vld [vmem:[%s981 + $0x18] sm:$0xf]
        %v989 = vld [vmem:[%s981 + $0x1c] sm:$0xf]
        %v998 = vunpack.c.l.b16 %v982
        %v999 = vunpack.c.l.b16 %v983
        %v1000 = vunpack.c.l.b16 %v984
        %v1001 = vunpack.c.l.b16 %v985
        %v1002 = vunpack.c.l.b16 %v986
        %v1003 = vunpack.c.l.b16 %v987
        %v1004 = vunpack.c.l.b16 %v988
        %v1005 = vunpack.c.l.b16 %v989
        %v1006 = vpack.c.b16 %v999, %v998
        %v1007 = vpack.c.b16 %v1001, %v1000
        %v1008 = vpack.c.b16 %v1003, %v1002
        %v1009 = vpack.c.b16 %v1005, %v1004
        %v1015 = vsel %vm386, %v980, 0
        %1017 = vmatprep.subr.bf16.mxu0 0
        %1018 = vmatpush1.bf16.msra.mxu0 0
        %1019 = vmatprep.subr.bf16.mxu0 0
        %1020 = vmatpush1.bf16.msra.mxu0 0
        %1021 = vmatprep.subr.bf16.mxu0 0
        %1022 = vmatpush1.bf16.msra.mxu0 0
        %1023 = vmatprep.subr.bf16.mxu0 0
        %1024 = vmatpush1.bf16.msra.mxu0 0
        %1025 = vmatprep.subr.bf16.mxu0 0
        %1026 = vmatpush1.bf16.msra.mxu0 %v1009
        %1027 = vmatprep.subr.bf16.mxu0 0
        %1028 = vmatpush1.bf16.msra.mxu0 %v1008
        %1029 = vmatprep.subr.bf16.mxu0 0
        %1030 = vmatpush1.bf16.msra.mxu0 %v1007
        %1031 = vmatprep.subr.bf16.mxu0 0
        %1032 = vmatpush1.bf16.msra.mxu0 %v1006
        %1033 = vmatprep.subr.bf16.mxu0 0
        %1034 = vmatpush2.bf16.msra.mxu0 0
        %1035 = vmatprep.subr.bf16.mxu0 0
        %1036 = vmatpush2.bf16.msra.mxu0 0
        %1037 = vmatprep.subr.bf16.mxu0 0
        %1038 = vmatpush2.bf16.msra.mxu0 0
        %1039 = vmatprep.subr.bf16.mxu0 0
        %1040 = vmatpush2.bf16.msra.mxu0 0
        %1041 = vmatprep.subr.bf16.mxu0 0
        %1042 = vmatpush2.bf16.msra.mxu0 0
        %1043 = vmatprep.subr.bf16.mxu0 0
        %1044 = vmatpush2.bf16.msra.mxu0 0
        %1045 = vmatprep.subr.bf16.mxu0 0
        %1046 = vmatpush2.bf16.msra.mxu0 0
        %1047 = vmatprep.subr.bf16.mxu0 0
        %1048 = vmatpush2.bf16.msra.mxu0 0
        %1049 = vmatprep.mubr.bf16.mxu0 0
        %1050 = vmatmul.mubr.bf16.gmra.mxu0 %v1015
        %v1051 = vpop.f32.mrf.mxu0
        %v1052 = vadd.f32 0.0, %v1051
        %v1053 = vpop.f32.mrf.mxu0
        %v1054 = vpop.f32.mrf.mxu0
        %v1055 = vadd.f32 0.0, %v1054
        %v1056 = vpop.f32.mrf.mxu0
        %1057 = vdwg.mxu0
        %v1058 = vadd.f32 %v976, %v1052
        %v1059 = vadd.f32 %v977, %v1055
        %s1060 = scalar_lea.vmem [#allocation2], 32
        %v1061 = vld [vmem:[%s1060] sm:$0xff]
        %v1062 = vld [vmem:[%s1060 + $0x10] sm:$0xff]
        %v1063 = vpack.c.bf16 %v1062, %v1061
        %s1064 = scalar_lea.vmem %s3, 192
        %v1065 = vld [vmem:[%s1064] sm:$0xf]
        %v1066 = vld [vmem:[%s1064 + $0x4] sm:$0xf]
        %v1067 = vld [vmem:[%s1064 + $0x8] sm:$0xf]
        %v1068 = vld [vmem:[%s1064 + $0xc] sm:$0xf]
        %v1069 = vld [vmem:[%s1064 + $0x10] sm:$0xf]
        %v1070 = vld [vmem:[%s1064 + $0x14] sm:$0xf]
        %v1071 = vld [vmem:[%s1064 + $0x18] sm:$0xf]
        %v1072 = vld [vmem:[%s1064 + $0x1c] sm:$0xf]
        %v1081 = vunpack.c.l.b16 %v1065
        %v1082 = vunpack.c.l.b16 %v1066
        %v1083 = vunpack.c.l.b16 %v1067
        %v1084 = vunpack.c.l.b16 %v1068
        %v1085 = vunpack.c.l.b16 %v1069
        %v1086 = vunpack.c.l.b16 %v1070
        %v1087 = vunpack.c.l.b16 %v1071
        %v1088 = vunpack.c.l.b16 %v1072
        %v1089 = vpack.c.b16 %v1082, %v1081
        %v1090 = vpack.c.b16 %v1084, %v1083
        %v1091 = vpack.c.b16 %v1086, %v1085
        %v1092 = vpack.c.b16 %v1088, %v1087
        %v1098 = vsel %vm386, %v1063, 0
        %1100 = vmatprep.subr.bf16.mxu0 0
        %1101 = vmatpush1.bf16.msra.mxu0 0
        %1102 = vmatprep.subr.bf16.mxu0 0
        %1103 = vmatpush1.bf16.msra.mxu0 0
        %1104 = vmatprep.subr.bf16.mxu0 0
        %1105 = vmatpush1.bf16.msra.mxu0 0
        %1106 = vmatprep.subr.bf16.mxu0 0
        %1107 = vmatpush1.bf16.msra.mxu0 0
        %1108 = vmatprep.subr.bf16.mxu0 0
        %1109 = vmatpush1.bf16.msra.mxu0 %v1092
        %1110 = vmatprep.subr.bf16.mxu0 0
        %1111 = vmatpush1.bf16.msra.mxu0 %v1091
        %1112 = vmatprep.subr.bf16.mxu0 0
        %1113 = vmatpush1.bf16.msra.mxu0 %v1090
        %1114 = vmatprep.subr.bf16.mxu0 0
        %1115 = vmatpush1.bf16.msra.mxu0 %v1089
        %1116 = vmatprep.subr.bf16.mxu0 0
        %1117 = vmatpush2.bf16.msra.mxu0 0
        %1118 = vmatprep.subr.bf16.mxu0 0
        %1119 = vmatpush2.bf16.msra.mxu0 0
        %1120 = vmatprep.subr.bf16.mxu0 0
        %1121 = vmatpush2.bf16.msra.mxu0 0
        %1122 = vmatprep.subr.bf16.mxu0 0
        %1123 = vmatpush2.bf16.msra.mxu0 0
        %1124 = vmatprep.subr.bf16.mxu0 0
        %1125 = vmatpush2.bf16.msra.mxu0 0
        %1126 = vmatprep.subr.bf16.mxu0 0
        %1127 = vmatpush2.bf16.msra.mxu0 0
        %1128 = vmatprep.subr.bf16.mxu0 0
        %1129 = vmatpush2.bf16.msra.mxu0 0
        %1130 = vmatprep.subr.bf16.mxu0 0
        %1131 = vmatpush2.bf16.msra.mxu0 0
        %1132 = vmatprep.mubr.bf16.mxu0 0
        %1133 = vmatmul.mubr.bf16.gmra.mxu0 %v1098
        %v1134 = vpop.f32.mrf.mxu0
        %v1135 = vadd.f32 0.0, %v1134
        %v1136 = vpop.f32.mrf.mxu0
        %v1137 = vpop.f32.mrf.mxu0
        %v1138 = vadd.f32 0.0, %v1137
        %v1139 = vpop.f32.mrf.mxu0
        %1140 = vdwg.mxu0
        %v1141 = vadd.f32 %v1058, %v1135
        %v1142 = vadd.f32 %v1059, %v1138
        %v1143 = vld [vmem:[%s1060 + $0x1] sm:$0xff]
        %v1144 = vld [vmem:[%s1060 + $0x11] sm:$0xff]
        %v1145 = vpack.c.bf16 %v1144, %v1143
        %s1146 = scalar_lea.vmem %s3, 224
        %v1147 = vld [vmem:[%s1146] sm:$0xf]
        %v1148 = vld [vmem:[%s1146 + $0x4] sm:$0xf]
        %v1149 = vld [vmem:[%s1146 + $0x8] sm:$0xf]
        %v1150 = vld [vmem:[%s1146 + $0xc] sm:$0xf]
        %v1151 = vld [vmem:[%s1146 + $0x10] sm:$0xf]
        %v1152 = vld [vmem:[%s1146 + $0x14] sm:$0xf]
        %v1153 = vld [vmem:[%s1146 + $0x18] sm:$0xf]
        %v1154 = vld [vmem:[%s1146 + $0x1c] sm:$0xf]
        %v1163 = vunpack.c.l.b16 %v1147
        %v1164 = vunpack.c.l.b16 %v1148
        %v1165 = vunpack.c.l.b16 %v1149
        %v1166 = vunpack.c.l.b16 %v1150
        %v1167 = vunpack.c.l.b16 %v1151
        %v1168 = vunpack.c.l.b16 %v1152
        %v1169 = vunpack.c.l.b16 %v1153
        %v1170 = vunpack.c.l.b16 %v1154
        %v1171 = vpack.c.b16 %v1164, %v1163
        %v1172 = vpack.c.b16 %v1166, %v1165
        %v1173 = vpack.c.b16 %v1168, %v1167
        %v1174 = vpack.c.b16 %v1170, %v1169
        %v1180 = vsel %vm386, %v1145, 0
        %1182 = vmatprep.subr.bf16.mxu0 0
        %1183 = vmatpush1.bf16.msra.mxu0 0
        %1184 = vmatprep.subr.bf16.mxu0 0
        %1185 = vmatpush1.bf16.msra.mxu0 0
        %1186 = vmatprep.subr.bf16.mxu0 0
        %1187 = vmatpush1.bf16.msra.mxu0 0
        %1188 = vmatprep.subr.bf16.mxu0 0
        %1189 = vmatpush1.bf16.msra.mxu0 0
        %1190 = vmatprep.subr.bf16.mxu0 0
        %1191 = vmatpush1.bf16.msra.mxu0 %v1174
        %1192 = vmatprep.subr.bf16.mxu0 0
        %1193 = vmatpush1.bf16.msra.mxu0 %v1173
        %1194 = vmatprep.subr.bf16.mxu0 0
        %1195 = vmatpush1.bf16.msra.mxu0 %v1172
        %1196 = vmatprep.subr.bf16.mxu0 0
        %1197 = vmatpush1.bf16.msra.mxu0 %v1171
        %1198 = vmatprep.subr.bf16.mxu0 0
        %1199 = vmatpush2.bf16.msra.mxu0 0
        %1200 = vmatprep.subr.bf16.mxu0 0
        %1201 = vmatpush2.bf16.msra.mxu0 0
        %1202 = vmatprep.subr.bf16.mxu0 0
        %1203 = vmatpush2.bf16.msra.mxu0 0
        %1204 = vmatprep.subr.bf16.mxu0 0
        %1205 = vmatpush2.bf16.msra.mxu0 0
        %1206 = vmatprep.subr.bf16.mxu0 0
        %1207 = vmatpush2.bf16.msra.mxu0 0
        %1208 = vmatprep.subr.bf16.mxu0 0
        %1209 = vmatpush2.bf16.msra.mxu0 0
        %1210 = vmatprep.subr.bf16.mxu0 0
        %1211 = vmatpush2.bf16.msra.mxu0 0
        %1212 = vmatprep.subr.bf16.mxu0 0
        %1213 = vmatpush2.bf16.msra.mxu0 0
        %1214 = vmatprep.mubr.bf16.mxu0 0
        %1215 = vmatmul.mubr.bf16.gmra.mxu0 %v1180
        %v1216 = vpop.f32.mrf.mxu0
        %v1217 = vadd.f32 0.0, %v1216
        %v1218 = vpop.f32.mrf.mxu0
        %v1219 = vpop.f32.mrf.mxu0
        %v1220 = vadd.f32 0.0, %v1219
        %v1221 = vpop.f32.mrf.mxu0
        %1222 = vdwg.mxu0
        %v1223 = vadd.f32 %v1141, %v1217
        %v1224 = vadd.f32 %v1142, %v1220
        %v1225 = vld [vmem:[%s1060 + $0x2] sm:$0xff]
        %v1226 = vld [vmem:[%s1060 + $0x12] sm:$0xff]
        %v1227 = vpack.c.bf16 %v1226, %v1225
        %s1228 = scalar_lea.vmem %s3, 256
        %v1229 = vld [vmem:[%s1228] sm:$0xf]
        %v1230 = vld [vmem:[%s1228 + $0x4] sm:$0xf]
        %v1231 = vld [vmem:[%s1228 + $0x8] sm:$0xf]
        %v1232 = vld [vmem:[%s1228 + $0xc] sm:$0xf]
        %v1233 = vld [vmem:[%s1228 + $0x10] sm:$0xf]
        %v1234 = vld [vmem:[%s1228 + $0x14] sm:$0xf]
        %v1235 = vld [vmem:[%s1228 + $0x18] sm:$0xf]
        %v1236 = vld [vmem:[%s1228 + $0x1c] sm:$0xf]
        %v1245 = vunpack.c.l.b16 %v1229
        %v1246 = vunpack.c.l.b16 %v1230
        %v1247 = vunpack.c.l.b16 %v1231
        %v1248 = vunpack.c.l.b16 %v1232
        %v1249 = vunpack.c.l.b16 %v1233
        %v1250 = vunpack.c.l.b16 %v1234
        %v1251 = vunpack.c.l.b16 %v1235
        %v1252 = vunpack.c.l.b16 %v1236
        %v1253 = vpack.c.b16 %v1246, %v1245
        %v1254 = vpack.c.b16 %v1248, %v1247
        %v1255 = vpack.c.b16 %v1250, %v1249
        %v1256 = vpack.c.b16 %v1252, %v1251
        %v1262 = vsel %vm386, %v1227, 0
        %1264 = vmatprep.subr.bf16.mxu0 0
        %1265 = vmatpush1.bf16.msra.mxu0 0
        %1266 = vmatprep.subr.bf16.mxu0 0
        %1267 = vmatpush1.bf16.msra.mxu0 0
        %1268 = vmatprep.subr.bf16.mxu0 0
        %1269 = vmatpush1.bf16.msra.mxu0 0
        %1270 = vmatprep.subr.bf16.mxu0 0
        %1271 = vmatpush1.bf16.msra.mxu0 0
        %1272 = vmatprep.subr.bf16.mxu0 0
        %1273 = vmatpush1.bf16.msra.mxu0 %v1256
        %1274 = vmatprep.subr.bf16.mxu0 0
        %1275 = vmatpush1.bf16.msra.mxu0 %v1255
        %1276 = vmatprep.subr.bf16.mxu0 0
        %1277 = vmatpush1.bf16.msra.mxu0 %v1254
        %1278 = vmatprep.subr.bf16.mxu0 0
        %1279 = vmatpush1.bf16.msra.mxu0 %v1253
        %1280 = vmatprep.subr.bf16.mxu0 0
        %1281 = vmatpush2.bf16.msra.mxu0 0
        %1282 = vmatprep.subr.bf16.mxu0 0
        %1283 = vmatpush2.bf16.msra.mxu0 0
        %1284 = vmatprep.subr.bf16.mxu0 0
        %1285 = vmatpush2.bf16.msra.mxu0 0
        %1286 = vmatprep.subr.bf16.mxu0 0
        %1287 = vmatpush2.bf16.msra.mxu0 0
        %1288 = vmatprep.subr.bf16.mxu0 0
        %1289 = vmatpush2.bf16.msra.mxu0 0
        %1290 = vmatprep.subr.bf16.mxu0 0
        %1291 = vmatpush2.bf16.msra.mxu0 0
        %1292 = vmatprep.subr.bf16.mxu0 0
        %1293 = vmatpush2.bf16.msra.mxu0 0
        %1294 = vmatprep.subr.bf16.mxu0 0
        %1295 = vmatpush2.bf16.msra.mxu0 0
        %1296 = vmatprep.mubr.bf16.mxu0 0
        %1297 = vmatmul.mubr.bf16.gmra.mxu0 %v1262
        %v1298 = vpop.f32.mrf.mxu0
        %v1299 = vadd.f32 0.0, %v1298
        %v1300 = vpop.f32.mrf.mxu0
        %v1301 = vpop.f32.mrf.mxu0
        %v1302 = vadd.f32 0.0, %v1301
        %v1303 = vpop.f32.mrf.mxu0
        %1304 = vdwg.mxu0
        %v1305 = vadd.f32 %v1223, %v1299
        %v1306 = vadd.f32 %v1224, %v1302
        %v1307 = vld [vmem:[%s380] sm:$0xff]
        %v1308 = vld [vmem:[%s380 + $0x8] sm:$0xff]
        %v1309 = vpack.c.bf16 %v1308, %v1307
        %v1310 = vld [vmem:[%s6] sm:$0xf]
        %v1311 = vld [vmem:[%s6 + $0x4] sm:$0xf]
        %v1312 = vld [vmem:[%s6 + $0x8] sm:$0xf]
        %v1313 = vld [vmem:[%s6 + $0xc] sm:$0xf]
        %v1314 = vld [vmem:[%s7] sm:$0x1]
        %v1316 = vlaneseq
        %v1317 = vshrl.u32 %v1316, 7
        %v1318 = vsub.s32 0, %v1317
        %v1319 = vrot.slane %v1314, %v1318
        %v1325 = vunpack.c.l.b16 %v1310
        %v1326 = vunpack.c.l.b16 %v1311
        %v1327 = vunpack.c.l.b16 %v1312
        %v1328 = vunpack.c.l.b16 %v1313
        %v1329 = vpack.c.b16 %v1326, %v1325
        %v1330 = vpack.c.b16 %v1328, %v1327
        %vm1333 = vcmask 261120
        %v1335 = vsel %vm1333, %v1309, 0
        %1337 = vmatprep.subr.bf16.mxu0 0
        %1338 = vmatpush1.bf16.msra.mxu0 0
        %1339 = vmatprep.subr.bf16.mxu0 0
        %1340 = vmatpush1.bf16.msra.mxu0 0
        %1341 = vmatprep.subr.bf16.mxu0 0
        %1342 = vmatpush1.bf16.msra.mxu0 0
        %1343 = vmatprep.subr.bf16.mxu0 0
        %1344 = vmatpush1.bf16.msra.mxu0 0
        %1345 = vmatprep.subr.bf16.mxu0 0
        %1346 = vmatpush1.bf16.msra.mxu0 0
        %1347 = vmatprep.subr.bf16.mxu0 0
        %1348 = vmatpush1.bf16.msra.mxu0 0
        %1349 = vmatprep.subr.bf16.mxu0 0
        %1350 = vmatpush1.bf16.msra.mxu0 %v1330
        %1351 = vmatprep.subr.bf16.mxu0 0
        %1352 = vmatpush1.bf16.msra.mxu0 %v1329
        %1353 = vmatprep.subr.bf16.mxu0 0
        %1354 = vmatpush2.bf16.msra.mxu0 0
        %1355 = vmatprep.subr.bf16.mxu0 0
        %1356 = vmatpush2.bf16.msra.mxu0 0
        %1357 = vmatprep.subr.bf16.mxu0 0
        %1358 = vmatpush2.bf16.msra.mxu0 0
        %1359 = vmatprep.subr.bf16.mxu0 0
        %1360 = vmatpush2.bf16.msra.mxu0 0
        %1361 = vmatprep.subr.bf16.mxu0 0
        %1362 = vmatpush2.bf16.msra.mxu0 0
        %1363 = vmatprep.subr.bf16.mxu0 0
        %1364 = vmatpush2.bf16.msra.mxu0 0
        %1365 = vmatprep.subr.bf16.mxu0 0
        %1366 = vmatpush2.bf16.msra.mxu0 0
        %1367 = vmatprep.subr.bf16.mxu0 0
        %1368 = vmatpush2.bf16.msra.mxu0 0
        %1369 = vmatprep.mubr.bf16.mxu0 0
        %1370 = vmatmul.mubr.bf16.gmra.mxu0 %v1335
        %v1371 = vpop.f32.mrf.mxu0
        %v1372 = vadd.f32 %v1319, %v1371
        %v1373 = vpop.f32.mrf.mxu0
        %v1374 = vpop.f32.mrf.mxu0
        %v1375 = vadd.f32 %v1319, %v1374
        %v1376 = vpop.f32.mrf.mxu0
        %1377 = vdwg.mxu0
        %v1378 = vld [vmem:[%s4] sm:$0x1]
        %v1380 = vlaneseq
        %v1381 = vshrl.u32 %v1380, 7
        %v1382 = vsub.s32 0, %v1381
        %v1383 = vrot.slane %v1378, %v1382
        %v1385 = vadd.f32 %v1305, %v1383
        %v1386 = vadd.f32 %v1306, %v1383
        %v1387 = vadd.f32 %v1385, %v1372
        %v1388 = vadd.f32 %v1386, %v1375
        %1389 = vst.msk [vmem:[%s360] sm:$0xff] %vm386, %v1387
        %1390 = vst.msk [vmem:[%s360 + $0x8] sm:$0xff] %vm386, %v1388
        %s1391 = sand.u32 %s234, 1
        %s1392 = scalar_lea.sflag [#allocation4], %s1391
        %s1393 = sand.u32 %s234, 1
        %s1394 = smul.addr %s1393, 16
        %s1395 = scalar_lea.vmem [#allocation3], %s1394
        // Predicated region
        $region65: #{resblock_forward.9} parent=51 // pred_check
          %p1396 = pneg %p244
        $region66: #{resblock_forward.9} parent=51 // pred_check_branch
          %1398 = sbr.rel (%p1396) target = $region68
        $region67: #{resblock_forward.9} parent=51 // pred_region
          %s1399 = smul.u32 2, %s27
          %s1401 = ssub.s32 256, 256
          %1402 = vsyncadd %s1392, %s1401
          %s1403 = smul.addr %s26, 8
          %s1404 = sadd.s32 %s1399, %s1403
          %s1405 = smul.addr %s1404, 128
          %s1406 = scalar_lea.hbm %s8, %s1405
          %s1407 = sshll.u32 %s1395, 4
          %s1408 = int_to_ptr.vmem [resolvable:$true] %s1407
          %1413 = dma.vmem_to_hbm [thread:$0]  %s1408, 256, %s1406, %s1392, 128, 128, 8
        $region68: #{resblock_forward.9} parent=51 // pred_fallthru
          _
      $region52: #{resblock_forward.9} parent=5 // pred_fallthru
        _
      %p1414 = scmp.le.s32.totalorder 2, %s17
      // Predicated region
      $region69: #{resblock_forward.9} parent=5 // pred_check
        %p1415 = pneg %p1414
      $region70: #{resblock_forward.9} parent=5 // pred_check_branch
        %1417 = sbr.rel (%p1415) target = $region72
      $region71: #{resblock_forward.9} parent=5 // pred_region
        %s1418 = ssub.s32 %s17, 2
        // Predicated region
        $region73: #{resblock_forward.9} parent=71 // pred_check
          %p1419 = pneg %p250
        $region74: #{resblock_forward.9} parent=71 // pred_check_branch
          %1421 = sbr.rel (%p1419) target = $region76
        $region75: #{resblock_forward.9} parent=71 // pred_region
          %s1422 = sand.u32 %s235, 1
          %s1423 = scalar_lea.sflag [#allocation4], %s1422
          %s1424 = sand.u32 %s235, 1
          %s1425 = smul.addr %s1424, 16
          %s1426 = scalar_lea.vmem [#allocation3], %s1425
          %1427 = dma.done %s1423, 256
        $region76: #{resblock_forward.9} parent=71 // pred_fallthru
          _
      $region72: #{resblock_forward.9} parent=5 // pred_fallthru
        _
    $region6: #{resblock_forward.9} parent=1 // loop_footer
      %s21 = sadd.s32 1, %s17
    $region7: #{resblock_forward.9} parent=1 // loop_footer_branch
      %16 = sbr.rel target = $region3
    $region8: #{resblock_forward.9} parent=1 // loop_exit
      _
    %1428 = vsyncpa [#allocation4], 1
    %s1429 = scalar_lea.sflag [#allocation4], 1
    %1430 = vsyncpa %s1429, 1

</llo_original>
